<compile_context>
chip_gen: v7x
topology: tpu7x:2x2x1
jax: 0.10.0
libtpu: 0.0.40
codegen_flags: <defaults>
</compile_context>

<pallas_src>
import jax
import jax.numpy as jnp
from jax import lax
from jax.experimental import pallas as pl
from jax.experimental.pallas import tpu as pltpu

# ---------------- small synthetic config (consistent with the module) --------
IMG = 16
PATCH = 4
IN_CHANS = 3
EMBED_DIM = 32
DEPTH = 2
NUM_HEADS = 4
MLP_RATIO = 4.0
NUM_CLASSES = 10

HEAD_DIM = EMBED_DIM // NUM_HEADS
SCALE = HEAD_DIM ** -0.5                      # qk_scale=None -> head_dim ** -0.5
NUM_PATCHES = (IMG // PATCH) ** 2
SEQ = NUM_PATCHES + 1
HIDDEN = int(EMBED_DIM * MLP_RATIO)
CPP = IN_CHANS * PATCH * PATCH
LN_EPS = 1e-5                                 # nn.LayerNorm default

MATMUL_DTYPE = jnp.bfloat16                   # MXU operands; f32 accumulate
USE_APPROX_RECIP = True                       # False -> exact divides (validation)

# f32 param-slab layout: 7 rows per block + 3 tail rows, 128 lanes wide.
ROWS_PER_BLOCK = 7   # ln1_g, ln1_b, b_proj, ln2_g, ln2_b, b_fc1, b_fc2
P_ROWS = DEPTH * ROWS_PER_BLOCK + 3           # + norm_g, norm_b, head_b
P_LANES = 128


# ---------------- in-kernel math helpers ----------------
def _mx(x):
    return x.astype(MATMUL_DTYPE)


def _recip(x):
    if USE_APPROX_RECIP:
        return pl.reciprocal(x, approx=True)   # EUP slot, ~free under MXU work
    return 1.0 / x


def _erf(x):
    # Abramowitz & Stegun 7.1.26 (|err| < 1.5e-7); exp + mul/add + 1 reciprocal.
    p = 0.3275911
    a1, a2, a3, a4, a5 = (0.254829592, -0.284496736, 1.421413741,
                          -1.453152027, 1.061405429)
    ax = jnp.abs(x)
    t = _recip(1.0 + p * ax)
    poly = ((((a5 * t + a4) * t + a3) * t + a2) * t + a1) * t
    y = 1.0 - poly * jnp.exp(-ax * ax)
    return jnp.where(x >= 0.0, y, -y)


def _gelu(x):
    # erf-based GELU (torch.nn.GELU default)
    return 0.5 * x * (1.0 + _erf(x * 0.7071067811865476))


def _layer_norm(x, g, b):
    mu = jnp.mean(x, axis=-1, keepdims=True)
    var = jnp.mean((x - mu) ** 2, axis=-1, keepdims=True)
    return (x - mu) * lax.rsqrt(var + LN_EPS) * g + b


def _bmm(a, b):
    # (G, M, K) @ (G, K, N) -> (G, M, N), f32 accumulation.
    return lax.dot_general(a, b, (((2,), (1,)), ((0,), (0,))),
                           preferred_element_type=jnp.float32)


def _bmm_tb(a, b):
    # (G, M, K) @ (G, N, K) -> (G, M, N)  (contract last dims), f32 accumulate.
    return lax.dot_general(a, b, (((2,), (2,)), ((0,), (0,))),
                           preferred_element_type=jnp.float32)


# ---------------- fused ViT forward kernel (one sample per grid step) --------
def _vit_kernel(patches_ref, patch_w_ref, seq_bias_ref, wqkv_ref, wproj_ref,
                wfc1_ref, wfc2_ref, pslab_ref, head_w_ref, out_ref):
    D, H, Hd, S = EMBED_DIM, NUM_HEADS, HEAD_DIM, SEQ

    # patch embedding + cls token + positional embedding.  The cls row of
    # `patches` is zero; seq_bias holds (conv bias + pos_embed) for patch rows
    # and (cls_token + pos_embed[0]) for the cls row.
    x = jnp.dot(patches_ref[...], patch_w_ref[...],
                preferred_element_type=jnp.float32) + seq_bias_ref[...]   # (S, D)

    for l in range(DEPTH):
        r = l * ROWS_PER_BLOCK
        ln1_g = pslab_ref[r + 0:r + 1, 0:D]
        ln1_b = pslab_ref[r + 1:r + 2, 0:D]
        b_proj = pslab_ref[r + 2:r + 3, 0:D]
        ln2_g = pslab_ref[r + 3:r + 4, 0:D]
        ln2_b = pslab_ref[r + 4:r + 5, 0:D]
        b_fc1 = pslab_ref[r + 5:r + 6, 0:HIDDEN]
        b_fc2 = pslab_ref[r + 6:r + 7, 0:D]

        # ---- attention branch: x + proj(MHSA(LN1(x))) -----------------------
        h = _layer_norm(x, ln1_g, ln1_b)                           # (S, D) f32
        hb = jnp.broadcast_to(_mx(h)[None], (H, S, D))
        qkv = _bmm(hb, wqkv_ref[l])                                # (H, S, 3*Hd)
        q = _mx(qkv[:, :, 0:Hd])
        k = _mx(qkv[:, :, Hd:2 * Hd])
        v = _mx(qkv[:, :, 2 * Hd:3 * Hd])

        s = _bmm_tb(q, k) * SCALE                                  # (H, S, S) f32
        s = s - jnp.max(s, axis=-1, keepdims=True)
        p = jnp.exp(s)
        p = p * _recip(jnp.sum(p, axis=-1, keepdims=True))

        o = _bmm(_mx(p), v)                                        # (H, S, Hd)
        o = _bmm(_mx(o), wproj_ref[l])                             # (H, S, D)
        x = x + jnp.sum(o, axis=0) + b_proj                        # (S, D)

        # ---- MLP branch: x + fc2(GELU(fc1(LN2(x)))) --------------------------
        h2 = _layer_norm(x, ln2_g, ln2_b)
        h2 = jnp.dot(_mx(h2), wfc1_ref[l],
                     preferred_element_type=jnp.float32) + b_fc1   # (S, HID)
        h2 = _gelu(h2)
        h2 = jnp.dot(_mx(h2), wfc2_ref[l],
                     preferred_element_type=jnp.float32) + b_fc2   # (S, D)
        x = x + h2

    # ---- cls row, final LN, classification head ------------------------------
    fb = DEPTH * ROWS_PER_BLOCK
    cls = _layer_norm(x[0:1, :], pslab_ref[fb:fb + 1, 0:D],
                      pslab_ref[fb + 1:fb + 2, 0:D])               # (1, D)
    out_ref[...] = (jnp.dot(_mx(cls), head_w_ref[...],
                            preferred_element_type=jnp.float32)
                    + pslab_ref[fb + 2:fb + 3, 0:NUM_CLASSES])     # (1, C)


# ---------------- pallas_call wrapper ----------------
def vit_fused(patches, kp):
    B = patches.shape[0]

    def const(shape):
        return pl.BlockSpec(shape, lambda b, _s=len(shape): (0,) * _s)

    grid_spec = pltpu.PrefetchScalarGridSpec(
        num_scalar_prefetch=0,
        grid=(B,),
        in_specs=[
            pl.BlockSpec((None, SEQ, CPP), lambda b: (b, 0, 0)),        # patches
            const((CPP, EMBED_DIM)),                                    # patch_w
            const((SEQ, EMBED_DIM)),                                    # seq_bias
            const((DEPTH, NUM_HEADS, EMBED_DIM, 3 * HEAD_DIM)),         # wqkv
            const((DEPTH, NUM_HEADS, HEAD_DIM, EMBED_DIM)),             # wproj
            const((DEPTH, EMBED_DIM, HIDDEN)),                          # wfc1
            const((DEPTH, HIDDEN, EMBED_DIM)),                          # wfc2
            const((P_ROWS, P_LANES)),                                   # pslab
            const((EMBED_DIM, NUM_CLASSES)),                            # head_w
        ],
        out_specs=pl.BlockSpec((None, 1, NUM_CLASSES), lambda b: (b, 0, 0)),
    )
    out = pl.pallas_call(
        _vit_kernel,
        out_shape=jax.ShapeDtypeStruct((B, 1, NUM_CLASSES), jnp.float32),
        grid_spec=grid_spec,
        compiler_params=pltpu.CompilerParams(
            dimension_semantics=("parallel",)),   # shards samples on v7x's 2 TCs
    )(patches, kp["patch_w"], kp["seq_bias"], kp["wqkv"], kp["wproj"],
      kp["wfc1"], kp["wfc2"], kp["pslab"], kp["head_w"])
    return out.reshape(B, NUM_CLASSES)


# ---------------- parameters (deterministic, synthetic, PyTorch layout) ------
def init_params(key):
    kit = iter(jax.random.split(key, 64))

    def nrm(shape, std=0.02):
        return std * jax.random.normal(next(kit), shape, dtype=jnp.float32)

    params = {
        # conv weight (D, C, P, P) flattened to (C*P*P, D) for the matmul form
        "patch_w": nrm((CPP, EMBED_DIM)),
        "patch_b": jnp.zeros((1, EMBED_DIM), jnp.float32),
        "cls_token": nrm((1, 1, EMBED_DIM)),
        "pos_embed": nrm((1, SEQ, EMBED_DIM)),
        "norm_g": jnp.ones((1, EMBED_DIM), jnp.float32),
        "norm_b": jnp.zeros((1, EMBED_DIM), jnp.float32),
        "head_w": nrm((EMBED_DIM, NUM_CLASSES)),
        "head_b": jnp.zeros((1, NUM_CLASSES), jnp.float32),
        "blocks": [],
    }
    for _ in range(DEPTH):
        params["blocks"].append({
            "ln1_g": jnp.ones((1, EMBED_DIM), jnp.float32),
            "ln1_b": jnp.zeros((1, EMBED_DIM), jnp.float32),
            "w_qkv": nrm((EMBED_DIM, 3 * EMBED_DIM)),          # qkv_bias=False
            "w_proj": nrm((EMBED_DIM, EMBED_DIM)),
            "b_proj": jnp.zeros((1, EMBED_DIM), jnp.float32),
            "ln2_g": jnp.ones((1, EMBED_DIM), jnp.float32),
            "ln2_b": jnp.zeros((1, EMBED_DIM), jnp.float32),
            "w_fc1": nrm((EMBED_DIM, HIDDEN)),
            "b_fc1": jnp.zeros((1, HIDDEN), jnp.float32),
            "w_fc2": nrm((HIDDEN, EMBED_DIM)),
            "b_fc2": jnp.zeros((1, EMBED_DIM), jnp.float32),
        })
    return params


def prepare_params(p):
    """Pre-pack PyTorch-layout params into the kernel slabs (done once)."""
    D, H, Hd = EMBED_DIM, NUM_HEADS, HEAD_DIM
    md = MATMUL_DTYPE

    pos = p["pos_embed"][0]                               # (S, D)
    seq_bias = pos + p["patch_b"]                         # patch rows: conv bias + pos
    seq_bias = seq_bias.at[0].set(pos[0] + p["cls_token"][0, 0])   # cls row

    def head_major(w):                                    # (D, D) -> (H, D, Hd)
        return w.reshape(D, H, Hd).transpose(1, 0, 2)

    def put(slab, row, vec):
        vec = vec.reshape(-1)
        return slab.at[row, :vec.shape[0]].set(vec)

    pslab = jnp.zeros((P_ROWS, P_LANES), jnp.float32)
    wqkv_l, wproj_l, wfc1_l, wfc2_l = [], [], [], []

    for l, bp in enumerate(p["blocks"]):
        w = bp["w_qkv"]
        # fused head-major QKV: (H, D, 3*Hd) with columns [q_h | k_h | v_h]
        wqkv_l.append(jnp.concatenate(
            [head_major(w[:, 0:D]), head_major(w[:, D:2 * D]),
             head_major(w[:, 2 * D:3 * D])], axis=-1))
        wproj_l.append(bp["w_proj"].reshape(H, Hd, D))
        wfc1_l.append(bp["w_fc1"])
        wfc2_l.append(bp["w_fc2"])

        r = l * ROWS_PER_BLOCK
        pslab = put(pslab, r + 0, bp["ln1_g"])
        pslab = put(pslab, r + 1, bp["ln1_b"])
        pslab = put(pslab, r + 2, bp["b_proj"])
        pslab = put(pslab, r + 3, bp["ln2_g"])
        pslab = put(pslab, r + 4, bp["ln2_b"])
        pslab = put(pslab, r + 5, bp["b_fc1"])
        pslab = put(pslab, r + 6, bp["b_fc2"])

    fb = DEPTH * ROWS_PER_BLOCK
    pslab = put(pslab, fb + 0, p["norm_g"])
    pslab = put(pslab, fb + 1, p["norm_b"])
    pslab = put(pslab, fb + 2, p["head_b"])

    return {
        "patch_w": p["patch_w"].astype(md),
        "seq_bias": seq_bias.astype(jnp.float32),
        "wqkv": jnp.stack(wqkv_l).astype(md),     # (DEPTH, H, D, 3*Hd)
        "wproj": jnp.stack(wproj_l).astype(md),   # (DEPTH, H, Hd, D)
        "wfc1": jnp.stack(wfc1_l).astype(md),     # (DEPTH, D, HID)
        "wfc2": jnp.stack(wfc2_l).astype(md),     # (DEPTH, HID, D)
        "pslab": pslab,                           # (P_ROWS, 128) f32
        "head_w": p["head_w"].astype(md),
    }


# ---------------- full forward ----------------
@jax.jit
def vit_forward(x, kp):
    B, C, Hh, Ww = x.shape
    gh, gw = Hh // PATCH, Ww // PATCH

    # NCHW -> (B, N, C*P*P): im2col for the stride==kernel conv, patch vector
    # ordered (c, ph, pw) to match nn.Conv2d weight flattening.  Pure data
    # layout, kept as plain-JAX glue outside the kernel.
    patches = x.reshape(B, C, gh, PATCH, gw, PATCH)
    patches = patches.transpose(0, 2, 4, 1, 3, 5).reshape(B, gh * gw, CPP)
    # zero row at the cls slot so one (S, cpp) @ (cpp, D) matmul covers the
    # whole sequence; the cls embedding itself is folded into seq_bias.
    patches = jnp.concatenate([jnp.zeros((B, 1, CPP), patches.dtype), patches],
                              axis=1)
    return vit_fused(patches.astype(MATMUL_DTYPE), kp)


if __name__ == "__main__":
    key = jax.random.PRNGKey(0)
    pkey, xkey = jax.random.split(key)
    params = init_params(pkey)
    kparams = prepare_params(params)
    x = jax.random.normal(xkey, (2, IN_CHANS, IMG, IMG), dtype=jnp.float32)

    out = vit_forward(x, kparams)
    jax.block_until_ready(out)
    assert out.shape == (2, NUM_CLASSES)
    assert bool(jnp.all(jnp.isfinite(out)))
    print("KERNEL_OK")
</pallas_src>

<mosaic_0001>
module attributes {stable_mosaic.version = 11 : i64} {
  func.func @_vit_kernel(%arg0: i32, %arg1: memref<1x17x48xbf16, #tpu.memory_space<vmem>>, %arg2: memref<48x32xbf16, #tpu.memory_space<vmem>>, %arg3: memref<17x32xf32, #tpu.memory_space<vmem>>, %arg4: memref<2x4x32x24xbf16, #tpu.memory_space<vmem>>, %arg5: memref<2x4x8x32xbf16, #tpu.memory_space<vmem>>, %arg6: memref<2x32x128xbf16, #tpu.memory_space<vmem>>, %arg7: memref<2x128x32xbf16, #tpu.memory_space<vmem>>, %arg8: memref<17x128xf32, #tpu.memory_space<vmem>>, %arg9: memref<32x10xbf16, #tpu.memory_space<vmem>>, %arg10: memref<1x1x10xf32, #tpu.memory_space<vmem>>) attributes {dimension_semantics = [#tpu.dimension_semantics<parallel>], iteration_bounds = array<i64: 2>, scalar_prefetch = 0 : i64, scratch_operands = 0 : i64, tpu.core_type = #tpu.core_type<tc>, window_params = [{transform_indices = @transform_0, window_bounds = array<i64: 1, 17, 48>}, {pipeline_mode = #tpu.pipeline_mode<synchronous>, transform_indices = @transform_1, window_bounds = array<i64: 48, 32>}, {pipeline_mode = #tpu.pipeline_mode<synchronous>, transform_indices = @transform_2, window_bounds = array<i64: 17, 32>}, {pipeline_mode = #tpu.pipeline_mode<synchronous>, transform_indices = @transform_3, window_bounds = array<i64: 2, 4, 32, 24>}, {pipeline_mode = #tpu.pipeline_mode<synchronous>, transform_indices = @transform_4, window_bounds = array<i64: 2, 4, 8, 32>}, {pipeline_mode = #tpu.pipeline_mode<synchronous>, transform_indices = @transform_5, window_bounds = array<i64: 2, 32, 128>}, {pipeline_mode = #tpu.pipeline_mode<synchronous>, transform_indices = @transform_6, window_bounds = array<i64: 2, 128, 32>}, {pipeline_mode = #tpu.pipeline_mode<synchronous>, transform_indices = @transform_7, window_bounds = array<i64: 17, 128>}, {pipeline_mode = #tpu.pipeline_mode<synchronous>, transform_indices = @transform_8, window_bounds = array<i64: 32, 10>}, {transform_indices = @transform_9, window_bounds = array<i64: 1, 1, 10>}]} {
    %c0 = arith.constant 0 : index
    %c0_0 = arith.constant 0 : index
    %c0_1 = arith.constant 0 : index
    %0 = vector.load %arg1[%c0, %c0_0, %c0_1] : memref<1x17x48xbf16, #tpu.memory_space<vmem>>, vector<1x17x48xbf16>
    %1 = vector.shape_cast %0 : vector<1x17x48xbf16> to vector<17x48xbf16>
    %c0_2 = arith.constant 0 : index
    %c0_3 = arith.constant 0 : index
    %2 = vector.load %arg2[%c0_2, %c0_3] : memref<48x32xbf16, #tpu.memory_space<vmem>>, vector<48x32xbf16>
    %cst = arith.constant dense<0.000000e+00> : vector<17x32xf32>
    %3 = tpu.matmul %1, %2, %cst {dimension_numbers = #tpu.dot_dimension_numbers<[1], [0], [0], [1], [0, 0, 1, 1], [], []>} : vector<17x48xbf16>, vector<48x32xbf16>, vector<17x32xf32> -> vector<17x32xf32>
    %c0_4 = arith.constant 0 : index
    %c0_5 = arith.constant 0 : index
    %4 = vector.load %arg3[%c0_4, %c0_5] : memref<17x32xf32, #tpu.memory_space<vmem>>, vector<17x32xf32>
    %5 = arith.addf %3, %4 : vector<17x32xf32>
    %c0_6 = arith.constant 0 : index
    %c0_7 = arith.constant 0 : index
    %6 = vector.load %arg8[%c0_6, %c0_7] : memref<17x128xf32, #tpu.memory_space<vmem>>, vector<1x32xf32>
    %c1 = arith.constant 1 : index
    %c0_8 = arith.constant 0 : index
    %7 = vector.load %arg8[%c1, %c0_8] : memref<17x128xf32, #tpu.memory_space<vmem>>, vector<1x32xf32>
    %c2 = arith.constant 2 : index
    %c0_9 = arith.constant 0 : index
    %8 = vector.load %arg8[%c2, %c0_9] : memref<17x128xf32, #tpu.memory_space<vmem>>, vector<1x32xf32>
    %c3 = arith.constant 3 : index
    %c0_10 = arith.constant 0 : index
    %9 = vector.load %arg8[%c3, %c0_10] : memref<17x128xf32, #tpu.memory_space<vmem>>, vector<1x32xf32>
    %c4 = arith.constant 4 : index
    %c0_11 = arith.constant 0 : index
    %10 = vector.load %arg8[%c4, %c0_11] : memref<17x128xf32, #tpu.memory_space<vmem>>, vector<1x32xf32>
    %c5 = arith.constant 5 : index
    %c0_12 = arith.constant 0 : index
    %11 = vector.load %arg8[%c5, %c0_12] : memref<17x128xf32, #tpu.memory_space<vmem>>, vector<1x128xf32>
    %c6 = arith.constant 6 : index
    %c0_13 = arith.constant 0 : index
    %12 = vector.load %arg8[%c6, %c0_13] : memref<17x128xf32, #tpu.memory_space<vmem>>, vector<1x32xf32>
    %cst_14 = arith.constant dense<0.000000e+00> : vector<17xf32>
    %13 = vector.multi_reduction <add>, %5, %cst_14 [1] : vector<17x32xf32> to vector<17xf32>
    %14 = vector.shape_cast %13 : vector<17xf32> to vector<17x1xf32>
    %cst_15 = arith.constant 3.200000e+01 : f32
    %15 = vector.broadcast %cst_15 : f32 to vector<17x1xf32>
    %16 = arith.divf %14, %15 : vector<17x1xf32>
    %17 = vector.broadcast %16 : vector<17x1xf32> to vector<17x32xf32>
    %18 = arith.subf %5, %17 : vector<17x32xf32>
    %19 = arith.mulf %18, %18 : vector<17x32xf32>
    %cst_16 = arith.constant dense<0.000000e+00> : vector<17xf32>
    %20 = vector.multi_reduction <add>, %19, %cst_16 [1] : vector<17x32xf32> to vector<17xf32>
    %21 = vector.shape_cast %20 : vector<17xf32> to vector<17x1xf32>
    %cst_17 = arith.constant 3.200000e+01 : f32
    %22 = vector.broadcast %cst_17 : f32 to vector<17x1xf32>
    %23 = arith.divf %21, %22 : vector<17x1xf32>
    %24 = vector.broadcast %16 : vector<17x1xf32> to vector<17x32xf32>
    %25 = arith.subf %5, %24 : vector<17x32xf32>
    %cst_18 = arith.constant 9.99999974E-6 : f32
    %26 = vector.broadcast %cst_18 : f32 to vector<17x1xf32>
    %27 = arith.addf %23, %26 : vector<17x1xf32>
    %28 = math.rsqrt %27 : vector<17x1xf32>
    %29 = vector.broadcast %28 : vector<17x1xf32> to vector<17x32xf32>
    %30 = arith.mulf %25, %29 : vector<17x32xf32>
    %31 = vector.broadcast %6 : vector<1x32xf32> to vector<17x32xf32>
    %32 = arith.mulf %30, %31 : vector<17x32xf32>
    %33 = vector.broadcast %7 : vector<1x32xf32> to vector<17x32xf32>
    %34 = arith.addf %32, %33 : vector<17x32xf32>
    %35 = arith.truncf %34 : vector<17x32xf32> to vector<17x32xbf16>
    %36 = vector.shape_cast %35 : vector<17x32xbf16> to vector<1x17x32xbf16>
    %37 = vector.shape_cast %36 : vector<1x17x32xbf16> to vector<1x17x32xbf16>
    %38 = vector.broadcast %37 : vector<1x17x32xbf16> to vector<4x17x32xbf16>
    %c0_19 = arith.constant 0 : index
    %c0_20 = arith.constant 0 : index
    %c0_21 = arith.constant 0 : index
    %c0_22 = arith.constant 0 : index
    %39 = vector.load %arg4[%c0_19, %c0_20, %c0_21, %c0_22] : memref<2x4x32x24xbf16, #tpu.memory_space<vmem>>, vector<1x4x32x24xbf16>
    %40 = vector.shape_cast %39 : vector<1x4x32x24xbf16> to vector<4x32x24xbf16>
    %cst_23 = arith.constant dense<0.000000e+00> : vector<4x17x24xf32>
    %41 = tpu.matmul %38, %40, %cst_23 {dimension_numbers = #tpu.dot_dimension_numbers<[2], [1], [1], [2], [0, 0, 0, 1, 1, 2], [0], [0]>} : vector<4x17x32xbf16>, vector<4x32x24xbf16>, vector<4x17x24xf32> -> vector<4x17x24xf32>
    %42 = vector.extract_strided_slice %41 {offsets = [0, 0, 0], sizes = [4, 17, 8], strides = [1, 1, 1]} : vector<4x17x24xf32> to vector<4x17x8xf32>
    %43 = arith.truncf %42 : vector<4x17x8xf32> to vector<4x17x8xbf16>
    %44 = vector.extract_strided_slice %41 {offsets = [0, 0, 8], sizes = [4, 17, 8], strides = [1, 1, 1]} : vector<4x17x24xf32> to vector<4x17x8xf32>
    %45 = arith.truncf %44 : vector<4x17x8xf32> to vector<4x17x8xbf16>
    %46 = vector.extract_strided_slice %41 {offsets = [0, 0, 16], sizes = [4, 17, 8], strides = [1, 1, 1]} : vector<4x17x24xf32> to vector<4x17x8xf32>
    %47 = arith.truncf %46 : vector<4x17x8xf32> to vector<4x17x8xbf16>
    %cst_24 = arith.constant dense<0.000000e+00> : vector<4x17x17xf32>
    %48 = tpu.matmul %43, %45, %cst_24 {dimension_numbers = #tpu.dot_dimension_numbers<[2], [2], [1], [1], [0, 0, 0, 1, 1, 1], [0], [0]>} : vector<4x17x8xbf16>, vector<4x17x8xbf16>, vector<4x17x17xf32> -> vector<4x17x17xf32>
    %cst_25 = arith.constant 0.353553385 : f32
    %49 = vector.broadcast %cst_25 : f32 to vector<4x17x17xf32>
    %50 = arith.mulf %48, %49 : vector<4x17x17xf32>
    %cst_26 = arith.constant dense<0xFF800000> : vector<4x17xf32>
    %51 = vector.multi_reduction <maximumf>, %50, %cst_26 [2] : vector<4x17x17xf32> to vector<4x17xf32>
    %52 = vector.shape_cast %51 : vector<4x17xf32> to vector<4x17x1xf32>
    %53 = vector.broadcast %52 : vector<4x17x1xf32> to vector<4x17x17xf32>
    %54 = arith.subf %50, %53 : vector<4x17x17xf32>
    %55 = math.exp %54 : vector<4x17x17xf32>
    %cst_27 = arith.constant dense<0.000000e+00> : vector<4x17xf32>
    %56 = vector.multi_reduction <add>, %55, %cst_27 [2] : vector<4x17x17xf32> to vector<4x17xf32>
    %57 = vector.shape_cast %56 : vector<4x17xf32> to vector<4x17x1xf32>
    %58 = tpu.reciprocal %57 {approx = true} : vector<4x17x1xf32> -> vector<4x17x1xf32>
    %59 = vector.broadcast %58 : vector<4x17x1xf32> to vector<4x17x17xf32>
    %60 = arith.mulf %55, %59 : vector<4x17x17xf32>
    %61 = arith.truncf %60 : vector<4x17x17xf32> to vector<4x17x17xbf16>
    %cst_28 = arith.constant dense<0.000000e+00> : vector<4x17x8xf32>
    %62 = tpu.matmul %61, %47, %cst_28 {dimension_numbers = #tpu.dot_dimension_numbers<[2], [1], [1], [2], [0, 0, 0, 1, 1, 2], [0], [0]>} : vector<4x17x17xbf16>, vector<4x17x8xbf16>, vector<4x17x8xf32> -> vector<4x17x8xf32>
    %63 = arith.truncf %62 : vector<4x17x8xf32> to vector<4x17x8xbf16>
    %c0_29 = arith.constant 0 : index
    %c0_30 = arith.constant 0 : index
    %c0_31 = arith.constant 0 : index
    %c0_32 = arith.constant 0 : index
    %64 = vector.load %arg5[%c0_29, %c0_30, %c0_31, %c0_32] : memref<2x4x8x32xbf16, #tpu.memory_space<vmem>>, vector<1x4x8x32xbf16>
    %65 = vector.shape_cast %64 : vector<1x4x8x32xbf16> to vector<4x8x32xbf16>
    %cst_33 = arith.constant dense<0.000000e+00> : vector<4x17x32xf32>
    %66 = tpu.matmul %63, %65, %cst_33 {dimension_numbers = #tpu.dot_dimension_numbers<[2], [1], [1], [2], [0, 0, 0, 1, 1, 2], [0], [0]>} : vector<4x17x8xbf16>, vector<4x8x32xbf16>, vector<4x17x32xf32> -> vector<4x17x32xf32>
    %cst_34 = arith.constant dense<0.000000e+00> : vector<17x32xf32>
    %67 = vector.multi_reduction <add>, %66, %cst_34 [0] : vector<4x17x32xf32> to vector<17x32xf32>
    %68 = arith.addf %5, %67 : vector<17x32xf32>
    %69 = vector.broadcast %8 : vector<1x32xf32> to vector<17x32xf32>
    %70 = arith.addf %68, %69 : vector<17x32xf32>
    %cst_35 = arith.constant dense<0.000000e+00> : vector<17xf32>
    %71 = vector.multi_reduction <add>, %70, %cst_35 [1] : vector<17x32xf32> to vector<17xf32>
    %72 = vector.shape_cast %71 : vector<17xf32> to vector<17x1xf32>
    %cst_36 = arith.constant 3.200000e+01 : f32
    %73 = vector.broadcast %cst_36 : f32 to vector<17x1xf32>
    %74 = arith.divf %72, %73 : vector<17x1xf32>
    %75 = vector.broadcast %74 : vector<17x1xf32> to vector<17x32xf32>
    %76 = arith.subf %70, %75 : vector<17x32xf32>
    %77 = arith.mulf %76, %76 : vector<17x32xf32>
    %cst_37 = arith.constant dense<0.000000e+00> : vector<17xf32>
    %78 = vector.multi_reduction <add>, %77, %cst_37 [1] : vector<17x32xf32> to vector<17xf32>
    %79 = vector.shape_cast %78 : vector<17xf32> to vector<17x1xf32>
    %cst_38 = arith.constant 3.200000e+01 : f32
    %80 = vector.broadcast %cst_38 : f32 to vector<17x1xf32>
    %81 = arith.divf %79, %80 : vector<17x1xf32>
    %82 = vector.broadcast %74 : vector<17x1xf32> to vector<17x32xf32>
    %83 = arith.subf %70, %82 : vector<17x32xf32>
    %cst_39 = arith.constant 9.99999974E-6 : f32
    %84 = vector.broadcast %cst_39 : f32 to vector<17x1xf32>
    %85 = arith.addf %81, %84 : vector<17x1xf32>
    %86 = math.rsqrt %85 : vector<17x1xf32>
    %87 = vector.broadcast %86 : vector<17x1xf32> to vector<17x32xf32>
    %88 = arith.mulf %83, %87 : vector<17x32xf32>
    %89 = vector.broadcast %9 : vector<1x32xf32> to vector<17x32xf32>
    %90 = arith.mulf %88, %89 : vector<17x32xf32>
    %91 = vector.broadcast %10 : vector<1x32xf32> to vector<17x32xf32>
    %92 = arith.addf %90, %91 : vector<17x32xf32>
    %93 = arith.truncf %92 : vector<17x32xf32> to vector<17x32xbf16>
    %c0_40 = arith.constant 0 : index
    %c0_41 = arith.constant 0 : index
    %c0_42 = arith.constant 0 : index
    %94 = vector.load %arg6[%c0_40, %c0_41, %c0_42] : memref<2x32x128xbf16, #tpu.memory_space<vmem>>, vector<1x32x128xbf16>
    %95 = vector.shape_cast %94 : vector<1x32x128xbf16> to vector<32x128xbf16>
    %cst_43 = arith.constant dense<0.000000e+00> : vector<17x128xf32>
    %96 = tpu.matmul %93, %95, %cst_43 {dimension_numbers = #tpu.dot_dimension_numbers<[1], [0], [0], [1], [0, 0, 1, 1], [], []>} : vector<17x32xbf16>, vector<32x128xbf16>, vector<17x128xf32> -> vector<17x128xf32>
    %97 = vector.broadcast %11 : vector<1x128xf32> to vector<17x128xf32>
    %98 = arith.addf %96, %97 : vector<17x128xf32>
    %cst_44 = arith.constant 5.000000e-01 : f32
    %99 = vector.broadcast %cst_44 : f32 to vector<17x128xf32>
    %100 = arith.mulf %99, %98 : vector<17x128xf32>
    %cst_45 = arith.constant 0.707106769 : f32
    %101 = vector.broadcast %cst_45 : f32 to vector<17x128xf32>
    %102 = arith.mulf %98, %101 : vector<17x128xf32>
    %103 = math.absf %102 : vector<17x128xf32>
    %cst_46 = arith.constant 0.327591091 : f32
    %104 = vector.broadcast %cst_46 : f32 to vector<17x128xf32>
    %105 = arith.mulf %104, %103 : vector<17x128xf32>
    %cst_47 = arith.constant 1.000000e+00 : f32
    %106 = vector.broadcast %cst_47 : f32 to vector<17x128xf32>
    %107 = arith.addf %106, %105 : vector<17x128xf32>
    %108 = tpu.reciprocal %107 {approx = true} : vector<17x128xf32> -> vector<17x128xf32>
    %cst_48 = arith.constant 1.06140542 : f32
    %109 = vector.broadcast %cst_48 : f32 to vector<17x128xf32>
    %110 = arith.mulf %109, %108 : vector<17x128xf32>
    %cst_49 = arith.constant -1.45315206 : f32
    %111 = vector.broadcast %cst_49 : f32 to vector<17x128xf32>
    %112 = arith.addf %110, %111 : vector<17x128xf32>
    %113 = arith.mulf %112, %108 : vector<17x128xf32>
    %cst_50 = arith.constant 1.42141378 : f32
    %114 = vector.broadcast %cst_50 : f32 to vector<17x128xf32>
    %115 = arith.addf %113, %114 : vector<17x128xf32>
    %116 = arith.mulf %115, %108 : vector<17x128xf32>
    %cst_51 = arith.constant -0.284496725 : f32
    %117 = vector.broadcast %cst_51 : f32 to vector<17x128xf32>
    %118 = arith.addf %116, %117 : vector<17x128xf32>
    %119 = arith.mulf %118, %108 : vector<17x128xf32>
    %cst_52 = arith.constant 0.254829586 : f32
    %120 = vector.broadcast %cst_52 : f32 to vector<17x128xf32>
    %121 = arith.addf %119, %120 : vector<17x128xf32>
    %122 = arith.mulf %121, %108 : vector<17x128xf32>
    %cst_53 = arith.constant 0.000000e+00 : f32
    %123 = vector.broadcast %cst_53 : f32 to vector<17x128xf32>
    %124 = arith.subf %123, %103 : vector<17x128xf32>
    %125 = arith.mulf %124, %103 : vector<17x128xf32>
    %126 = math.exp %125 : vector<17x128xf32>
    %127 = arith.mulf %122, %126 : vector<17x128xf32>
    %cst_54 = arith.constant 1.000000e+00 : f32
    %128 = vector.broadcast %cst_54 : f32 to vector<17x128xf32>
    %129 = arith.subf %128, %127 : vector<17x128xf32>
    %cst_55 = arith.constant 0.000000e+00 : f32
    %130 = vector.broadcast %cst_55 : f32 to vector<17x128xf32>
    %131 = arith.cmpf oge, %102, %130 : vector<17x128xf32>
    %cst_56 = arith.constant 0.000000e+00 : f32
    %132 = vector.broadcast %cst_56 : f32 to vector<17x128xf32>
    %133 = arith.subf %132, %129 : vector<17x128xf32>
    %134 = arith.select %131, %129, %133 : vector<17x128xi1>, vector<17x128xf32>
    %cst_57 = arith.constant 1.000000e+00 : f32
    %135 = vector.broadcast %cst_57 : f32 to vector<17x128xf32>
    %136 = arith.addf %135, %134 : vector<17x128xf32>
    %137 = arith.mulf %100, %136 : vector<17x128xf32>
    %138 = arith.truncf %137 : vector<17x128xf32> to vector<17x128xbf16>
    %c0_58 = arith.constant 0 : index
    %c0_59 = arith.constant 0 : index
    %c0_60 = arith.constant 0 : index
    %139 = vector.load %arg7[%c0_58, %c0_59, %c0_60] : memref<2x128x32xbf16, #tpu.memory_space<vmem>>, vector<1x128x32xbf16>
    %140 = vector.shape_cast %139 : vector<1x128x32xbf16> to vector<128x32xbf16>
    %cst_61 = arith.constant dense<0.000000e+00> : vector<17x32xf32>
    %141 = tpu.matmul %138, %140, %cst_61 {dimension_numbers = #tpu.dot_dimension_numbers<[1], [0], [0], [1], [0, 0, 1, 1], [], []>} : vector<17x128xbf16>, vector<128x32xbf16>, vector<17x32xf32> -> vector<17x32xf32>
    %142 = vector.broadcast %12 : vector<1x32xf32> to vector<17x32xf32>
    %143 = arith.addf %141, %142 : vector<17x32xf32>
    %144 = arith.addf %70, %143 : vector<17x32xf32>
    %c7 = arith.constant 7 : index
    %c0_62 = arith.constant 0 : index
    %145 = vector.load %arg8[%c7, %c0_62] : memref<17x128xf32, #tpu.memory_space<vmem>>, vector<1x32xf32>
    %c8 = arith.constant 8 : index
    %c0_63 = arith.constant 0 : index
    %146 = vector.load %arg8[%c8, %c0_63] : memref<17x128xf32, #tpu.memory_space<vmem>>, vector<1x32xf32>
    %c9 = arith.constant 9 : index
    %c0_64 = arith.constant 0 : index
    %147 = vector.load %arg8[%c9, %c0_64] : memref<17x128xf32, #tpu.memory_space<vmem>>, vector<1x32xf32>
    %c10 = arith.constant 10 : index
    %c0_65 = arith.constant 0 : index
    %148 = vector.load %arg8[%c10, %c0_65] : memref<17x128xf32, #tpu.memory_space<vmem>>, vector<1x32xf32>
    %c11 = arith.constant 11 : index
    %c0_66 = arith.constant 0 : index
    %149 = vector.load %arg8[%c11, %c0_66] : memref<17x128xf32, #tpu.memory_space<vmem>>, vector<1x32xf32>
    %c12 = arith.constant 12 : index
    %c0_67 = arith.constant 0 : index
    %150 = vector.load %arg8[%c12, %c0_67] : memref<17x128xf32, #tpu.memory_space<vmem>>, vector<1x128xf32>
    %c13 = arith.constant 13 : index
    %c0_68 = arith.constant 0 : index
    %151 = vector.load %arg8[%c13, %c0_68] : memref<17x128xf32, #tpu.memory_space<vmem>>, vector<1x32xf32>
    %cst_69 = arith.constant dense<0.000000e+00> : vector<17xf32>
    %152 = vector.multi_reduction <add>, %144, %cst_69 [1] : vector<17x32xf32> to vector<17xf32>
    %153 = vector.shape_cast %152 : vector<17xf32> to vector<17x1xf32>
    %cst_70 = arith.constant 3.200000e+01 : f32
    %154 = vector.broadcast %cst_70 : f32 to vector<17x1xf32>
    %155 = arith.divf %153, %154 : vector<17x1xf32>
    %156 = vector.broadcast %155 : vector<17x1xf32> to vector<17x32xf32>
    %157 = arith.subf %144, %156 : vector<17x32xf32>
    %158 = arith.mulf %157, %157 : vector<17x32xf32>
    %cst_71 = arith.constant dense<0.000000e+00> : vector<17xf32>
    %159 = vector.multi_reduction <add>, %158, %cst_71 [1] : vector<17x32xf32> to vector<17xf32>
    %160 = vector.shape_cast %159 : vector<17xf32> to vector<17x1xf32>
    %cst_72 = arith.constant 3.200000e+01 : f32
    %161 = vector.broadcast %cst_72 : f32 to vector<17x1xf32>
    %162 = arith.divf %160, %161 : vector<17x1xf32>
    %163 = vector.broadcast %155 : vector<17x1xf32> to vector<17x32xf32>
    %164 = arith.subf %144, %163 : vector<17x32xf32>
    %cst_73 = arith.constant 9.99999974E-6 : f32
    %165 = vector.broadcast %cst_73 : f32 to vector<17x1xf32>
    %166 = arith.addf %162, %165 : vector<17x1xf32>
    %167 = math.rsqrt %166 : vector<17x1xf32>
    %168 = vector.broadcast %167 : vector<17x1xf32> to vector<17x32xf32>
    %169 = arith.mulf %164, %168 : vector<17x32xf32>
    %170 = vector.broadcast %145 : vector<1x32xf32> to vector<17x32xf32>
    %171 = arith.mulf %169, %170 : vector<17x32xf32>
    %172 = vector.broadcast %146 : vector<1x32xf32> to vector<17x32xf32>
    %173 = arith.addf %171, %172 : vector<17x32xf32>
    %174 = arith.truncf %173 : vector<17x32xf32> to vector<17x32xbf16>
    %175 = vector.shape_cast %174 : vector<17x32xbf16> to vector<1x17x32xbf16>
    %176 = vector.shape_cast %175 : vector<1x17x32xbf16> to vector<1x17x32xbf16>
    %177 = vector.broadcast %176 : vector<1x17x32xbf16> to vector<4x17x32xbf16>
    %c1_74 = arith.constant 1 : index
    %c0_75 = arith.constant 0 : index
    %c0_76 = arith.constant 0 : index
    %c0_77 = arith.constant 0 : index
    %178 = vector.load %arg4[%c1_74, %c0_75, %c0_76, %c0_77] : memref<2x4x32x24xbf16, #tpu.memory_space<vmem>>, vector<1x4x32x24xbf16>
    %179 = vector.shape_cast %178 : vector<1x4x32x24xbf16> to vector<4x32x24xbf16>
    %cst_78 = arith.constant dense<0.000000e+00> : vector<4x17x24xf32>
    %180 = tpu.matmul %177, %179, %cst_78 {dimension_numbers = #tpu.dot_dimension_numbers<[2], [1], [1], [2], [0, 0, 0, 1, 1, 2], [0], [0]>} : vector<4x17x32xbf16>, vector<4x32x24xbf16>, vector<4x17x24xf32> -> vector<4x17x24xf32>
    %181 = vector.extract_strided_slice %180 {offsets = [0, 0, 0], sizes = [4, 17, 8], strides = [1, 1, 1]} : vector<4x17x24xf32> to vector<4x17x8xf32>
    %182 = arith.truncf %181 : vector<4x17x8xf32> to vector<4x17x8xbf16>
    %183 = vector.extract_strided_slice %180 {offsets = [0, 0, 8], sizes = [4, 17, 8], strides = [1, 1, 1]} : vector<4x17x24xf32> to vector<4x17x8xf32>
    %184 = arith.truncf %183 : vector<4x17x8xf32> to vector<4x17x8xbf16>
    %185 = vector.extract_strided_slice %180 {offsets = [0, 0, 16], sizes = [4, 17, 8], strides = [1, 1, 1]} : vector<4x17x24xf32> to vector<4x17x8xf32>
    %186 = arith.truncf %185 : vector<4x17x8xf32> to vector<4x17x8xbf16>
    %cst_79 = arith.constant dense<0.000000e+00> : vector<4x17x17xf32>
    %187 = tpu.matmul %182, %184, %cst_79 {dimension_numbers = #tpu.dot_dimension_numbers<[2], [2], [1], [1], [0, 0, 0, 1, 1, 1], [0], [0]>} : vector<4x17x8xbf16>, vector<4x17x8xbf16>, vector<4x17x17xf32> -> vector<4x17x17xf32>
    %cst_80 = arith.constant 0.353553385 : f32
    %188 = vector.broadcast %cst_80 : f32 to vector<4x17x17xf32>
    %189 = arith.mulf %187, %188 : vector<4x17x17xf32>
    %cst_81 = arith.constant dense<0xFF800000> : vector<4x17xf32>
    %190 = vector.multi_reduction <maximumf>, %189, %cst_81 [2] : vector<4x17x17xf32> to vector<4x17xf32>
    %191 = vector.shape_cast %190 : vector<4x17xf32> to vector<4x17x1xf32>
    %192 = vector.broadcast %191 : vector<4x17x1xf32> to vector<4x17x17xf32>
    %193 = arith.subf %189, %192 : vector<4x17x17xf32>
    %194 = math.exp %193 : vector<4x17x17xf32>
    %cst_82 = arith.constant dense<0.000000e+00> : vector<4x17xf32>
    %195 = vector.multi_reduction <add>, %194, %cst_82 [2] : vector<4x17x17xf32> to vector<4x17xf32>
    %196 = vector.shape_cast %195 : vector<4x17xf32> to vector<4x17x1xf32>
    %197 = tpu.reciprocal %196 {approx = true} : vector<4x17x1xf32> -> vector<4x17x1xf32>
    %198 = vector.broadcast %197 : vector<4x17x1xf32> to vector<4x17x17xf32>
    %199 = arith.mulf %194, %198 : vector<4x17x17xf32>
    %200 = arith.truncf %199 : vector<4x17x17xf32> to vector<4x17x17xbf16>
    %cst_83 = arith.constant dense<0.000000e+00> : vector<4x17x8xf32>
    %201 = tpu.matmul %200, %186, %cst_83 {dimension_numbers = #tpu.dot_dimension_numbers<[2], [1], [1], [2], [0, 0, 0, 1, 1, 2], [0], [0]>} : vector<4x17x17xbf16>, vector<4x17x8xbf16>, vector<4x17x8xf32> -> vector<4x17x8xf32>
    %202 = arith.truncf %201 : vector<4x17x8xf32> to vector<4x17x8xbf16>
    %c1_84 = arith.constant 1 : index
    %c0_85 = arith.constant 0 : index
    %c0_86 = arith.constant 0 : index
    %c0_87 = arith.constant 0 : index
    %203 = vector.load %arg5[%c1_84, %c0_85, %c0_86, %c0_87] : memref<2x4x8x32xbf16, #tpu.memory_space<vmem>>, vector<1x4x8x32xbf16>
    %204 = vector.shape_cast %203 : vector<1x4x8x32xbf16> to vector<4x8x32xbf16>
    %cst_88 = arith.constant dense<0.000000e+00> : vector<4x17x32xf32>
    %205 = tpu.matmul %202, %204, %cst_88 {dimension_numbers = #tpu.dot_dimension_numbers<[2], [1], [1], [2], [0, 0, 0, 1, 1, 2], [0], [0]>} : vector<4x17x8xbf16>, vector<4x8x32xbf16>, vector<4x17x32xf32> -> vector<4x17x32xf32>
    %cst_89 = arith.constant dense<0.000000e+00> : vector<17x32xf32>
    %206 = vector.multi_reduction <add>, %205, %cst_89 [0] : vector<4x17x32xf32> to vector<17x32xf32>
    %207 = arith.addf %144, %206 : vector<17x32xf32>
    %208 = vector.broadcast %147 : vector<1x32xf32> to vector<17x32xf32>
    %209 = arith.addf %207, %208 : vector<17x32xf32>
    %cst_90 = arith.constant dense<0.000000e+00> : vector<17xf32>
    %210 = vector.multi_reduction <add>, %209, %cst_90 [1] : vector<17x32xf32> to vector<17xf32>
    %211 = vector.shape_cast %210 : vector<17xf32> to vector<17x1xf32>
    %cst_91 = arith.constant 3.200000e+01 : f32
    %212 = vector.broadcast %cst_91 : f32 to vector<17x1xf32>
    %213 = arith.divf %211, %212 : vector<17x1xf32>
    %214 = vector.broadcast %213 : vector<17x1xf32> to vector<17x32xf32>
    %215 = arith.subf %209, %214 : vector<17x32xf32>
    %216 = arith.mulf %215, %215 : vector<17x32xf32>
    %cst_92 = arith.constant dense<0.000000e+00> : vector<17xf32>
    %217 = vector.multi_reduction <add>, %216, %cst_92 [1] : vector<17x32xf32> to vector<17xf32>
    %218 = vector.shape_cast %217 : vector<17xf32> to vector<17x1xf32>
    %cst_93 = arith.constant 3.200000e+01 : f32
    %219 = vector.broadcast %cst_93 : f32 to vector<17x1xf32>
    %220 = arith.divf %218, %219 : vector<17x1xf32>
    %221 = vector.broadcast %213 : vector<17x1xf32> to vector<17x32xf32>
    %222 = arith.subf %209, %221 : vector<17x32xf32>
    %cst_94 = arith.constant 9.99999974E-6 : f32
    %223 = vector.broadcast %cst_94 : f32 to vector<17x1xf32>
    %224 = arith.addf %220, %223 : vector<17x1xf32>
    %225 = math.rsqrt %224 : vector<17x1xf32>
    %226 = vector.broadcast %225 : vector<17x1xf32> to vector<17x32xf32>
    %227 = arith.mulf %222, %226 : vector<17x32xf32>
    %228 = vector.broadcast %148 : vector<1x32xf32> to vector<17x32xf32>
    %229 = arith.mulf %227, %228 : vector<17x32xf32>
    %230 = vector.broadcast %149 : vector<1x32xf32> to vector<17x32xf32>
    %231 = arith.addf %229, %230 : vector<17x32xf32>
    %232 = arith.truncf %231 : vector<17x32xf32> to vector<17x32xbf16>
    %c1_95 = arith.constant 1 : index
    %c0_96 = arith.constant 0 : index
    %c0_97 = arith.constant 0 : index
    %233 = vector.load %arg6[%c1_95, %c0_96, %c0_97] : memref<2x32x128xbf16, #tpu.memory_space<vmem>>, vector<1x32x128xbf16>
    %234 = vector.shape_cast %233 : vector<1x32x128xbf16> to vector<32x128xbf16>
    %cst_98 = arith.constant dense<0.000000e+00> : vector<17x128xf32>
    %235 = tpu.matmul %232, %234, %cst_98 {dimension_numbers = #tpu.dot_dimension_numbers<[1], [0], [0], [1], [0, 0, 1, 1], [], []>} : vector<17x32xbf16>, vector<32x128xbf16>, vector<17x128xf32> -> vector<17x128xf32>
    %236 = vector.broadcast %150 : vector<1x128xf32> to vector<17x128xf32>
    %237 = arith.addf %235, %236 : vector<17x128xf32>
    %cst_99 = arith.constant 5.000000e-01 : f32
    %238 = vector.broadcast %cst_99 : f32 to vector<17x128xf32>
    %239 = arith.mulf %238, %237 : vector<17x128xf32>
    %cst_100 = arith.constant 0.707106769 : f32
    %240 = vector.broadcast %cst_100 : f32 to vector<17x128xf32>
    %241 = arith.mulf %237, %240 : vector<17x128xf32>
    %242 = math.absf %241 : vector<17x128xf32>
    %cst_101 = arith.constant 0.327591091 : f32
    %243 = vector.broadcast %cst_101 : f32 to vector<17x128xf32>
    %244 = arith.mulf %243, %242 : vector<17x128xf32>
    %cst_102 = arith.constant 1.000000e+00 : f32
    %245 = vector.broadcast %cst_102 : f32 to vector<17x128xf32>
    %246 = arith.addf %245, %244 : vector<17x128xf32>
    %247 = tpu.reciprocal %246 {approx = true} : vector<17x128xf32> -> vector<17x128xf32>
    %cst_103 = arith.constant 1.06140542 : f32
    %248 = vector.broadcast %cst_103 : f32 to vector<17x128xf32>
    %249 = arith.mulf %248, %247 : vector<17x128xf32>
    %cst_104 = arith.constant -1.45315206 : f32
    %250 = vector.broadcast %cst_104 : f32 to vector<17x128xf32>
    %251 = arith.addf %249, %250 : vector<17x128xf32>
    %252 = arith.mulf %251, %247 : vector<17x128xf32>
    %cst_105 = arith.constant 1.42141378 : f32
    %253 = vector.broadcast %cst_105 : f32 to vector<17x128xf32>
    %254 = arith.addf %252, %253 : vector<17x128xf32>
    %255 = arith.mulf %254, %247 : vector<17x128xf32>
    %cst_106 = arith.constant -0.284496725 : f32
    %256 = vector.broadcast %cst_106 : f32 to vector<17x128xf32>
    %257 = arith.addf %255, %256 : vector<17x128xf32>
    %258 = arith.mulf %257, %247 : vector<17x128xf32>
    %cst_107 = arith.constant 0.254829586 : f32
    %259 = vector.broadcast %cst_107 : f32 to vector<17x128xf32>
    %260 = arith.addf %258, %259 : vector<17x128xf32>
    %261 = arith.mulf %260, %247 : vector<17x128xf32>
    %cst_108 = arith.constant 0.000000e+00 : f32
    %262 = vector.broadcast %cst_108 : f32 to vector<17x128xf32>
    %263 = arith.subf %262, %242 : vector<17x128xf32>
    %264 = arith.mulf %263, %242 : vector<17x128xf32>
    %265 = math.exp %264 : vector<17x128xf32>
    %266 = arith.mulf %261, %265 : vector<17x128xf32>
    %cst_109 = arith.constant 1.000000e+00 : f32
    %267 = vector.broadcast %cst_109 : f32 to vector<17x128xf32>
    %268 = arith.subf %267, %266 : vector<17x128xf32>
    %cst_110 = arith.constant 0.000000e+00 : f32
    %269 = vector.broadcast %cst_110 : f32 to vector<17x128xf32>
    %270 = arith.cmpf oge, %241, %269 : vector<17x128xf32>
    %cst_111 = arith.constant 0.000000e+00 : f32
    %271 = vector.broadcast %cst_111 : f32 to vector<17x128xf32>
    %272 = arith.subf %271, %268 : vector<17x128xf32>
    %273 = arith.select %270, %268, %272 : vector<17x128xi1>, vector<17x128xf32>
    %cst_112 = arith.constant 1.000000e+00 : f32
    %274 = vector.broadcast %cst_112 : f32 to vector<17x128xf32>
    %275 = arith.addf %274, %273 : vector<17x128xf32>
    %276 = arith.mulf %239, %275 : vector<17x128xf32>
    %277 = arith.truncf %276 : vector<17x128xf32> to vector<17x128xbf16>
    %c1_113 = arith.constant 1 : index
    %c0_114 = arith.constant 0 : index
    %c0_115 = arith.constant 0 : index
    %278 = vector.load %arg7[%c1_113, %c0_114, %c0_115] : memref<2x128x32xbf16, #tpu.memory_space<vmem>>, vector<1x128x32xbf16>
    %279 = vector.shape_cast %278 : vector<1x128x32xbf16> to vector<128x32xbf16>
    %cst_116 = arith.constant dense<0.000000e+00> : vector<17x32xf32>
    %280 = tpu.matmul %277, %279, %cst_116 {dimension_numbers = #tpu.dot_dimension_numbers<[1], [0], [0], [1], [0, 0, 1, 1], [], []>} : vector<17x128xbf16>, vector<128x32xbf16>, vector<17x32xf32> -> vector<17x32xf32>
    %281 = vector.broadcast %151 : vector<1x32xf32> to vector<17x32xf32>
    %282 = arith.addf %280, %281 : vector<17x32xf32>
    %283 = arith.addf %209, %282 : vector<17x32xf32>
    %284 = vector.extract_strided_slice %283 {offsets = [0, 0], sizes = [1, 32], strides = [1, 1]} : vector<17x32xf32> to vector<1x32xf32>
    %c14 = arith.constant 14 : index
    %c0_117 = arith.constant 0 : index
    %285 = vector.load %arg8[%c14, %c0_117] : memref<17x128xf32, #tpu.memory_space<vmem>>, vector<1x32xf32>
    %c15 = arith.constant 15 : index
    %c0_118 = arith.constant 0 : index
    %286 = vector.load %arg8[%c15, %c0_118] : memref<17x128xf32, #tpu.memory_space<vmem>>, vector<1x32xf32>
    %cst_119 = arith.constant dense<0.000000e+00> : vector<1xf32>
    %287 = vector.multi_reduction <add>, %284, %cst_119 [1] : vector<1x32xf32> to vector<1xf32>
    %288 = vector.shape_cast %287 : vector<1xf32> to vector<1x1xf32>
    %cst_120 = arith.constant 3.200000e+01 : f32
    %289 = vector.broadcast %cst_120 : f32 to vector<1x1xf32>
    %290 = arith.divf %288, %289 : vector<1x1xf32>
    %291 = vector.broadcast %290 : vector<1x1xf32> to vector<1x32xf32>
    %292 = arith.subf %284, %291 : vector<1x32xf32>
    %293 = arith.mulf %292, %292 : vector<1x32xf32>
    %cst_121 = arith.constant dense<0.000000e+00> : vector<1xf32>
    %294 = vector.multi_reduction <add>, %293, %cst_121 [1] : vector<1x32xf32> to vector<1xf32>
    %295 = vector.shape_cast %294 : vector<1xf32> to vector<1x1xf32>
    %cst_122 = arith.constant 3.200000e+01 : f32
    %296 = vector.broadcast %cst_122 : f32 to vector<1x1xf32>
    %297 = arith.divf %295, %296 : vector<1x1xf32>
    %298 = vector.broadcast %290 : vector<1x1xf32> to vector<1x32xf32>
    %299 = arith.subf %284, %298 : vector<1x32xf32>
    %cst_123 = arith.constant 9.99999974E-6 : f32
    %300 = vector.broadcast %cst_123 : f32 to vector<1x1xf32>
    %301 = arith.addf %297, %300 : vector<1x1xf32>
    %302 = math.rsqrt %301 : vector<1x1xf32>
    %303 = vector.broadcast %302 : vector<1x1xf32> to vector<1x32xf32>
    %304 = arith.mulf %299, %303 : vector<1x32xf32>
    %305 = arith.mulf %304, %285 : vector<1x32xf32>
    %306 = arith.addf %305, %286 : vector<1x32xf32>
    %307 = arith.truncf %306 : vector<1x32xf32> to vector<1x32xbf16>
    %c0_124 = arith.constant 0 : index
    %c0_125 = arith.constant 0 : index
    %308 = vector.load %arg9[%c0_124, %c0_125] : memref<32x10xbf16, #tpu.memory_space<vmem>>, vector<32x10xbf16>
    %cst_126 = arith.constant dense<0.000000e+00> : vector<1x10xf32>
    %309 = tpu.matmul %307, %308, %cst_126 {dimension_numbers = #tpu.dot_dimension_numbers<[1], [0], [0], [1], [0, 0, 1, 1], [], []>} : vector<1x32xbf16>, vector<32x10xbf16>, vector<1x10xf32> -> vector<1x10xf32>
    %c16 = arith.constant 16 : index
    %c0_127 = arith.constant 0 : index
    %310 = vector.load %arg8[%c16, %c0_127] : memref<17x128xf32, #tpu.memory_space<vmem>>, vector<1x10xf32>
    %311 = arith.addf %309, %310 : vector<1x10xf32>
    %c0_128 = arith.constant 0 : index
    %c0_129 = arith.constant 0 : index
    %c0_130 = arith.constant 0 : index
    %312 = vector.load %arg10[%c0_128, %c0_129, %c0_130] : memref<1x1x10xf32, #tpu.memory_space<vmem>>, vector<1x1x10xf32>
    %313 = vector.shape_cast %312 : vector<1x1x10xf32> to vector<1x10xf32>
    %314 = vector.shape_cast %311 : vector<1x10xf32> to vector<1x1x10xf32>
    tpu.vector_store %arg10[%c0_128, %c0_129, %c0_130], %314 {strides = array<i32>} : memref<1x1x10xf32, #tpu.memory_space<vmem>>, vector<1x1x10xf32>,
    return
  }
  func.func @transform_0(%arg0: i32) -> (i32, i32, i32) {
    %c0_i32 = arith.constant 0 : i32
    %c0_i32_0 = arith.constant 0 : i32
    %c0_i32_1 = arith.constant 0 : i32
    return %arg0, %c0_i32, %c0_i32_0 : i32, i32, i32
  }
  func.func @transform_1(%arg0: i32) -> (i32, i32) {
    %c0_i32 = arith.constant 0 : i32
    %c0_i32_0 = arith.constant 0 : i32
    %c0_i32_1 = arith.constant 0 : i32
    return %c0_i32, %c0_i32_0 : i32, i32
  }
  func.func @transform_2(%arg0: i32) -> (i32, i32) {
    %c0_i32 = arith.constant 0 : i32
    %c0_i32_0 = arith.constant 0 : i32
    %c0_i32_1 = arith.constant 0 : i32
    return %c0_i32, %c0_i32_0 : i32, i32
  }
  func.func @transform_3(%arg0: i32) -> (i32, i32, i32, i32) {
    %c0_i32 = arith.constant 0 : i32
    %c0_i32_0 = arith.constant 0 : i32
    %c0_i32_1 = arith.constant 0 : i32
    %c0_i32_2 = arith.constant 0 : i32
    %c0_i32_3 = arith.constant 0 : i32
    return %c0_i32, %c0_i32_0, %c0_i32_1, %c0_i32_2 : i32, i32, i32, i32
  }
  func.func @transform_4(%arg0: i32) -> (i32, i32, i32, i32) {
    %c0_i32 = arith.constant 0 : i32
    %c0_i32_0 = arith.constant 0 : i32
    %c0_i32_1 = arith.constant 0 : i32
    %c0_i32_2 = arith.constant 0 : i32
    %c0_i32_3 = arith.constant 0 : i32
    return %c0_i32, %c0_i32_0, %c0_i32_1, %c0_i32_2 : i32, i32, i32, i32
  }
  func.func @transform_5(%arg0: i32) -> (i32, i32, i32) {
    %c0_i32 = arith.constant 0 : i32
    %c0_i32_0 = arith.constant 0 : i32
    %c0_i32_1 = arith.constant 0 : i32
    %c0_i32_2 = arith.constant 0 : i32
    return %c0_i32, %c0_i32_0, %c0_i32_1 : i32, i32, i32
  }
  func.func @transform_6(%arg0: i32) -> (i32, i32, i32) {
    %c0_i32 = arith.constant 0 : i32
    %c0_i32_0 = arith.constant 0 : i32
    %c0_i32_1 = arith.constant 0 : i32
    %c0_i32_2 = arith.constant 0 : i32
    return %c0_i32, %c0_i32_0, %c0_i32_1 : i32, i32, i32
  }
  func.func @transform_7(%arg0: i32) -> (i32, i32) {
    %c0_i32 = arith.constant 0 : i32
    %c0_i32_0 = arith.constant 0 : i32
    %c0_i32_1 = arith.constant 0 : i32
    return %c0_i32, %c0_i32_0 : i32, i32
  }
  func.func @transform_8(%arg0: i32) -> (i32, i32) {
    %c0_i32 = arith.constant 0 : i32
    %c0_i32_0 = arith.constant 0 : i32
    %c0_i32_1 = arith.constant 0 : i32
    return %c0_i32, %c0_i32_0 : i32, i32
  }
  func.func @transform_9(%arg0: i32) -> (i32, i32, i32) {
    %c0_i32 = arith.constant 0 : i32
    %c0_i32_0 = arith.constant 0 : i32
    %c0_i32_1 = arith.constant 0 : i32
    return %arg0, %c0_i32, %c0_i32_0 : i32, i32, i32
  }
}

</mosaic_0001>

<llo_original>
// kernel: vit_forward.1
$region0: #{vit_forward.1}
  #allocation0 [shape = 'u32[]', space=smem, size = 0x4, offset = 0x4, fixed_abs, tag = 'smem constant byte address 0x4 - core index']
  #allocation1 [shape = 'u32[144,128]{1,0:T(1,128)}', space=vmem, size = 0x12000, scoped, tag = 'internal scratch']
  %s0 = inlined_call_operand.vmem [shape: bf16[2,17,48], index: 0, kind: input, shape index: {}]
  %s1 = inlined_call_operand.vmem [shape: bf16[48,32], index: 1, kind: input, shape index: {}]
  %s2 = inlined_call_operand.vmem [shape: f32[17,32], index: 2, kind: input, shape index: {}]
  %s3 = inlined_call_operand.vmem [shape: bf16[2,4,32,24], index: 3, kind: input, shape index: {}]
  %s4 = inlined_call_operand.vmem [shape: bf16[2,4,8,32], index: 4, kind: input, shape index: {}]
  %s5 = inlined_call_operand.vmem [shape: bf16[2,32,128], index: 5, kind: input, shape index: {}]
  %s6 = inlined_call_operand.vmem [shape: bf16[2,128,32], index: 6, kind: input, shape index: {}]
  %s7 = inlined_call_operand.vmem [shape: f32[17,128], index: 7, kind: input, shape index: {}]
  %s8 = inlined_call_operand.vmem [shape: bf16[32,10], index: 8, kind: input, shape index: {}]
  %s9 = inlined_call_operand.hbm [shape: f32[2,1,10], index: 9, kind: output, shape index: {}]
  %s10 = sld [smem:[#allocation0]]
  $region69: #{vit_forward.1} parent=0
    _
  %s12 = ssub.s32 1, %s10
  %s13 = scalar_select 0, %s12, %s10
  $region1: #{vit_forward.1} parent=0
    #allocation2 [shape = 'u8[1024]{0}', space=vmem, size = 0x400, scoped, tag = 'output window, operand 0']
    #allocation3 [shape = 's32[2]{0}', space=sflag, size = 0x8, scoped, tag = 'scoped memory for vit_forward.1']
    %14 = vsyncpa [#allocation3], 0
    %s15 = scalar_lea.sflag [#allocation3], 1
    %16 = vsyncpa %s15, 0
    loop: start=0, step=1, limit=4
    $region2: #{vit_forward.1} parent=1 // loop_pre_header
      _
    $region3: #{vit_forward.1} parent=1 // loop_header
      %s18 = sphi 0, %s22
      %p19 = scmp.ge.s32.totalorder %s18, 4
      %s28 = sphi 0, %s30
      %s31 = sphi 0, %s28
      %s32 = sphi 0, %s31
      %s48 = sphi 0, %s32
      %s52 = sphi 0, %s52
      %s54 = sphi 0, %s52
      %s55 = sphi 0, %s54
      %s69 = sphi 0, %s55
      %s73 = sphi 0, %s73
      %s75 = sphi 0, %s73
      %s76 = sphi 0, %s75
      %s90 = sphi 0, %s76
      %s94 = sphi 0, %s94
      %s96 = sphi 0, %s94
      %s97 = sphi 0, %s96
      %s111 = sphi 0, %s97
      %s115 = sphi 0, %s115
      %s117 = sphi 0, %s115
      %s118 = sphi 0, %s117
      %s132 = sphi 0, %s118
      %s136 = sphi 0, %s136
      %s138 = sphi 0, %s136
      %s139 = sphi 0, %s138
      %s153 = sphi 0, %s139
      %s157 = sphi 0, %s157
      %s159 = sphi 0, %s157
      %s160 = sphi 0, %s159
      %s174 = sphi 0, %s160
      %s178 = sphi 0, %s178
      %s180 = sphi 0, %s178
      %s181 = sphi 0, %s180
      %s195 = sphi 0, %s181
      %s199 = sphi 0, %s199
      %s201 = sphi 0, %s199
      %s202 = sphi 0, %s201
      %s216 = sphi 0, %s202
      %s222 = sphi 0, %s224
      %s225 = sphi 0, %s222
      %s226 = sphi 0, %s225
      %s242 = sphi 0, %s226
    $region4: #{vit_forward.1} parent=1 // loop_header_branch
      %21 = sbr.rel (%p19) target = $region8
    $region5: #{vit_forward.1} parent=1 // loop_body
      %s23 = ssub.s32 %s18, 1
      %s24 = ssub.s32 %s18, 2
      %s25 = sadd.s32 %s18, 1
      %s26 = ssub.s32 %s18, %s25
      %p27 = scmp.eq.s32.totalorder %s26, 0
      %s29 = sadd.s32 %s28, 1
      %s30 = scalar_select %p27, %s28, %s29
      %p33 = pneg %p27
      %p34 = scmp.eq.s32.totalorder %s18, 1
      %p35 = por %p33, %p34
      %p36 = scmp.ne.s32.totalorder %s28, %s31
      %p37 = scmp.eq.s32.totalorder %s18, 0
      %p38 = por %p36, %p37
      %p39 = scmp.ne.s32.totalorder %s28, %s31
      %p40 = scmp.eq.s32.totalorder %s23, 1
      %p41 = por %p39, %p40
      %p42 = scmp.ne.s32.totalorder %s31, %s32
      %p43 = scmp.eq.s32.totalorder %s23, 0
      %p44 = por %p42, %p43
      %p45 = scmp.ne.s32.totalorder %s31, %s32
      %p46 = scmp.eq.s32.totalorder %s24, 1
      %p47 = por %p45, %p46
      %p49 = scmp.ne.s32.totalorder %s32, %s48
      %p50 = scmp.eq.s32.totalorder %s24, 0
      %p51 = por %p49, %p50
      %s53 = sadd.s32 %s52, 1
      %p56 = scmp.eq.s32.totalorder %s18, 1
      %p57 = scmp.ne.s32.totalorder %s52, %s54
      %p58 = scmp.eq.s32.totalorder %s18, 0
      %p59 = por %p57, %p58
      %p60 = scmp.ne.s32.totalorder %s52, %s54
      %p61 = scmp.eq.s32.totalorder %s23, 1
      %p62 = por %p60, %p61
      %p63 = scmp.ne.s32.totalorder %s54, %s55
      %p64 = scmp.eq.s32.totalorder %s23, 0
      %p65 = por %p63, %p64
      %p66 = scmp.ne.s32.totalorder %s54, %s55
      %p67 = scmp.eq.s32.totalorder %s24, 1
      %p68 = por %p66, %p67
      %p70 = scmp.ne.s32.totalorder %s55, %s69
      %p71 = scmp.eq.s32.totalorder %s24, 0
      %p72 = por %p70, %p71
      %s74 = sadd.s32 %s73, 1
      %p77 = scmp.eq.s32.totalorder %s18, 1
      %p78 = scmp.ne.s32.totalorder %s73, %s75
      %p79 = scmp.eq.s32.totalorder %s18, 0
      %p80 = por %p78, %p79
      %p81 = scmp.ne.s32.totalorder %s73, %s75
      %p82 = scmp.eq.s32.totalorder %s23, 1
      %p83 = por %p81, %p82
      %p84 = scmp.ne.s32.totalorder %s75, %s76
      %p85 = scmp.eq.s32.totalorder %s23, 0
      %p86 = por %p84, %p85
      %p87 = scmp.ne.s32.totalorder %s75, %s76
      %p88 = scmp.eq.s32.totalorder %s24, 1
      %p89 = por %p87, %p88
      %p91 = scmp.ne.s32.totalorder %s76, %s90
      %p92 = scmp.eq.s32.totalorder %s24, 0
      %p93 = por %p91, %p92
      %s95 = sadd.s32 %s94, 1
      %p98 = scmp.eq.s32.totalorder %s18, 1
      %p99 = scmp.ne.s32.totalorder %s94, %s96
      %p100 = scmp.eq.s32.totalorder %s18, 0
      %p101 = por %p99, %p100
      %p102 = scmp.ne.s32.totalorder %s94, %s96
      %p103 = scmp.eq.s32.totalorder %s23, 1
      %p104 = por %p102, %p103
      %p105 = scmp.ne.s32.totalorder %s96, %s97
      %p106 = scmp.eq.s32.totalorder %s23, 0
      %p107 = por %p105, %p106
      %p108 = scmp.ne.s32.totalorder %s96, %s97
      %p109 = scmp.eq.s32.totalorder %s24, 1
      %p110 = por %p108, %p109
      %p112 = scmp.ne.s32.totalorder %s97, %s111
      %p113 = scmp.eq.s32.totalorder %s24, 0
      %p114 = por %p112, %p113
      %s116 = sadd.s32 %s115, 1
      %p119 = scmp.eq.s32.totalorder %s18, 1
      %p120 = scmp.ne.s32.totalorder %s115, %s117
      %p121 = scmp.eq.s32.totalorder %s18, 0
      %p122 = por %p120, %p121
      %p123 = scmp.ne.s32.totalorder %s115, %s117
      %p124 = scmp.eq.s32.totalorder %s23, 1
      %p125 = por %p123, %p124
      %p126 = scmp.ne.s32.totalorder %s117, %s118
      %p127 = scmp.eq.s32.totalorder %s23, 0
      %p128 = por %p126, %p127
      %p129 = scmp.ne.s32.totalorder %s117, %s118
      %p130 = scmp.eq.s32.totalorder %s24, 1
      %p131 = por %p129, %p130
      %p133 = scmp.ne.s32.totalorder %s118, %s132
      %p134 = scmp.eq.s32.totalorder %s24, 0
      %p135 = por %p133, %p134
      %s137 = sadd.s32 %s136, 1
      %p140 = scmp.eq.s32.totalorder %s18, 1
      %p141 = scmp.ne.s32.totalorder %s136, %s138
      %p142 = scmp.eq.s32.totalorder %s18, 0
      %p143 = por %p141, %p142
      %p144 = scmp.ne.s32.totalorder %s136, %s138
      %p145 = scmp.eq.s32.totalorder %s23, 1
      %p146 = por %p144, %p145
      %p147 = scmp.ne.s32.totalorder %s138, %s139
      %p148 = scmp.eq.s32.totalorder %s23, 0
      %p149 = por %p147, %p148
      %p150 = scmp.ne.s32.totalorder %s138, %s139
      %p151 = scmp.eq.s32.totalorder %s24, 1
      %p152 = por %p150, %p151
      %p154 = scmp.ne.s32.totalorder %s139, %s153
      %p155 = scmp.eq.s32.totalorder %s24, 0
      %p156 = por %p154, %p155
      %s158 = sadd.s32 %s157, 1
      %p161 = scmp.eq.s32.totalorder %s18, 1
      %p162 = scmp.ne.s32.totalorder %s157, %s159
      %p163 = scmp.eq.s32.totalorder %s18, 0
      %p164 = por %p162, %p163
      %p165 = scmp.ne.s32.totalorder %s157, %s159
      %p166 = scmp.eq.s32.totalorder %s23, 1
      %p167 = por %p165, %p166
      %p168 = scmp.ne.s32.totalorder %s159, %s160
      %p169 = scmp.eq.s32.totalorder %s23, 0
      %p170 = por %p168, %p169
      %p171 = scmp.ne.s32.totalorder %s159, %s160
      %p172 = scmp.eq.s32.totalorder %s24, 1
      %p173 = por %p171, %p172
      %p175 = scmp.ne.s32.totalorder %s160, %s174
      %p176 = scmp.eq.s32.totalorder %s24, 0
      %p177 = por %p175, %p176
      %s179 = sadd.s32 %s178, 1
      %p182 = scmp.eq.s32.totalorder %s18, 1
      %p183 = scmp.ne.s32.totalorder %s178, %s180
      %p184 = scmp.eq.s32.totalorder %s18, 0
      %p185 = por %p183, %p184
      %p186 = scmp.ne.s32.totalorder %s178, %s180
      %p187 = scmp.eq.s32.totalorder %s23, 1
      %p188 = por %p186, %p187
      %p189 = scmp.ne.s32.totalorder %s180, %s181
      %p190 = scmp.eq.s32.totalorder %s23, 0
      %p191 = por %p189, %p190
      %p192 = scmp.ne.s32.totalorder %s180, %s181
      %p193 = scmp.eq.s32.totalorder %s24, 1
      %p194 = por %p192, %p193
      %p196 = scmp.ne.s32.totalorder %s181, %s195
      %p197 = scmp.eq.s32.totalorder %s24, 0
      %p198 = por %p196, %p197
      %s200 = sadd.s32 %s199, 1
      %p203 = scmp.eq.s32.totalorder %s18, 1
      %p204 = scmp.ne.s32.totalorder %s199, %s201
      %p205 = scmp.eq.s32.totalorder %s18, 0
      %p206 = por %p204, %p205
      %p207 = scmp.ne.s32.totalorder %s199, %s201
      %p208 = scmp.eq.s32.totalorder %s23, 1
      %p209 = por %p207, %p208
      %p210 = scmp.ne.s32.totalorder %s201, %s202
      %p211 = scmp.eq.s32.totalorder %s23, 0
      %p212 = por %p210, %p211
      %p213 = scmp.ne.s32.totalorder %s201, %s202
      %p214 = scmp.eq.s32.totalorder %s24, 1
      %p215 = por %p213, %p214
      %p217 = scmp.ne.s32.totalorder %s202, %s216
      %p218 = scmp.eq.s32.totalorder %s24, 0
      %p219 = por %p217, %p218
      %s220 = ssub.s32 %s18, %s25
      %p221 = scmp.eq.s32.totalorder %s220, 0
      %s223 = sadd.s32 %s222, 1
      %s224 = scalar_select %p221, %s222, %s223
      %p227 = pneg %p221
      %p228 = scmp.eq.s32.totalorder %s18, 1
      %p229 = por %p227, %p228
      %p230 = scmp.ne.s32.totalorder %s222, %s225
      %p231 = scmp.eq.s32.totalorder %s18, 0
      %p232 = por %p230, %p231
      %p233 = scmp.ne.s32.totalorder %s222, %s225
      %p234 = scmp.eq.s32.totalorder %s23, 1
      %p235 = por %p233, %p234
      %p236 = scmp.ne.s32.totalorder %s225, %s226
      %p237 = scmp.eq.s32.totalorder %s23, 0
      %p238 = por %p236, %p237
      %p239 = scmp.ne.s32.totalorder %s225, %s226
      %p240 = scmp.eq.s32.totalorder %s24, 1
      %p241 = por %p239, %p240
      %p243 = scmp.ne.s32.totalorder %s226, %s242
      %p244 = scmp.eq.s32.totalorder %s24, 0
      %p245 = por %p243, %p244
      %p246 = scmp.le.s32.totalorder 1, %s18
      %p247 = scmp.lt.s32.totalorder %s18, 3
      %p248 = pnand %p246, %p247
      %p249 = pneg %p248
      // Predicated region
      $region9: #{vit_forward.1} parent=5 // pred_check
        _
      $region10: #{vit_forward.1} parent=5 // pred_check_branch
        %251 = sbr.rel (%p248) target = $region12
      $region11: #{vit_forward.1} parent=5 // pred_region
        %s252 = ssub.s32 %s18, 1
        // Predicated region
        $region13: #{vit_forward.1} parent=11 // pred_check
          %p253 = pneg %p65
        $region14: #{vit_forward.1} parent=11 // pred_check_branch
          %255 = sbr.rel (%p253) target = $region16
        $region15: #{vit_forward.1} parent=11 // pred_region
          _
        $region16: #{vit_forward.1} parent=11 // pred_fallthru
          _
        // Predicated region
        $region17: #{vit_forward.1} parent=11 // pred_check
          %p256 = pneg %p86
        $region18: #{vit_forward.1} parent=11 // pred_check_branch
          %258 = sbr.rel (%p256) target = $region20
        $region19: #{vit_forward.1} parent=11 // pred_region
          _
        $region20: #{vit_forward.1} parent=11 // pred_fallthru
          _
        // Predicated region
        $region21: #{vit_forward.1} parent=11 // pred_check
          %p259 = pneg %p107
        $region22: #{vit_forward.1} parent=11 // pred_check_branch
          %261 = sbr.rel (%p259) target = $region24
        $region23: #{vit_forward.1} parent=11 // pred_region
          _
        $region24: #{vit_forward.1} parent=11 // pred_fallthru
          _
        // Predicated region
        $region25: #{vit_forward.1} parent=11 // pred_check
          %p262 = pneg %p128
        $region26: #{vit_forward.1} parent=11 // pred_check_branch
          %264 = sbr.rel (%p262) target = $region28
        $region27: #{vit_forward.1} parent=11 // pred_region
          _
        $region28: #{vit_forward.1} parent=11 // pred_fallthru
          _
        // Predicated region
        $region29: #{vit_forward.1} parent=11 // pred_check
          %p265 = pneg %p149
        $region30: #{vit_forward.1} parent=11 // pred_check_branch
          %267 = sbr.rel (%p265) target = $region32
        $region31: #{vit_forward.1} parent=11 // pred_region
          _
        $region32: #{vit_forward.1} parent=11 // pred_fallthru
          _
        // Predicated region
        $region33: #{vit_forward.1} parent=11 // pred_check
          %p268 = pneg %p170
        $region34: #{vit_forward.1} parent=11 // pred_check_branch
          %270 = sbr.rel (%p268) target = $region36
        $region35: #{vit_forward.1} parent=11 // pred_region
          _
        $region36: #{vit_forward.1} parent=11 // pred_fallthru
          _
        // Predicated region
        $region37: #{vit_forward.1} parent=11 // pred_check
          %p271 = pneg %p191
        $region38: #{vit_forward.1} parent=11 // pred_check_branch
          %273 = sbr.rel (%p271) target = $region40
        $region39: #{vit_forward.1} parent=11 // pred_region
          _
        $region40: #{vit_forward.1} parent=11 // pred_fallthru
          _
        // Predicated region
        $region41: #{vit_forward.1} parent=11 // pred_check
          %p274 = pneg %p212
        $region42: #{vit_forward.1} parent=11 // pred_check_branch
          %276 = sbr.rel (%p274) target = $region44
        $region43: #{vit_forward.1} parent=11 // pred_region
          _
        $region44: #{vit_forward.1} parent=11 // pred_fallthru
          _
      $region12: #{vit_forward.1} parent=5 // pred_fallthru
        _
      %p277 = scmp.lt.s32.totalorder %s18, 2
      // Predicated region
      $region45: #{vit_forward.1} parent=5 // pred_check
        %p278 = pneg %p277
      $region46: #{vit_forward.1} parent=5 // pred_check_branch
        %280 = sbr.rel (%p278) target = $region48
      $region47: #{vit_forward.1} parent=5 // pred_region
        // Predicated region
        $region49: #{vit_forward.1} parent=47 // pred_check
          %p281 = pneg %p38
        $region50: #{vit_forward.1} parent=47 // pred_check_branch
          %283 = sbr.rel (%p281) target = $region52
        $region51: #{vit_forward.1} parent=47 // pred_region
          %p284 = scmp.lt.s32.totalorder %s18, 1
          %s285 = scalar_select %p284, %s18, 1
          %s286 = smul.addr %s285, 3
          %s287 = smul.addr %s286, 4
          %s288 = scalar_lea.vmem %s0, %s287
        $region52: #{vit_forward.1} parent=47 // pred_fallthru
          _
      $region48: #{vit_forward.1} parent=5 // pred_fallthru
        _
      %p289 = scmp.le.s32.totalorder 1, %s18
      %p290 = scmp.lt.s32.totalorder %s18, 3
      %p291 = pnand %p289, %p290
      %p292 = pneg %p291
      // Predicated region
      $region53: #{vit_forward.1} parent=5 // pred_check
        _
      $region54: #{vit_forward.1} parent=5 // pred_check_branch
        %294 = sbr.rel (%p291) target = $region56
      $region55: #{vit_forward.1} parent=5 // pred_region
        %s295 = ssub.s32 %s18, 1
        %p296 = scmp.lt.s32.totalorder %s23, 1
        %s297 = scalar_select %p296, %s23, 1
        %s298 = smul.addr %s297, 3
        %s299 = smul.addr %s298, 4
        %s300 = scalar_lea.vmem %s0, %s299
        %p301 = pneg %p44
        %p302 = pneg %p41
        %p303 = pneg %p65
        %p304 = pneg %p62
        %p305 = pneg %p86
        %p306 = pneg %p83
        %p307 = pneg %p107
        %p308 = pneg %p104
        %p309 = pneg %p128
        %p310 = pneg %p125
        %p311 = pneg %p149
        %p312 = pneg %p146
        %p313 = pneg %p170
        %p314 = pneg %p167
        %p315 = pneg %p191
        %p316 = pneg %p188
        %p317 = pneg %p212
        %p318 = pneg %p209
        %p319 = pneg %p238
        %p320 = pneg %p235
        %s321 = sand.u32 %s225, 1
        %s322 = scalar_lea.sflag [#allocation3], %s321
        %s323 = sand.u32 %s225, 1
        %s324 = scalar_lea.vmem [#allocation2], %s323
        %p325 = scmp.lt.s32.totalorder %s23, 1
        %s326 = scalar_select %p325, %s23, 1
        %s327 = smul.addr %s326, 3
        %s328 = smul.addr %s327, 4
        %s329 = scalar_lea.vmem %s0, %s328
        %v331 = vld [vmem:[%s329] sm:$0xf]
        %v332 = vld [vmem:[%s329 + $0x4] sm:$0xf]
        %v333 = vld [vmem:[%s329 + $0x8] sm:$0x1]
        %v334 = vld [vmem:[%s1] sm:$0xf]
        %v335 = vld [vmem:[%s1 + $0x4] sm:$0xf]
        %v336 = vld [vmem:[%s1 + $0x8] sm:$0xf]
        %v337 = vld [vmem:[%s1 + $0xc] sm:$0xf]
        %v338 = vld [vmem:[%s1 + $0x10] sm:$0xf]
        %v339 = vld [vmem:[%s1 + $0x14] sm:$0xf]
        %v340 = vld [vmem:[%s2] sm:$0xff]
        %v341 = vld [vmem:[%s2 + $0x8] sm:$0xff]
        %v342 = vld [vmem:[%s2 + $0x10] sm:$0x1]
        %v346 = vunpack.c.l.b16 %v331
        %v347 = vunpack.c.l.b16 %v332
        %v348 = vunpack.c.l.b16 %v333
        %v349 = vpack.c.b16 %v347, %v346
        %v350 = vpack.c.b16 %v348, %v348
        %v357 = vunpack.c.l.b16 %v334
        %v358 = vunpack.c.l.b16 %v335
        %v359 = vunpack.c.l.b16 %v336
        %v360 = vunpack.c.l.b16 %v337
        %v361 = vunpack.c.l.b16 %v338
        %v362 = vunpack.c.l.b16 %v339
        %v363 = vpack.c.b16 %v358, %v357
        %v364 = vpack.c.b16 %v360, %v359
        %v365 = vpack.c.b16 %v362, %v361
        %vm369 = vcmask 392192
        %v371 = vsel %vm369, %v349, 0
        %v374 = vsel %vm369, %v350, 0
        %376 = vmatprep.subr.bf16.mxu0 0
        %377 = vmatpush1.bf16.msra.mxu0 %v363
        %378 = vmatprep.subr.bf16.mxu0 0
        %379 = vmatpush1.bf16.msra.mxu0 %v364
        %380 = vmatprep.subr.bf16.mxu0 0
        %381 = vmatpush1.bf16.msra.mxu0 %v365
        %382 = vmatprep.subr.bf16.mxu0 0
        %383 = vmatpush1.bf16.msra.mxu0 0
        %384 = vmatprep.subr.bf16.mxu0 0
        %385 = vmatpush1.bf16.msra.mxu0 0
        %386 = vmatprep.subr.bf16.mxu0 0
        %387 = vmatpush1.bf16.msra.mxu0 0
        %388 = vmatprep.subr.bf16.mxu0 0
        %389 = vmatpush1.bf16.msra.mxu0 0
        %390 = vmatprep.subr.bf16.mxu0 0
        %391 = vmatpush1.bf16.msra.mxu0 0
        %392 = vmatprep.subr.bf16.mxu0 0
        %393 = vmatpush1.bf16.msra.mxu0 0
        %394 = vmatprep.subr.bf16.mxu0 0
        %395 = vmatpush1.bf16.msra.mxu0 0
        %396 = vmatprep.subr.bf16.mxu0 0
        %397 = vmatpush1.bf16.msra.mxu0 0
        %398 = vmatprep.subr.bf16.mxu0 0
        %399 = vmatpush1.bf16.msra.mxu0 0
        %400 = vmatprep.subr.bf16.mxu0 0
        %401 = vmatpush1.bf16.msra.mxu0 0
        %402 = vmatprep.subr.bf16.mxu0 0
        %403 = vmatpush1.bf16.msra.mxu0 0
        %404 = vmatprep.subr.bf16.mxu0 0
        %405 = vmatpush1.bf16.msra.mxu0 0
        %406 = vmatprep.subr.bf16.mxu0 0
        %407 = vmatpush1.bf16.msra.mxu0 0
        %408 = vmatprep.mubr.bf16.mxu0 0
        %409 = vmatmul.mubr.bf16.gmra.mrb[0].mxu0 %v371
        %v410 = vpop.f32.mrb[0].mxu0
        %v411 = vadd.f32 %v340, %v410
        %v412 = vpop.f32.mrb[0].mxu0
        %v413 = vpop.f32.mrb[0].mxu0
        %v414 = vadd.f32 %v341, %v413
        %v415 = vpop.f32.mrb[0].mxu0
        %416 = vmatprep.mubr.bf16.mxu0 0
        %417 = vmatmul.mubr.bf16.gmra.mrb[0].mxu0 %v374
        %v418 = vpop.f32.mrb[0].mxu0
        %v419 = vadd.f32 %v342, %v418
        %v420 = vpop.f32.mrb[0].mxu0
        %v421 = vpop.f32.mrb[0].mxu0
        %v422 = vpop.f32.mrb[0].mxu0
        %423 = vdwg.mxu0
        %v424 = vld [vmem:[%s7] sm:$0x1]
        %v425 = vld [vmem:[%s7 + $0x1] sm:$0x1]
        %v426 = vld [vmem:[%s7 + $0x2] sm:$0x1]
        %v427 = vld [vmem:[%s7 + $0x3] sm:$0x1]
        %v428 = vld [vmem:[%s7 + $0x4] sm:$0x1]
        %v429 = vld [vmem:[%s7 + $0x5] sm:$0x1]
        %v430 = vld [vmem:[%s7 + $0x6] sm:$0x1]
        %vm431 = vcmask 261120
        %v432 = vsel %vm431, %v411, 0.0
        %433 = vadd.xlane.f32.xlu0 %v432
        %v434 = vpop.xlane.xlu0 %433
        %v435 = vsel %vm431, %v414, 0.0
        %436 = vadd.xlane.f32.xlu0 %v435
        %v437 = vpop.xlane.xlu0 %436
        %vm438 = vcmask 253952
        %v439 = vsel %vm438, %v419, 0.0
        %440 = vadd.xlane.f32.xlu0 %v439
        %v441 = vpop.xlane.xlu0 %440
        %v442 = vrcp.pop 32.0
        %v443 = vmul.f32 %v434, %v442
        %v444 = vmul.f32 %v437, %v442
        %v445 = vmul.f32 %v441, %v442
        %v446 = vsub.f32 %v411, %v443
        %v447 = vsub.f32 %v414, %v444
        %v448 = vsub.f32 %v419, %v445
        %v449 = vmul.f32 %v446, %v446
        %v450 = vmul.f32 %v447, %v447
        %v451 = vmul.f32 %v448, %v448
        %v452 = vsel %vm431, %v449, 0.0
        %453 = vadd.xlane.f32.xlu0 %v452
        %v454 = vpop.xlane.xlu0 %453
        %v455 = vsel %vm431, %v450, 0.0
        %456 = vadd.xlane.f32.xlu0 %v455
        %v457 = vpop.xlane.xlu0 %456
        %v458 = vsel %vm438, %v451, 0.0
        %459 = vadd.xlane.f32.xlu0 %v458
        %v460 = vpop.xlane.xlu0 %459
        %v461 = vmul.f32 %v454, %v442
        %v462 = vmul.f32 %v457, %v442
        %v463 = vmul.f32 %v460, %v442
        %v464 = vadd.f32 %v461, 1e-05
        %v465 = vadd.f32 %v462, 1e-05
        %v466 = vadd.f32 %v463, 1e-05
        %v467 = vrsqrt.pop %v464
        %v468 = vrsqrt.pop %v465
        %v469 = vrsqrt.pop %v466
        %v470 = vmul.f32 %v446, %v467
        %v471 = vmul.f32 %v447, %v468
        %v472 = vmul.f32 %v448, %v469
        %v473 = vlaneseq
        %v474 = vshrl.u32 %v473, 7
        %v475 = vsub.s32 0, %v474
        %v476 = vrot.slane %v424, %v475
        %v477 = vmul.f32 %v470, %v476
        %v478 = vmul.f32 %v471, %v476
        %v479 = vmul.f32 %v472, %v476
        %v480 = vlaneseq
        %v481 = vshrl.u32 %v480, 7
        %v482 = vsub.s32 0, %v481
        %v483 = vrot.slane %v425, %v482
        %v484 = vadd.f32 %v477, %v483
        %v485 = vadd.f32 %v478, %v483
        %v486 = vadd.f32 %v479, %v483
        %v487 = vpack.c.bf16 %v485, %v484
        %v488 = vpack.c.bf16 %v486, %v486
        %v489 = vld [vmem:[%s3] sm:$0xf]
        %v490 = vld [vmem:[%s3 + $0x4] sm:$0xf]
        %v491 = vld [vmem:[%s3 + $0x8] sm:$0xf]
        %v492 = vld [vmem:[%s3 + $0xc] sm:$0xf]
        %v493 = vld [vmem:[%s3 + $0x10] sm:$0xf]
        %v494 = vld [vmem:[%s3 + $0x14] sm:$0xf]
        %v495 = vld [vmem:[%s3 + $0x18] sm:$0xf]
        %v496 = vld [vmem:[%s3 + $0x1c] sm:$0xf]
        %v497 = vld [vmem:[%s3 + $0x20] sm:$0xf]
        %v498 = vld [vmem:[%s3 + $0x24] sm:$0xf]
        %v499 = vld [vmem:[%s3 + $0x28] sm:$0xf]
        %v500 = vld [vmem:[%s3 + $0x2c] sm:$0xf]
        %v501 = vld [vmem:[%s3 + $0x30] sm:$0xf]
        %v502 = vld [vmem:[%s3 + $0x34] sm:$0xf]
        %v503 = vld [vmem:[%s3 + $0x38] sm:$0xf]
        %v504 = vld [vmem:[%s3 + $0x3c] sm:$0xf]
        %v509 = vunpack.c.l.b16 %v489
        %v510 = vunpack.c.l.b16 %v490
        %v511 = vunpack.c.l.b16 %v491
        %v512 = vunpack.c.l.b16 %v492
        %v513 = vpack.c.b16 %v510, %v509
        %v514 = vpack.c.b16 %v512, %v511
        %v518 = vsel %vm431, %v487, 0
        %v521 = vsel %vm431, %v488, 0
        %523 = vmatprep.subr.bf16.mxu0 0
        %524 = vmatpush1.bf16.msra.mxu0 %v513
        %525 = vmatprep.subr.bf16.mxu0 0
        %526 = vmatpush1.bf16.msra.mxu0 %v514
        %527 = vmatprep.subr.bf16.mxu0 0
        %528 = vmatpush1.bf16.msra.mxu0 0
        %529 = vmatprep.subr.bf16.mxu0 0
        %530 = vmatpush1.bf16.msra.mxu0 0
        %531 = vmatprep.subr.bf16.mxu0 0
        %532 = vmatpush1.bf16.msra.mxu0 0
        %533 = vmatprep.subr.bf16.mxu0 0
        %534 = vmatpush1.bf16.msra.mxu0 0
        %535 = vmatprep.subr.bf16.mxu0 0
        %536 = vmatpush1.bf16.msra.mxu0 0
        %537 = vmatprep.subr.bf16.mxu0 0
        %538 = vmatpush1.bf16.msra.mxu0 0
        %539 = vmatprep.subr.bf16.mxu0 0
        %540 = vmatpush1.bf16.msra.mxu0 0
        %541 = vmatprep.subr.bf16.mxu0 0
        %542 = vmatpush1.bf16.msra.mxu0 0
        %543 = vmatprep.subr.bf16.mxu0 0
        %544 = vmatpush1.bf16.msra.mxu0 0
        %545 = vmatprep.subr.bf16.mxu0 0
        %546 = vmatpush1.bf16.msra.mxu0 0
        %547 = vmatprep.subr.bf16.mxu0 0
        %548 = vmatpush1.bf16.msra.mxu0 0
        %549 = vmatprep.subr.bf16.mxu0 0
        %550 = vmatpush1.bf16.msra.mxu0 0
        %551 = vmatprep.subr.bf16.mxu0 0
        %552 = vmatpush1.bf16.msra.mxu0 0
        %553 = vmatprep.subr.bf16.mxu0 0
        %554 = vmatpush1.bf16.msra.mxu0 0
        %555 = vmatprep.mubr.bf16.mxu0 0
        %556 = vmatmul.mubr.bf16.gmra.mrb[0].mxu0 %v518
        %v557 = vpop.f32.mrb[0].mxu0
        %v558 = vadd.f32 0.0, %v557
        %v559 = vpop.f32.mrb[0].mxu0
        %v560 = vpop.f32.mrb[0].mxu0
        %v561 = vadd.f32 0.0, %v560
        %v562 = vpop.f32.mrb[0].mxu0
        %563 = vmatprep.mubr.bf16.mxu0 0
        %564 = vmatmul.mubr.bf16.gmra.mrb[0].mxu0 %v521
        %v565 = vpop.f32.mrb[0].mxu0
        %v566 = vadd.f32 0.0, %v565
        %v567 = vpop.f32.mrb[0].mxu0
        %v568 = vpop.f32.mrb[0].mxu0
        %v569 = vpop.f32.mrb[0].mxu0
        %570 = vdwg.mxu0
        %v575 = vunpack.c.l.b16 %v493
        %v576 = vunpack.c.l.b16 %v494
        %v577 = vunpack.c.l.b16 %v495
        %v578 = vunpack.c.l.b16 %v496
        %v579 = vpack.c.b16 %v576, %v575
        %v580 = vpack.c.b16 %v578, %v577
        %583 = vmatprep.subr.bf16.mxu0 0
        %584 = vmatpush1.bf16.msra.mxu0 %v579
        %585 = vmatprep.subr.bf16.mxu0 0
        %586 = vmatpush1.bf16.msra.mxu0 %v580
        %587 = vmatprep.subr.bf16.mxu0 0
        %588 = vmatpush1.bf16.msra.mxu0 0
        %589 = vmatprep.subr.bf16.mxu0 0
        %590 = vmatpush1.bf16.msra.mxu0 0
        %591 = vmatprep.subr.bf16.mxu0 0
        %592 = vmatpush1.bf16.msra.mxu0 0
        %593 = vmatprep.subr.bf16.mxu0 0
        %594 = vmatpush1.bf16.msra.mxu0 0
        %595 = vmatprep.subr.bf16.mxu0 0
        %596 = vmatpush1.bf16.msra.mxu0 0
        %597 = vmatprep.subr.bf16.mxu0 0
        %598 = vmatpush1.bf16.msra.mxu0 0
        %599 = vmatprep.subr.bf16.mxu0 0
        %600 = vmatpush1.bf16.msra.mxu0 0
        %601 = vmatprep.subr.bf16.mxu0 0
        %602 = vmatpush1.bf16.msra.mxu0 0
        %603 = vmatprep.subr.bf16.mxu0 0
        %604 = vmatpush1.bf16.msra.mxu0 0
        %605 = vmatprep.subr.bf16.mxu0 0
        %606 = vmatpush1.bf16.msra.mxu0 0
        %607 = vmatprep.subr.bf16.mxu0 0
        %608 = vmatpush1.bf16.msra.mxu0 0
        %609 = vmatprep.subr.bf16.mxu0 0
        %610 = vmatpush1.bf16.msra.mxu0 0
        %611 = vmatprep.subr.bf16.mxu0 0
        %612 = vmatpush1.bf16.msra.mxu0 0
        %613 = vmatprep.subr.bf16.mxu0 0
        %614 = vmatpush1.bf16.msra.mxu0 0
        %615 = vmatprep.mubr.bf16.mxu0 0
        %616 = vmatmul.mubr.bf16.gmra.mrb[0].mxu0 %v518
        %v617 = vpop.f32.mrb[0].mxu0
        %v618 = vadd.f32 0.0, %v617
        %v619 = vpop.f32.mrb[0].mxu0
        %v620 = vpop.f32.mrb[0].mxu0
        %v621 = vadd.f32 0.0, %v620
        %v622 = vpop.f32.mrb[0].mxu0
        %623 = vmatprep.mubr.bf16.mxu0 0
        %624 = vmatmul.mubr.bf16.gmra.mrb[0].mxu0 %v521
        %v625 = vpop.f32.mrb[0].mxu0
        %v626 = vadd.f32 0.0, %v625
        %v627 = vpop.f32.mrb[0].mxu0
        %v628 = vpop.f32.mrb[0].mxu0
        %v629 = vpop.f32.mrb[0].mxu0
        %630 = vdwg.mxu0
        %v635 = vunpack.c.l.b16 %v497
        %v636 = vunpack.c.l.b16 %v498
        %v637 = vunpack.c.l.b16 %v499
        %v638 = vunpack.c.l.b16 %v500
        %v639 = vpack.c.b16 %v636, %v635
        %v640 = vpack.c.b16 %v638, %v637
        %643 = vmatprep.subr.bf16.mxu0 0
        %644 = vmatpush1.bf16.msra.mxu0 %v639
        %645 = vmatprep.subr.bf16.mxu0 0
        %646 = vmatpush1.bf16.msra.mxu0 %v640
        %647 = vmatprep.subr.bf16.mxu0 0
        %648 = vmatpush1.bf16.msra.mxu0 0
        %649 = vmatprep.subr.bf16.mxu0 0
        %650 = vmatpush1.bf16.msra.mxu0 0
        %651 = vmatprep.subr.bf16.mxu0 0
        %652 = vmatpush1.bf16.msra.mxu0 0
        %653 = vmatprep.subr.bf16.mxu0 0
        %654 = vmatpush1.bf16.msra.mxu0 0
        %655 = vmatprep.subr.bf16.mxu0 0
        %656 = vmatpush1.bf16.msra.mxu0 0
        %657 = vmatprep.subr.bf16.mxu0 0
        %658 = vmatpush1.bf16.msra.mxu0 0
        %659 = vmatprep.subr.bf16.mxu0 0
        %660 = vmatpush1.bf16.msra.mxu0 0
        %661 = vmatprep.subr.bf16.mxu0 0
        %662 = vmatpush1.bf16.msra.mxu0 0
        %663 = vmatprep.subr.bf16.mxu0 0
        %664 = vmatpush1.bf16.msra.mxu0 0
        %665 = vmatprep.subr.bf16.mxu0 0
        %666 = vmatpush1.bf16.msra.mxu0 0
        %667 = vmatprep.subr.bf16.mxu0 0
        %668 = vmatpush1.bf16.msra.mxu0 0
        %669 = vmatprep.subr.bf16.mxu0 0
        %670 = vmatpush1.bf16.msra.mxu0 0
        %671 = vmatprep.subr.bf16.mxu0 0
        %672 = vmatpush1.bf16.msra.mxu0 0
        %673 = vmatprep.subr.bf16.mxu0 0
        %674 = vmatpush1.bf16.msra.mxu0 0
        %675 = vmatprep.mubr.bf16.mxu0 0
        %676 = vmatmul.mubr.bf16.gmra.mrb[0].mxu0 %v518
        %v677 = vpop.f32.mrb[0].mxu0
        %v678 = vadd.f32 0.0, %v677
        %v679 = vpop.f32.mrb[0].mxu0
        %v680 = vpop.f32.mrb[0].mxu0
        %v681 = vadd.f32 0.0, %v680
        %v682 = vpop.f32.mrb[0].mxu0
        %683 = vmatprep.mubr.bf16.mxu0 0
        %684 = vmatmul.mubr.bf16.gmra.mrb[0].mxu0 %v521
        %v685 = vpop.f32.mrb[0].mxu0
        %v686 = vadd.f32 0.0, %v685
        %v687 = vpop.f32.mrb[0].mxu0
        %v688 = vpop.f32.mrb[0].mxu0
        %v689 = vpop.f32.mrb[0].mxu0
        %690 = vdwg.mxu0
        %v695 = vunpack.c.l.b16 %v501
        %v696 = vunpack.c.l.b16 %v502
        %v697 = vunpack.c.l.b16 %v503
        %v698 = vunpack.c.l.b16 %v504
        %v699 = vpack.c.b16 %v696, %v695
        %v700 = vpack.c.b16 %v698, %v697
        %703 = vmatprep.subr.bf16.mxu0 0
        %704 = vmatpush1.bf16.msra.mxu0 %v699
        %705 = vmatprep.subr.bf16.mxu0 0
        %706 = vmatpush1.bf16.msra.mxu0 %v700
        %707 = vmatprep.subr.bf16.mxu0 0
        %708 = vmatpush1.bf16.msra.mxu0 0
        %709 = vmatprep.subr.bf16.mxu0 0
        %710 = vmatpush1.bf16.msra.mxu0 0
        %711 = vmatprep.subr.bf16.mxu0 0
        %712 = vmatpush1.bf16.msra.mxu0 0
        %713 = vmatprep.subr.bf16.mxu0 0
        %714 = vmatpush1.bf16.msra.mxu0 0
        %715 = vmatprep.subr.bf16.mxu0 0
        %716 = vmatpush1.bf16.msra.mxu0 0
        %717 = vmatprep.subr.bf16.mxu0 0
        %718 = vmatpush1.bf16.msra.mxu0 0
        %719 = vmatprep.subr.bf16.mxu0 0
        %720 = vmatpush1.bf16.msra.mxu0 0
        %721 = vmatprep.subr.bf16.mxu0 0
        %722 = vmatpush1.bf16.msra.mxu0 0
        %723 = vmatprep.subr.bf16.mxu0 0
        %724 = vmatpush1.bf16.msra.mxu0 0
        %725 = vmatprep.subr.bf16.mxu0 0
        %726 = vmatpush1.bf16.msra.mxu0 0
        %727 = vmatprep.subr.bf16.mxu0 0
        %728 = vmatpush1.bf16.msra.mxu0 0
        %729 = vmatprep.subr.bf16.mxu0 0
        %730 = vmatpush1.bf16.msra.mxu0 0
        %731 = vmatprep.subr.bf16.mxu0 0
        %732 = vmatpush1.bf16.msra.mxu0 0
        %733 = vmatprep.subr.bf16.mxu0 0
        %734 = vmatpush1.bf16.msra.mxu0 0
        %735 = vmatprep.mubr.bf16.mxu0 0
        %736 = vmatmul.mubr.bf16.gmra.mrb[0].mxu0 %v518
        %v737 = vpop.f32.mrb[0].mxu0
        %v738 = vadd.f32 0.0, %v737
        %v739 = vpop.f32.mrb[0].mxu0
        %v740 = vpop.f32.mrb[0].mxu0
        %v741 = vadd.f32 0.0, %v740
        %v742 = vpop.f32.mrb[0].mxu0
        %743 = vmatprep.mubr.bf16.mxu0 0
        %744 = vmatmul.mubr.bf16.gmra.mrb[0].mxu0 %v521
        %v745 = vpop.f32.mrb[0].mxu0
        %v746 = vadd.f32 0.0, %v745
        %v747 = vpop.f32.mrb[0].mxu0
        %v748 = vpop.f32.mrb[0].mxu0
        %v749 = vpop.f32.mrb[0].mxu0
        %750 = vdwg.mxu0
        %v751 = vpack.c.bf16 %v561, %v558
        %v752 = vpack.c.bf16 %v566, %v566
        %v753 = vpack.c.bf16 %v621, %v618
        %v754 = vpack.c.bf16 %v626, %v626
        %v755 = vpack.c.bf16 %v681, %v678
        %v756 = vpack.c.bf16 %v686, %v686
        %v757 = vpack.c.bf16 %v741, %v738
        %v758 = vpack.c.bf16 %v746, %v746
        %761 = vrot.lane.b32.xlu0 %v751, 120
        %v762 = vpop.permute.xlu0 %761
        %763 = vrot.lane.b32.xlu0 %v752, 120
        %v764 = vpop.permute.xlu0 %763
        %vm765 = vcmask 64512
        %v767 = vsel %vm765, %v751, 0
        %v770 = vsel %vm765, %v752, 0
        %v773 = vsel %vm765, %v762, 0
        %v776 = vsel %vm765, %v764, 0
        %778 = vmatprep.subr.bf16.mxu0 0
        %779 = vmatpush1.bf16.xpose.msra.mxu0 %v773
        %780 = vmatprep.subr.bf16.mxu0 0
        %781 = vmatpush1.bf16.xpose.msra.mxu0 %v776
        %782 = vmatprep.subr.bf16.mxu0 0
        %783 = vmatpush1.bf16.xpose.msra.mxu0 0
        %784 = vmatprep.subr.bf16.mxu0 0
        %785 = vmatpush1.bf16.xpose.msra.mxu0 0
        %786 = vmatprep.subr.bf16.mxu0 0
        %787 = vmatpush1.bf16.xpose.msra.mxu0 0
        %788 = vmatprep.subr.bf16.mxu0 0
        %789 = vmatpush1.bf16.xpose.msra.mxu0 0
        %790 = vmatprep.subr.bf16.mxu0 0
        %791 = vmatpush1.bf16.xpose.msra.mxu0 0
        %792 = vmatprep.subr.bf16.mxu0 0
        %793 = vmatpush1.bf16.xpose.msra.mxu0 0
        %794 = vmatprep.subr.bf16.mxu0 0
        %795 = vmatpush1.bf16.xpose.msra.mxu0 0
        %796 = vmatprep.subr.bf16.mxu0 0
        %797 = vmatpush1.bf16.xpose.msra.mxu0 0
        %798 = vmatprep.subr.bf16.mxu0 0
        %799 = vmatpush1.bf16.xpose.msra.mxu0 0
        %800 = vmatprep.subr.bf16.mxu0 0
        %801 = vmatpush1.bf16.xpose.msra.mxu0 0
        %802 = vmatprep.subr.bf16.mxu0 0
        %803 = vmatpush1.bf16.xpose.msra.mxu0 0
        %804 = vmatprep.subr.bf16.mxu0 0
        %805 = vmatpush1.bf16.xpose.msra.mxu0 0
        %806 = vmatprep.subr.bf16.mxu0 0
        %807 = vmatpush1.bf16.xpose.msra.mxu0 0
        %808 = vmatprep.subr.bf16.mxu0 0
        %809 = vmatpush1.bf16.xpose.msra.mxu0 0
        %810 = vmatprep.mubr.bf16.mxu0 0
        %811 = vmatmul.mubr.bf16.gmra.mrb[0].mxu0 %v767
        %v812 = vpop.f32.mrb[0].mxu0
        %v813 = vadd.f32 0.0, %v812
        %v814 = vpop.f32.mrb[0].mxu0
        %v815 = vpop.f32.mrb[0].mxu0
        %v816 = vadd.f32 0.0, %v815
        %v817 = vpop.f32.mrb[0].mxu0
        %818 = vmatprep.mubr.bf16.mxu0 0
        %819 = vmatmul.mubr.bf16.gmra.mrb[0].mxu0 %v770
        %v820 = vpop.f32.mrb[0].mxu0
        %v821 = vadd.f32 0.0, %v820
        %v822 = vpop.f32.mrb[0].mxu0
        %v823 = vpop.f32.mrb[0].mxu0
        %v824 = vpop.f32.mrb[0].mxu0
        %825 = vdwg.mxu0
        %828 = vrot.lane.b32.xlu0 %v753, 120
        %v829 = vpop.permute.xlu0 %828
        %830 = vrot.lane.b32.xlu0 %v754, 120
        %v831 = vpop.permute.xlu0 %830
        %v833 = vsel %vm765, %v753, 0
        %v836 = vsel %vm765, %v754, 0
        %v839 = vsel %vm765, %v829, 0
        %v842 = vsel %vm765, %v831, 0
        %844 = vmatprep.subr.bf16.mxu0 0
        %845 = vmatpush1.bf16.xpose.msra.mxu0 %v839
        %846 = vmatprep.subr.bf16.mxu0 0
        %847 = vmatpush1.bf16.xpose.msra.mxu0 %v842
        %848 = vmatprep.subr.bf16.mxu0 0
        %849 = vmatpush1.bf16.xpose.msra.mxu0 0
        %850 = vmatprep.subr.bf16.mxu0 0
        %851 = vmatpush1.bf16.xpose.msra.mxu0 0
        %852 = vmatprep.subr.bf16.mxu0 0
        %853 = vmatpush1.bf16.xpose.msra.mxu0 0
        %854 = vmatprep.subr.bf16.mxu0 0
        %855 = vmatpush1.bf16.xpose.msra.mxu0 0
        %856 = vmatprep.subr.bf16.mxu0 0
        %857 = vmatpush1.bf16.xpose.msra.mxu0 0
        %858 = vmatprep.subr.bf16.mxu0 0
        %859 = vmatpush1.bf16.xpose.msra.mxu0 0
        %860 = vmatprep.subr.bf16.mxu0 0
        %861 = vmatpush1.bf16.xpose.msra.mxu0 0
        %862 = vmatprep.subr.bf16.mxu0 0
        %863 = vmatpush1.bf16.xpose.msra.mxu0 0
        %864 = vmatprep.subr.bf16.mxu0 0
        %865 = vmatpush1.bf16.xpose.msra.mxu0 0
        %866 = vmatprep.subr.bf16.mxu0 0
        %867 = vmatpush1.bf16.xpose.msra.mxu0 0
        %868 = vmatprep.subr.bf16.mxu0 0
        %869 = vmatpush1.bf16.xpose.msra.mxu0 0
        %870 = vmatprep.subr.bf16.mxu0 0
        %871 = vmatpush1.bf16.xpose.msra.mxu0 0
        %872 = vmatprep.subr.bf16.mxu0 0
        %873 = vmatpush1.bf16.xpose.msra.mxu0 0
        %874 = vmatprep.subr.bf16.mxu0 0
        %875 = vmatpush1.bf16.xpose.msra.mxu0 0
        %876 = vmatprep.mubr.bf16.mxu0 0
        %877 = vmatmul.mubr.bf16.gmra.mrb[0].mxu0 %v833
        %v878 = vpop.f32.mrb[0].mxu0
        %v879 = vadd.f32 0.0, %v878
        %v880 = vpop.f32.mrb[0].mxu0
        %v881 = vpop.f32.mrb[0].mxu0
        %v882 = vadd.f32 0.0, %v881
        %v883 = vpop.f32.mrb[0].mxu0
        %884 = vmatprep.mubr.bf16.mxu0 0
        %885 = vmatmul.mubr.bf16.gmra.mrb[0].mxu0 %v836
        %v886 = vpop.f32.mrb[0].mxu0
        %v887 = vadd.f32 0.0, %v886
        %v888 = vpop.f32.mrb[0].mxu0
        %v889 = vpop.f32.mrb[0].mxu0
        %v890 = vpop.f32.mrb[0].mxu0
        %891 = vdwg.mxu0
        %894 = vrot.lane.b32.xlu0 %v755, 120
        %v895 = vpop.permute.xlu0 %894
        %896 = vrot.lane.b32.xlu0 %v756, 120
        %v897 = vpop.permute.xlu0 %896
        %v899 = vsel %vm765, %v755, 0
        %v902 = vsel %vm765, %v756, 0
        %v905 = vsel %vm765, %v895, 0
        %v908 = vsel %vm765, %v897, 0
        %910 = vmatprep.subr.bf16.mxu0 0
        %911 = vmatpush1.bf16.xpose.msra.mxu0 %v905
        %912 = vmatprep.subr.bf16.mxu0 0
        %913 = vmatpush1.bf16.xpose.msra.mxu0 %v908
        %914 = vmatprep.subr.bf16.mxu0 0
        %915 = vmatpush1.bf16.xpose.msra.mxu0 0
        %916 = vmatprep.subr.bf16.mxu0 0
        %917 = vmatpush1.bf16.xpose.msra.mxu0 0
        %918 = vmatprep.subr.bf16.mxu0 0
        %919 = vmatpush1.bf16.xpose.msra.mxu0 0
        %920 = vmatprep.subr.bf16.mxu0 0
        %921 = vmatpush1.bf16.xpose.msra.mxu0 0
        %922 = vmatprep.subr.bf16.mxu0 0
        %923 = vmatpush1.bf16.xpose.msra.mxu0 0
        %924 = vmatprep.subr.bf16.mxu0 0
        %925 = vmatpush1.bf16.xpose.msra.mxu0 0
        %926 = vmatprep.subr.bf16.mxu0 0
        %927 = vmatpush1.bf16.xpose.msra.mxu0 0
        %928 = vmatprep.subr.bf16.mxu0 0
        %929 = vmatpush1.bf16.xpose.msra.mxu0 0
        %930 = vmatprep.subr.bf16.mxu0 0
        %931 = vmatpush1.bf16.xpose.msra.mxu0 0
        %932 = vmatprep.subr.bf16.mxu0 0
        %933 = vmatpush1.bf16.xpose.msra.mxu0 0
        %934 = vmatprep.subr.bf16.mxu0 0
        %935 = vmatpush1.bf16.xpose.msra.mxu0 0
        %936 = vmatprep.subr.bf16.mxu0 0
        %937 = vmatpush1.bf16.xpose.msra.mxu0 0
        %938 = vmatprep.subr.bf16.mxu0 0
        %939 = vmatpush1.bf16.xpose.msra.mxu0 0
        %940 = vmatprep.subr.bf16.mxu0 0
        %941 = vmatpush1.bf16.xpose.msra.mxu0 0
        %942 = vmatprep.mubr.bf16.mxu0 0
        %943 = vmatmul.mubr.bf16.gmra.mrb[0].mxu0 %v899
        %v944 = vpop.f32.mrb[0].mxu0
        %v945 = vadd.f32 0.0, %v944
        %v946 = vpop.f32.mrb[0].mxu0
        %v947 = vpop.f32.mrb[0].mxu0
        %v948 = vadd.f32 0.0, %v947
        %v949 = vpop.f32.mrb[0].mxu0
        %950 = vmatprep.mubr.bf16.mxu0 0
        %951 = vmatmul.mubr.bf16.gmra.mrb[0].mxu0 %v902
        %v952 = vpop.f32.mrb[0].mxu0
        %v953 = vadd.f32 0.0, %v952
        %v954 = vpop.f32.mrb[0].mxu0
        %v955 = vpop.f32.mrb[0].mxu0
        %v956 = vpop.f32.mrb[0].mxu0
        %957 = vdwg.mxu0
        %960 = vrot.lane.b32.xlu0 %v757, 120
        %v961 = vpop.permute.xlu0 %960
        %962 = vrot.lane.b32.xlu0 %v758, 120
        %v963 = vpop.permute.xlu0 %962
        %v965 = vsel %vm765, %v757, 0
        %v968 = vsel %vm765, %v758, 0
        %v971 = vsel %vm765, %v961, 0
        %v974 = vsel %vm765, %v963, 0
        %976 = vmatprep.subr.bf16.mxu0 0
        %977 = vmatpush1.bf16.xpose.msra.mxu0 %v971
        %978 = vmatprep.subr.bf16.mxu0 0
        %979 = vmatpush1.bf16.xpose.msra.mxu0 %v974
        %980 = vmatprep.subr.bf16.mxu0 0
        %981 = vmatpush1.bf16.xpose.msra.mxu0 0
        %982 = vmatprep.subr.bf16.mxu0 0
        %983 = vmatpush1.bf16.xpose.msra.mxu0 0
        %984 = vmatprep.subr.bf16.mxu0 0
        %985 = vmatpush1.bf16.xpose.msra.mxu0 0
        %986 = vmatprep.subr.bf16.mxu0 0
        %987 = vmatpush1.bf16.xpose.msra.mxu0 0
        %988 = vmatprep.subr.bf16.mxu0 0
        %989 = vmatpush1.bf16.xpose.msra.mxu0 0
        %990 = vmatprep.subr.bf16.mxu0 0
        %991 = vmatpush1.bf16.xpose.msra.mxu0 0
        %992 = vmatprep.subr.bf16.mxu0 0
        %993 = vmatpush1.bf16.xpose.msra.mxu0 0
        %994 = vmatprep.subr.bf16.mxu0 0
        %995 = vmatpush1.bf16.xpose.msra.mxu0 0
        %996 = vmatprep.subr.bf16.mxu0 0
        %997 = vmatpush1.bf16.xpose.msra.mxu0 0
        %998 = vmatprep.subr.bf16.mxu0 0
        %999 = vmatpush1.bf16.xpose.msra.mxu0 0
        %1000 = vmatprep.subr.bf16.mxu0 0
        %1001 = vmatpush1.bf16.xpose.msra.mxu0 0
        %1002 = vmatprep.subr.bf16.mxu0 0
        %1003 = vmatpush1.bf16.xpose.msra.mxu0 0
        %1004 = vmatprep.subr.bf16.mxu0 0
        %1005 = vmatpush1.bf16.xpose.msra.mxu0 0
        %1006 = vmatprep.subr.bf16.mxu0 0
        %1007 = vmatpush1.bf16.xpose.msra.mxu0 0
        %1008 = vmatprep.mubr.bf16.mxu0 0
        %1009 = vmatmul.mubr.bf16.gmra.mrb[0].mxu0 %v965
        %v1010 = vpop.f32.mrb[0].mxu0
        %v1011 = vadd.f32 0.0, %v1010
        %v1012 = vpop.f32.mrb[0].mxu0
        %v1013 = vpop.f32.mrb[0].mxu0
        %v1014 = vadd.f32 0.0, %v1013
        %v1015 = vpop.f32.mrb[0].mxu0
        %1016 = vmatprep.mubr.bf16.mxu0 0
        %1017 = vmatmul.mubr.bf16.gmra.mrb[0].mxu0 %v968
        %v1018 = vpop.f32.mrb[0].mxu0
        %v1019 = vadd.f32 0.0, %v1018
        %v1020 = vpop.f32.mrb[0].mxu0
        %v1021 = vpop.f32.mrb[0].mxu0
        %v1022 = vpop.f32.mrb[0].mxu0
        %1023 = vdwg.mxu0
        %v1024 = vmul.f32 %v813, 0.35355338
        %v1025 = vmul.f32 %v816, 0.35355338
        %v1026 = vmul.f32 %v821, 0.35355338
        %v1027 = vmul.f32 %v879, 0.35355338
        %v1028 = vmul.f32 %v882, 0.35355338
        %v1029 = vmul.f32 %v887, 0.35355338
        %v1030 = vmul.f32 %v945, 0.35355338
        %v1031 = vmul.f32 %v948, 0.35355338
        %v1032 = vmul.f32 %v953, 0.35355338
        %v1033 = vmul.f32 %v1011, 0.35355338
        %v1034 = vmul.f32 %v1014, 0.35355338
        %v1035 = vmul.f32 %v1019, 0.35355338
        %vm1036 = vcmask 138240
        %v1037 = vsel %vm1036, %v1024, -inf
        %1038 = vmax.xlane.f32.xlu0 %v1037
        %v1039 = vpop.xlane.xlu0 %1038
        %v1040 = vsel %vm1036, %v1025, -inf
        %1041 = vmax.xlane.f32.xlu0 %v1040
        %v1042 = vpop.xlane.xlu0 %1041
        %vm1043 = vcmask 131072
        %v1044 = vsel %vm1043, %v1026, -inf
        %1045 = vmax.xlane.f32.xlu0 %v1044
        %v1046 = vpop.xlane.xlu0 %1045
        %v1047 = vsel %vm1036, %v1027, -inf
        %1048 = vmax.xlane.f32.xlu0 %v1047
        %v1049 = vpop.xlane.xlu0 %1048
        %v1050 = vsel %vm1036, %v1028, -inf
        %1051 = vmax.xlane.f32.xlu0 %v1050
        %v1052 = vpop.xlane.xlu0 %1051
        %v1053 = vsel %vm1043, %v1029, -inf
        %1054 = vmax.xlane.f32.xlu0 %v1053
        %v1055 = vpop.xlane.xlu0 %1054
        %v1056 = vsel %vm1036, %v1030, -inf
        %1057 = vmax.xlane.f32.xlu0 %v1056
        %v1058 = vpop.xlane.xlu0 %1057
        %v1059 = vsel %vm1036, %v1031, -inf
        %1060 = vmax.xlane.f32.xlu0 %v1059
        %v1061 = vpop.xlane.xlu0 %1060
        %v1062 = vsel %vm1043, %v1032, -inf
        %1063 = vmax.xlane.f32.xlu0 %v1062
        %v1064 = vpop.xlane.xlu0 %1063
        %v1065 = vsel %vm1036, %v1033, -inf
        %1066 = vmax.xlane.f32.xlu0 %v1065
        %v1067 = vpop.xlane.xlu0 %1066
        %v1068 = vsel %vm1036, %v1034, -inf
        %1069 = vmax.xlane.f32.xlu0 %v1068
        %v1070 = vpop.xlane.xlu0 %1069
        %v1071 = vsel %vm1043, %v1035, -inf
        %1072 = vmax.xlane.f32.xlu0 %v1071
        %v1073 = vpop.xlane.xlu0 %1072
        %v1074 = vsub.f32 %v1024, %v1039
        %v1075 = vsub.f32 %v1025, %v1042
        %v1076 = vsub.f32 %v1026, %v1046
        %v1077 = vsub.f32 %v1027, %v1049
        %v1078 = vsub.f32 %v1028, %v1052
        %v1079 = vsub.f32 %v1029, %v1055
        %v1080 = vsub.f32 %v1030, %v1058
        %v1081 = vsub.f32 %v1031, %v1061
        %v1082 = vsub.f32 %v1032, %v1064
        %v1083 = vsub.f32 %v1033, %v1067
        %v1084 = vsub.f32 %v1034, %v1070
        %v1085 = vsub.f32 %v1035, %v1073
        %v1086 = vmul.f32 %v1074, 1.442695
        %v1087 = vpow.pop %v1086
        %v1088 = vmul.f32 %v1075, 1.442695
        %v1089 = vpow.pop %v1088
        %v1090 = vmul.f32 %v1076, 1.442695
        %v1091 = vpow.pop %v1090
        %v1092 = vmul.f32 %v1077, 1.442695
        %v1093 = vpow.pop %v1092
        %v1094 = vmul.f32 %v1078, 1.442695
        %v1095 = vpow.pop %v1094
        %v1096 = vmul.f32 %v1079, 1.442695
        %v1097 = vpow.pop %v1096
        %v1098 = vmul.f32 %v1080, 1.442695
        %v1099 = vpow.pop %v1098
        %v1100 = vmul.f32 %v1081, 1.442695
        %v1101 = vpow.pop %v1100
        %v1102 = vmul.f32 %v1082, 1.442695
        %v1103 = vpow.pop %v1102
        %v1104 = vmul.f32 %v1083, 1.442695
        %v1105 = vpow.pop %v1104
        %v1106 = vmul.f32 %v1084, 1.442695
        %v1107 = vpow.pop %v1106
        %v1108 = vmul.f32 %v1085, 1.442695
        %v1109 = vpow.pop %v1108
        %v1110 = vsel %vm1036, %v1087, 0.0
        %1111 = vadd.xlane.f32.xlu0 %v1110
        %v1112 = vpop.xlane.xlu0 %1111
        %v1113 = vsel %vm1036, %v1089, 0.0
        %1114 = vadd.xlane.f32.xlu0 %v1113
        %v1115 = vpop.xlane.xlu0 %1114
        %v1116 = vsel %vm1043, %v1091, 0.0
        %1117 = vadd.xlane.f32.xlu0 %v1116
        %v1118 = vpop.xlane.xlu0 %1117
        %v1119 = vsel %vm1036, %v1093, 0.0
        %1120 = vadd.xlane.f32.xlu0 %v1119
        %v1121 = vpop.xlane.xlu0 %1120
        %v1122 = vsel %vm1036, %v1095, 0.0
        %1123 = vadd.xlane.f32.xlu0 %v1122
        %v1124 = vpop.xlane.xlu0 %1123
        %v1125 = vsel %vm1043, %v1097, 0.0
        %1126 = vadd.xlane.f32.xlu0 %v1125
        %v1127 = vpop.xlane.xlu0 %1126
        %v1128 = vsel %vm1036, %v1099, 0.0
        %1129 = vadd.xlane.f32.xlu0 %v1128
        %v1130 = vpop.xlane.xlu0 %1129
        %v1131 = vsel %vm1036, %v1101, 0.0
        %1132 = vadd.xlane.f32.xlu0 %v1131
        %v1133 = vpop.xlane.xlu0 %1132
        %v1134 = vsel %vm1043, %v1103, 0.0
        %1135 = vadd.xlane.f32.xlu0 %v1134
        %v1136 = vpop.xlane.xlu0 %1135
        %v1137 = vsel %vm1036, %v1105, 0.0
        %1138 = vadd.xlane.f32.xlu0 %v1137
        %v1139 = vpop.xlane.xlu0 %1138
        %v1140 = vsel %vm1036, %v1107, 0.0
        %1141 = vadd.xlane.f32.xlu0 %v1140
        %v1142 = vpop.xlane.xlu0 %1141
        %v1143 = vsel %vm1043, %v1109, 0.0
        %1144 = vadd.xlane.f32.xlu0 %v1143
        %v1145 = vpop.xlane.xlu0 %1144
        %v1146 = vrcp.pop %v1112
        %v1147 = vrcp.pop %v1115
        %v1148 = vrcp.pop %v1118
        %v1149 = vrcp.pop %v1121
        %v1150 = vrcp.pop %v1124
        %v1151 = vrcp.pop %v1127
        %v1152 = vrcp.pop %v1130
        %v1153 = vrcp.pop %v1133
        %v1154 = vrcp.pop %v1136
        %v1155 = vrcp.pop %v1139
        %v1156 = vrcp.pop %v1142
        %v1157 = vrcp.pop %v1145
        %v1158 = vmul.f32 %v1087, %v1146
        %v1159 = vmul.f32 %v1089, %v1147
        %v1160 = vmul.f32 %v1091, %v1148
        %v1161 = vmul.f32 %v1093, %v1149
        %v1162 = vmul.f32 %v1095, %v1150
        %v1163 = vmul.f32 %v1097, %v1151
        %v1164 = vmul.f32 %v1099, %v1152
        %v1165 = vmul.f32 %v1101, %v1153
        %v1166 = vmul.f32 %v1103, %v1154
        %v1167 = vmul.f32 %v1105, %v1155
        %v1168 = vmul.f32 %v1107, %v1156
        %v1169 = vmul.f32 %v1109, %v1157
        %v1170 = vpack.c.bf16 %v1159, %v1158
        %v1171 = vpack.c.bf16 %v1160, %v1160
        %v1172 = vpack.c.bf16 %v1162, %v1161
        %v1173 = vpack.c.bf16 %v1163, %v1163
        %v1174 = vpack.c.bf16 %v1165, %v1164
        %v1175 = vpack.c.bf16 %v1166, %v1166
        %v1176 = vpack.c.bf16 %v1168, %v1167
        %v1177 = vpack.c.bf16 %v1169, %v1169
        %1178 = vrot.lane.b32.xlu0 %v751, 112
        %v1179 = vpop.permute.xlu0 %1178
        %1180 = vrot.lane.b32.xlu0 %v752, 112
        %v1181 = vpop.permute.xlu0 %1180
        %v1184 = vsel %vm1036, %v1170, 0
        %v1187 = vsel %vm1036, %v1171, 0
        %vm1189 = vcmask 1040384
        %v1190 = vsel 0, 4294967295, 65535
        %v1191 = vsel %vm1189, %v1190, 0
        %v1193 = vand.u32 %v1181, %v1191
        %1195 = vmatprep.subr.bf16.mxu0 0
        %1196 = vmatpush1.bf16.msra.mxu0 %v1179
        %1197 = vmatprep.subr.bf16.mxu0 0
        %1198 = vmatpush1.bf16.msra.mxu0 %v1193
        %1199 = vmatprep.subr.bf16.mxu0 0
        %1200 = vmatpush1.bf16.msra.mxu0 0
        %1201 = vmatprep.subr.bf16.mxu0 0
        %1202 = vmatpush1.bf16.msra.mxu0 0
        %1203 = vmatprep.subr.bf16.mxu0 0
        %1204 = vmatpush1.bf16.msra.mxu0 0
        %1205 = vmatprep.subr.bf16.mxu0 0
        %1206 = vmatpush1.bf16.msra.mxu0 0
        %1207 = vmatprep.subr.bf16.mxu0 0
        %1208 = vmatpush1.bf16.msra.mxu0 0
        %1209 = vmatprep.subr.bf16.mxu0 0
        %1210 = vmatpush1.bf16.msra.mxu0 0
        %1211 = vmatprep.subr.bf16.mxu0 0
        %1212 = vmatpush1.bf16.msra.mxu0 0
        %1213 = vmatprep.subr.bf16.mxu0 0
        %1214 = vmatpush1.bf16.msra.mxu0 0
        %1215 = vmatprep.subr.bf16.mxu0 0
        %1216 = vmatpush1.bf16.msra.mxu0 0
        %1217 = vmatprep.subr.bf16.mxu0 0
        %1218 = vmatpush1.bf16.msra.mxu0 0
        %1219 = vmatprep.subr.bf16.mxu0 0
        %1220 = vmatpush1.bf16.msra.mxu0 0
        %1221 = vmatprep.subr.bf16.mxu0 0
        %1222 = vmatpush1.bf16.msra.mxu0 0
        %1223 = vmatprep.subr.bf16.mxu0 0
        %1224 = vmatpush1.bf16.msra.mxu0 0
        %1225 = vmatprep.subr.bf16.mxu0 0
        %1226 = vmatpush1.bf16.msra.mxu0 0
        %1227 = vmatprep.mubr.bf16.mxu0 0
        %1228 = vmatmul.mubr.bf16.gmra.mrb[0].mxu0 %v1184
        %v1229 = vpop.f32.mrb[0].mxu0
        %v1230 = vadd.f32 0.0, %v1229
        %v1231 = vpop.f32.mrb[0].mxu0
        %v1232 = vpop.f32.mrb[0].mxu0
        %v1233 = vadd.f32 0.0, %v1232
        %v1234 = vpop.f32.mrb[0].mxu0
        %1235 = vmatprep.mubr.bf16.mxu0 0
        %1236 = vmatmul.mubr.bf16.gmra.mrb[0].mxu0 %v1187
        %v1237 = vpop.f32.mrb[0].mxu0
        %v1238 = vadd.f32 0.0, %v1237
        %v1239 = vpop.f32.mrb[0].mxu0
        %v1240 = vpop.f32.mrb[0].mxu0
        %v1241 = vpop.f32.mrb[0].mxu0
        %1242 = vdwg.mxu0
        %1243 = vrot.lane.b32.xlu0 %v753, 112
        %v1244 = vpop.permute.xlu0 %1243
        %1245 = vrot.lane.b32.xlu0 %v754, 112
        %v1246 = vpop.permute.xlu0 %1245
        %v1249 = vsel %vm1036, %v1172, 0
        %v1252 = vsel %vm1036, %v1173, 0
        %v1255 = vand.u32 %v1246, %v1191
        %1257 = vmatprep.subr.bf16.mxu0 0
        %1258 = vmatpush1.bf16.msra.mxu0 %v1244
        %1259 = vmatprep.subr.bf16.mxu0 0
        %1260 = vmatpush1.bf16.msra.mxu0 %v1255
        %1261 = vmatprep.subr.bf16.mxu0 0
        %1262 = vmatpush1.bf16.msra.mxu0 0
        %1263 = vmatprep.subr.bf16.mxu0 0
        %1264 = vmatpush1.bf16.msra.mxu0 0
        %1265 = vmatprep.subr.bf16.mxu0 0
        %1266 = vmatpush1.bf16.msra.mxu0 0
        %1267 = vmatprep.subr.bf16.mxu0 0
        %1268 = vmatpush1.bf16.msra.mxu0 0
        %1269 = vmatprep.subr.bf16.mxu0 0
        %1270 = vmatpush1.bf16.msra.mxu0 0
        %1271 = vmatprep.subr.bf16.mxu0 0
        %1272 = vmatpush1.bf16.msra.mxu0 0
        %1273 = vmatprep.subr.bf16.mxu0 0
        %1274 = vmatpush1.bf16.msra.mxu0 0
        %1275 = vmatprep.subr.bf16.mxu0 0
        %1276 = vmatpush1.bf16.msra.mxu0 0
        %1277 = vmatprep.subr.bf16.mxu0 0
        %1278 = vmatpush1.bf16.msra.mxu0 0
        %1279 = vmatprep.subr.bf16.mxu0 0
        %1280 = vmatpush1.bf16.msra.mxu0 0
        %1281 = vmatprep.subr.bf16.mxu0 0
        %1282 = vmatpush1.bf16.msra.mxu0 0
        %1283 = vmatprep.subr.bf16.mxu0 0
        %1284 = vmatpush1.bf16.msra.mxu0 0
        %1285 = vmatprep.subr.bf16.mxu0 0
        %1286 = vmatpush1.bf16.msra.mxu0 0
        %1287 = vmatprep.subr.bf16.mxu0 0
        %1288 = vmatpush1.bf16.msra.mxu0 0
        %1289 = vmatprep.mubr.bf16.mxu0 0
        %1290 = vmatmul.mubr.bf16.gmra.mrb[0].mxu0 %v1249
        %v1291 = vpop.f32.mrb[0].mxu0
        %v1292 = vadd.f32 0.0, %v1291
        %v1293 = vpop.f32.mrb[0].mxu0
        %v1294 = vpop.f32.mrb[0].mxu0
        %v1295 = vadd.f32 0.0, %v1294
        %v1296 = vpop.f32.mrb[0].mxu0
        %1297 = vmatprep.mubr.bf16.mxu0 0
        %1298 = vmatmul.mubr.bf16.gmra.mrb[0].mxu0 %v1252
        %v1299 = vpop.f32.mrb[0].mxu0
        %v1300 = vadd.f32 0.0, %v1299
        %v1301 = vpop.f32.mrb[0].mxu0
        %v1302 = vpop.f32.mrb[0].mxu0
        %v1303 = vpop.f32.mrb[0].mxu0
        %1304 = vdwg.mxu0
        %1305 = vrot.lane.b32.xlu0 %v755, 112
        %v1306 = vpop.permute.xlu0 %1305
        %1307 = vrot.lane.b32.xlu0 %v756, 112
        %v1308 = vpop.permute.xlu0 %1307
        %v1311 = vsel %vm1036, %v1174, 0
        %v1314 = vsel %vm1036, %v1175, 0
        %v1317 = vand.u32 %v1308, %v1191
        %1319 = vmatprep.subr.bf16.mxu0 0
        %1320 = vmatpush1.bf16.msra.mxu0 %v1306
        %1321 = vmatprep.subr.bf16.mxu0 0
        %1322 = vmatpush1.bf16.msra.mxu0 %v1317
        %1323 = vmatprep.subr.bf16.mxu0 0
        %1324 = vmatpush1.bf16.msra.mxu0 0
        %1325 = vmatprep.subr.bf16.mxu0 0
        %1326 = vmatpush1.bf16.msra.mxu0 0
        %1327 = vmatprep.subr.bf16.mxu0 0
        %1328 = vmatpush1.bf16.msra.mxu0 0
        %1329 = vmatprep.subr.bf16.mxu0 0
        %1330 = vmatpush1.bf16.msra.mxu0 0
        %1331 = vmatprep.subr.bf16.mxu0 0
        %1332 = vmatpush1.bf16.msra.mxu0 0
        %1333 = vmatprep.subr.bf16.mxu0 0
        %1334 = vmatpush1.bf16.msra.mxu0 0
        %1335 = vmatprep.subr.bf16.mxu0 0
        %1336 = vmatpush1.bf16.msra.mxu0 0
        %1337 = vmatprep.subr.bf16.mxu0 0
        %1338 = vmatpush1.bf16.msra.mxu0 0
        %1339 = vmatprep.subr.bf16.mxu0 0
        %1340 = vmatpush1.bf16.msra.mxu0 0
        %1341 = vmatprep.subr.bf16.mxu0 0
        %1342 = vmatpush1.bf16.msra.mxu0 0
        %1343 = vmatprep.subr.bf16.mxu0 0
        %1344 = vmatpush1.bf16.msra.mxu0 0
        %1345 = vmatprep.subr.bf16.mxu0 0
        %1346 = vmatpush1.bf16.msra.mxu0 0
        %1347 = vmatprep.subr.bf16.mxu0 0
        %1348 = vmatpush1.bf16.msra.mxu0 0
        %1349 = vmatprep.subr.bf16.mxu0 0
        %1350 = vmatpush1.bf16.msra.mxu0 0
        %1351 = vmatprep.mubr.bf16.mxu0 0
        %1352 = vmatmul.mubr.bf16.gmra.mrb[0].mxu0 %v1311
        %v1353 = vpop.f32.mrb[0].mxu0
        %v1354 = vadd.f32 0.0, %v1353
        %v1355 = vpop.f32.mrb[0].mxu0
        %v1356 = vpop.f32.mrb[0].mxu0
        %v1357 = vadd.f32 0.0, %v1356
        %v1358 = vpop.f32.mrb[0].mxu0
        %1359 = vmatprep.mubr.bf16.mxu0 0
        %1360 = vmatmul.mubr.bf16.gmra.mrb[0].mxu0 %v1314
        %v1361 = vpop.f32.mrb[0].mxu0
        %v1362 = vadd.f32 0.0, %v1361
        %v1363 = vpop.f32.mrb[0].mxu0
        %v1364 = vpop.f32.mrb[0].mxu0
        %v1365 = vpop.f32.mrb[0].mxu0
        %1366 = vdwg.mxu0
        %1367 = vrot.lane.b32.xlu0 %v757, 112
        %v1368 = vpop.permute.xlu0 %1367
        %1369 = vrot.lane.b32.xlu0 %v758, 112
        %v1370 = vpop.permute.xlu0 %1369
        %v1373 = vsel %vm1036, %v1176, 0
        %v1376 = vsel %vm1036, %v1177, 0
        %v1379 = vand.u32 %v1370, %v1191
        %1381 = vmatprep.subr.bf16.mxu0 0
        %1382 = vmatpush1.bf16.msra.mxu0 %v1368
        %1383 = vmatprep.subr.bf16.mxu0 0
        %1384 = vmatpush1.bf16.msra.mxu0 %v1379
        %1385 = vmatprep.subr.bf16.mxu0 0
        %1386 = vmatpush1.bf16.msra.mxu0 0
        %1387 = vmatprep.subr.bf16.mxu0 0
        %1388 = vmatpush1.bf16.msra.mxu0 0
        %1389 = vmatprep.subr.bf16.mxu0 0
        %1390 = vmatpush1.bf16.msra.mxu0 0
        %1391 = vmatprep.subr.bf16.mxu0 0
        %1392 = vmatpush1.bf16.msra.mxu0 0
        %1393 = vmatprep.subr.bf16.mxu0 0
        %1394 = vmatpush1.bf16.msra.mxu0 0
        %1395 = vmatprep.subr.bf16.mxu0 0
        %1396 = vmatpush1.bf16.msra.mxu0 0
        %1397 = vmatprep.subr.bf16.mxu0 0
        %1398 = vmatpush1.bf16.msra.mxu0 0
        %1399 = vmatprep.subr.bf16.mxu0 0
        %1400 = vmatpush1.bf16.msra.mxu0 0
        %1401 = vmatprep.subr.bf16.mxu0 0
        %1402 = vmatpush1.bf16.msra.mxu0 0
        %1403 = vmatprep.subr.bf16.mxu0 0
        %1404 = vmatpush1.bf16.msra.mxu0 0
        %1405 = vmatprep.subr.bf16.mxu0 0
        %1406 = vmatpush1.bf16.msra.mxu0 0
        %1407 = vmatprep.subr.bf16.mxu0 0
        %1408 = vmatpush1.bf16.msra.mxu0 0
        %1409 = vmatprep.subr.bf16.mxu0 0
        %1410 = vmatpush1.bf16.msra.mxu0 0
        %1411 = vmatprep.subr.bf16.mxu0 0
        %1412 = vmatpush1.bf16.msra.mxu0 0
        %1413 = vmatprep.mubr.bf16.mxu0 0
        %1414 = vmatmul.mubr.bf16.gmra.mrb[0].mxu0 %v1373
        %v1415 = vpop.f32.mrb[0].mxu0
        %v1416 = vadd.f32 0.0, %v1415
        %v1417 = vpop.f32.mrb[0].mxu0
        %v1418 = vpop.f32.mrb[0].mxu0
        %v1419 = vadd.f32 0.0, %v1418
        %v1420 = vpop.f32.mrb[0].mxu0
        %1421 = vmatprep.mubr.bf16.mxu0 0
        %1422 = vmatmul.mubr.bf16.gmra.mrb[0].mxu0 %v1376
        %v1423 = vpop.f32.mrb[0].mxu0
        %v1424 = vadd.f32 0.0, %v1423
        %v1425 = vpop.f32.mrb[0].mxu0
        %v1426 = vpop.f32.mrb[0].mxu0
        %v1427 = vpop.f32.mrb[0].mxu0
        %1428 = vdwg.mxu0
        %v1429 = vpack.c.bf16 %v1233, %v1230
        %v1430 = vpack.c.bf16 %v1238, %v1238
        %v1431 = vpack.c.bf16 %v1295, %v1292
        %v1432 = vpack.c.bf16 %v1300, %v1300
        %v1433 = vpack.c.bf16 %v1357, %v1354
        %v1434 = vpack.c.bf16 %v1362, %v1362
        %v1435 = vpack.c.bf16 %v1419, %v1416
        %v1436 = vpack.c.bf16 %v1424, %v1424
        %v1437 = vld [vmem:[%s4] sm:$0xf]
        %v1438 = vld [vmem:[%s4 + $0x4] sm:$0xf]
        %v1439 = vld [vmem:[%s4 + $0x8] sm:$0xf]
        %v1440 = vld [vmem:[%s4 + $0xc] sm:$0xf]
        %v1442 = vsel %vm765, %v1429, 0
        %v1445 = vsel %vm765, %v1430, 0
        %vm1447 = vcmask 1043456
        %v1449 = vsel %vm1447, %v1437, 0
        %1451 = vmatprep.subr.bf16.mxu0 0
        %1452 = vmatpush1.bf16.msra.mxu0 %v1449
        %1453 = vmatprep.subr.bf16.mxu0 0
        %1454 = vmatpush1.bf16.msra.mxu0 0
        %1455 = vmatprep.subr.bf16.mxu0 0
        %1456 = vmatpush1.bf16.msra.mxu0 0
        %1457 = vmatprep.subr.bf16.mxu0 0
        %1458 = vmatpush1.bf16.msra.mxu0 0
        %1459 = vmatprep.subr.bf16.mxu0 0
        %1460 = vmatpush1.bf16.msra.mxu0 0
        %1461 = vmatprep.subr.bf16.mxu0 0
        %1462 = vmatpush1.bf16.msra.mxu0 0
        %1463 = vmatprep.subr.bf16.mxu0 0
        %1464 = vmatpush1.bf16.msra.mxu0 0
        %1465 = vmatprep.subr.bf16.mxu0 0
        %1466 = vmatpush1.bf16.msra.mxu0 0
        %1467 = vmatprep.subr.bf16.mxu0 0
        %1468 = vmatpush1.bf16.msra.mxu0 0
        %1469 = vmatprep.subr.bf16.mxu0 0
        %1470 = vmatpush1.bf16.msra.mxu0 0
        %1471 = vmatprep.subr.bf16.mxu0 0
        %1472 = vmatpush1.bf16.msra.mxu0 0
        %1473 = vmatprep.subr.bf16.mxu0 0
        %1474 = vmatpush1.bf16.msra.mxu0 0
        %1475 = vmatprep.subr.bf16.mxu0 0
        %1476 = vmatpush1.bf16.msra.mxu0 0
        %1477 = vmatprep.subr.bf16.mxu0 0
        %1478 = vmatpush1.bf16.msra.mxu0 0
        %1479 = vmatprep.subr.bf16.mxu0 0
        %1480 = vmatpush1.bf16.msra.mxu0 0
        %1481 = vmatprep.subr.bf16.mxu0 0
        %1482 = vmatpush1.bf16.msra.mxu0 0
        %1483 = vmatprep.mubr.bf16.mxu0 0
        %1484 = vmatmul.mubr.bf16.gmra.mrb[0].mxu0 %v1442
        %v1485 = vpop.f32.mrb[0].mxu0
        %v1486 = vadd.f32 0.0, %v1485
        %v1487 = vpop.f32.mrb[0].mxu0
        %v1488 = vpop.f32.mrb[0].mxu0
        %v1489 = vadd.f32 0.0, %v1488
        %v1490 = vpop.f32.mrb[0].mxu0
        %1491 = vmatprep.mubr.bf16.mxu0 0
        %1492 = vmatmul.mubr.bf16.gmra.mrb[0].mxu0 %v1445
        %v1493 = vpop.f32.mrb[0].mxu0
        %v1494 = vadd.f32 0.0, %v1493
        %v1495 = vpop.f32.mrb[0].mxu0
        %v1496 = vpop.f32.mrb[0].mxu0
        %v1497 = vpop.f32.mrb[0].mxu0
        %1498 = vdwg.mxu0
        %v1500 = vsel %vm765, %v1431, 0
        %v1503 = vsel %vm765, %v1432, 0
        %v1506 = vsel %vm1447, %v1438, 0
        %1508 = vmatprep.subr.bf16.mxu0 0
        %1509 = vmatpush1.bf16.msra.mxu0 %v1506
        %1510 = vmatprep.subr.bf16.mxu0 0
        %1511 = vmatpush1.bf16.msra.mxu0 0
        %1512 = vmatprep.subr.bf16.mxu0 0
        %1513 = vmatpush1.bf16.msra.mxu0 0
        %1514 = vmatprep.subr.bf16.mxu0 0
        %1515 = vmatpush1.bf16.msra.mxu0 0
        %1516 = vmatprep.subr.bf16.mxu0 0
        %1517 = vmatpush1.bf16.msra.mxu0 0
        %1518 = vmatprep.subr.bf16.mxu0 0
        %1519 = vmatpush1.bf16.msra.mxu0 0
        %1520 = vmatprep.subr.bf16.mxu0 0
        %1521 = vmatpush1.bf16.msra.mxu0 0
        %1522 = vmatprep.subr.bf16.mxu0 0
        %1523 = vmatpush1.bf16.msra.mxu0 0
        %1524 = vmatprep.subr.bf16.mxu0 0
        %1525 = vmatpush1.bf16.msra.mxu0 0
        %1526 = vmatprep.subr.bf16.mxu0 0
        %1527 = vmatpush1.bf16.msra.mxu0 0
        %1528 = vmatprep.subr.bf16.mxu0 0
        %1529 = vmatpush1.bf16.msra.mxu0 0
        %1530 = vmatprep.subr.bf16.mxu0 0
        %1531 = vmatpush1.bf16.msra.mxu0 0
        %1532 = vmatprep.subr.bf16.mxu0 0
        %1533 = vmatpush1.bf16.msra.mxu0 0
        %1534 = vmatprep.subr.bf16.mxu0 0
        %1535 = vmatpush1.bf16.msra.mxu0 0
        %1536 = vmatprep.subr.bf16.mxu0 0
        %1537 = vmatpush1.bf16.msra.mxu0 0
        %1538 = vmatprep.subr.bf16.mxu0 0
        %1539 = vmatpush1.bf16.msra.mxu0 0
        %1540 = vmatprep.mubr.bf16.mxu0 0
        %1541 = vmatmul.mubr.bf16.gmra.mrb[0].mxu0 %v1500
        %v1542 = vpop.f32.mrb[0].mxu0
        %v1543 = vadd.f32 0.0, %v1542
        %v1544 = vpop.f32.mrb[0].mxu0
        %v1545 = vpop.f32.mrb[0].mxu0
        %v1546 = vadd.f32 0.0, %v1545
        %v1547 = vpop.f32.mrb[0].mxu0
        %1548 = vmatprep.mubr.bf16.mxu0 0
        %1549 = vmatmul.mubr.bf16.gmra.mrb[0].mxu0 %v1503
        %v1550 = vpop.f32.mrb[0].mxu0
        %v1551 = vadd.f32 0.0, %v1550
        %v1552 = vpop.f32.mrb[0].mxu0
        %v1553 = vpop.f32.mrb[0].mxu0
        %v1554 = vpop.f32.mrb[0].mxu0
        %1555 = vdwg.mxu0
        %v1557 = vsel %vm765, %v1433, 0
        %v1560 = vsel %vm765, %v1434, 0
        %v1563 = vsel %vm1447, %v1439, 0
        %1565 = vmatprep.subr.bf16.mxu0 0
        %1566 = vmatpush1.bf16.msra.mxu0 %v1563
        %1567 = vmatprep.subr.bf16.mxu0 0
        %1568 = vmatpush1.bf16.msra.mxu0 0
        %1569 = vmatprep.subr.bf16.mxu0 0
        %1570 = vmatpush1.bf16.msra.mxu0 0
        %1571 = vmatprep.subr.bf16.mxu0 0
        %1572 = vmatpush1.bf16.msra.mxu0 0
        %1573 = vmatprep.subr.bf16.mxu0 0
        %1574 = vmatpush1.bf16.msra.mxu0 0
        %1575 = vmatprep.subr.bf16.mxu0 0
        %1576 = vmatpush1.bf16.msra.mxu0 0
        %1577 = vmatprep.subr.bf16.mxu0 0
        %1578 = vmatpush1.bf16.msra.mxu0 0
        %1579 = vmatprep.subr.bf16.mxu0 0
        %1580 = vmatpush1.bf16.msra.mxu0 0
        %1581 = vmatprep.subr.bf16.mxu0 0
        %1582 = vmatpush1.bf16.msra.mxu0 0
        %1583 = vmatprep.subr.bf16.mxu0 0
        %1584 = vmatpush1.bf16.msra.mxu0 0
        %1585 = vmatprep.subr.bf16.mxu0 0
        %1586 = vmatpush1.bf16.msra.mxu0 0
        %1587 = vmatprep.subr.bf16.mxu0 0
        %1588 = vmatpush1.bf16.msra.mxu0 0
        %1589 = vmatprep.subr.bf16.mxu0 0
        %1590 = vmatpush1.bf16.msra.mxu0 0
        %1591 = vmatprep.subr.bf16.mxu0 0
        %1592 = vmatpush1.bf16.msra.mxu0 0
        %1593 = vmatprep.subr.bf16.mxu0 0
        %1594 = vmatpush1.bf16.msra.mxu0 0
        %1595 = vmatprep.subr.bf16.mxu0 0
        %1596 = vmatpush1.bf16.msra.mxu0 0
        %1597 = vmatprep.mubr.bf16.mxu0 0
        %1598 = vmatmul.mubr.bf16.gmra.mrb[0].mxu0 %v1557
        %v1599 = vpop.f32.mrb[0].mxu0
        %v1600 = vadd.f32 0.0, %v1599
        %v1601 = vpop.f32.mrb[0].mxu0
        %v1602 = vpop.f32.mrb[0].mxu0
        %v1603 = vadd.f32 0.0, %v1602
        %v1604 = vpop.f32.mrb[0].mxu0
        %1605 = vmatprep.mubr.bf16.mxu0 0
        %1606 = vmatmul.mubr.bf16.gmra.mrb[0].mxu0 %v1560
        %v1607 = vpop.f32.mrb[0].mxu0
        %v1608 = vadd.f32 0.0, %v1607
        %v1609 = vpop.f32.mrb[0].mxu0
        %v1610 = vpop.f32.mrb[0].mxu0
        %v1611 = vpop.f32.mrb[0].mxu0
        %1612 = vdwg.mxu0
        %v1614 = vsel %vm765, %v1435, 0
        %v1617 = vsel %vm765, %v1436, 0
        %v1620 = vsel %vm1447, %v1440, 0
        %1622 = vmatprep.subr.bf16.mxu0 0
        %1623 = vmatpush1.bf16.msra.mxu0 %v1620
        %1624 = vmatprep.subr.bf16.mxu0 0
        %1625 = vmatpush1.bf16.msra.mxu0 0
        %1626 = vmatprep.subr.bf16.mxu0 0
        %1627 = vmatpush1.bf16.msra.mxu0 0
        %1628 = vmatprep.subr.bf16.mxu0 0
        %1629 = vmatpush1.bf16.msra.mxu0 0
        %1630 = vmatprep.subr.bf16.mxu0 0
        %1631 = vmatpush1.bf16.msra.mxu0 0
        %1632 = vmatprep.subr.bf16.mxu0 0
        %1633 = vmatpush1.bf16.msra.mxu0 0
        %1634 = vmatprep.subr.bf16.mxu0 0
        %1635 = vmatpush1.bf16.msra.mxu0 0
        %1636 = vmatprep.subr.bf16.mxu0 0
        %1637 = vmatpush1.bf16.msra.mxu0 0
        %1638 = vmatprep.subr.bf16.mxu0 0
        %1639 = vmatpush1.bf16.msra.mxu0 0
        %1640 = vmatprep.subr.bf16.mxu0 0
        %1641 = vmatpush1.bf16.msra.mxu0 0
        %1642 = vmatprep.subr.bf16.mxu0 0
        %1643 = vmatpush1.bf16.msra.mxu0 0
        %1644 = vmatprep.subr.bf16.mxu0 0
        %1645 = vmatpush1.bf16.msra.mxu0 0
        %1646 = vmatprep.subr.bf16.mxu0 0
        %1647 = vmatpush1.bf16.msra.mxu0 0
        %1648 = vmatprep.subr.bf16.mxu0 0
        %1649 = vmatpush1.bf16.msra.mxu0 0
        %1650 = vmatprep.subr.bf16.mxu0 0
        %1651 = vmatpush1.bf16.msra.mxu0 0
        %1652 = vmatprep.subr.bf16.mxu0 0
        %1653 = vmatpush1.bf16.msra.mxu0 0
        %1654 = vmatprep.mubr.bf16.mxu0 0
        %1655 = vmatmul.mubr.bf16.gmra.mrb[0].mxu0 %v1614
        %v1656 = vpop.f32.mrb[0].mxu0
        %v1657 = vadd.f32 0.0, %v1656
        %v1658 = vpop.f32.mrb[0].mxu0
        %v1659 = vpop.f32.mrb[0].mxu0
        %v1660 = vadd.f32 0.0, %v1659
        %v1661 = vpop.f32.mrb[0].mxu0
        %1662 = vmatprep.mubr.bf16.mxu0 0
        %1663 = vmatmul.mubr.bf16.gmra.mrb[0].mxu0 %v1617
        %v1664 = vpop.f32.mrb[0].mxu0
        %v1665 = vadd.f32 0.0, %v1664
        %v1666 = vpop.f32.mrb[0].mxu0
        %v1667 = vpop.f32.mrb[0].mxu0
        %v1668 = vpop.f32.mrb[0].mxu0
        %1669 = vdwg.mxu0
        %v1670 = vsel %vm431, %v1486, 0.0
        %v1671 = vsel %vm431, %v1543, 0.0
        %v1672 = vadd.f32 %v1670, %v1671
        %v1673 = vsel %vm431, %v1600, 0.0
        %v1674 = vadd.f32 %v1672, %v1673
        %v1675 = vsel %vm431, %v1657, 0.0
        %v1676 = vadd.f32 %v1674, %v1675
        %v1677 = vsel %vm431, %v1489, 0.0
        %v1678 = vsel %vm431, %v1546, 0.0
        %v1679 = vadd.f32 %v1677, %v1678
        %v1680 = vsel %vm431, %v1603, 0.0
        %v1681 = vadd.f32 %v1679, %v1680
        %v1682 = vsel %vm431, %v1660, 0.0
        %v1683 = vadd.f32 %v1681, %v1682
        %v1684 = vsel %vm438, %v1494, 0.0
        %v1685 = vsel %vm438, %v1551, 0.0
        %v1686 = vadd.f32 %v1684, %v1685
        %v1687 = vsel %vm438, %v1608, 0.0
        %v1688 = vadd.f32 %v1686, %v1687
        %v1689 = vsel %vm438, %v1665, 0.0
        %v1690 = vadd.f32 %v1688, %v1689
        %v1691 = vadd.f32 %v411, %v1676
        %v1692 = vadd.f32 %v414, %v1683
        %v1693 = vadd.f32 %v419, %v1690
        %v1694 = vlaneseq
        %v1695 = vshrl.u32 %v1694, 7
        %v1696 = vsub.s32 0, %v1695
        %v1697 = vrot.slane %v426, %v1696
        %v1698 = vadd.f32 %v1691, %v1697
        %v1699 = vadd.f32 %v1692, %v1697
        %v1700 = vadd.f32 %v1693, %v1697
        %v1701 = vsel %vm431, %v1698, 0.0
        %1702 = vadd.xlane.f32.xlu0 %v1701
        %v1703 = vpop.xlane.xlu0 %1702
        %v1704 = vsel %vm431, %v1699, 0.0
        %1705 = vadd.xlane.f32.xlu0 %v1704
        %v1706 = vpop.xlane.xlu0 %1705
        %v1707 = vsel %vm438, %v1700, 0.0
        %1708 = vadd.xlane.f32.xlu0 %v1707
        %v1709 = vpop.xlane.xlu0 %1708
        %v1710 = vmul.f32 %v1703, %v442
        %v1711 = vmul.f32 %v1706, %v442
        %v1712 = vmul.f32 %v1709, %v442
        %v1713 = vsub.f32 %v1698, %v1710
        %v1714 = vsub.f32 %v1699, %v1711
        %v1715 = vsub.f32 %v1700, %v1712
        %v1716 = vmul.f32 %v1713, %v1713
        %v1717 = vmul.f32 %v1714, %v1714
        %v1718 = vmul.f32 %v1715, %v1715
        %v1719 = vsel %vm431, %v1716, 0.0
        %1720 = vadd.xlane.f32.xlu0 %v1719
        %v1721 = vpop.xlane.xlu0 %1720
        %v1722 = vsel %vm431, %v1717, 0.0
        %1723 = vadd.xlane.f32.xlu0 %v1722
        %v1724 = vpop.xlane.xlu0 %1723
        %v1725 = vsel %vm438, %v1718, 0.0
        %1726 = vadd.xlane.f32.xlu0 %v1725
        %v1727 = vpop.xlane.xlu0 %1726
        %v1728 = vmul.f32 %v1721, %v442
        %v1729 = vmul.f32 %v1724, %v442
        %v1730 = vmul.f32 %v1727, %v442
        %v1731 = vadd.f32 %v1728, 1e-05
        %v1732 = vadd.f32 %v1729, 1e-05
        %v1733 = vadd.f32 %v1730, 1e-05
        %v1734 = vrsqrt.pop %v1731
        %v1735 = vrsqrt.pop %v1732
        %v1736 = vrsqrt.pop %v1733
        %v1737 = vmul.f32 %v1713, %v1734
        %v1738 = vmul.f32 %v1714, %v1735
        %v1739 = vmul.f32 %v1715, %v1736
        %v1740 = vlaneseq
        %v1741 = vshrl.u32 %v1740, 7
        %v1742 = vsub.s32 0, %v1741
        %v1743 = vrot.slane %v427, %v1742
        %v1744 = vmul.f32 %v1737, %v1743
        %v1745 = vmul.f32 %v1738, %v1743
        %v1746 = vmul.f32 %v1739, %v1743
        %v1747 = vlaneseq
        %v1748 = vshrl.u32 %v1747, 7
        %v1749 = vsub.s32 0, %v1748
        %v1750 = vrot.slane %v428, %v1749
        %v1751 = vadd.f32 %v1744, %v1750
        %v1752 = vadd.f32 %v1745, %v1750
        %v1753 = vadd.f32 %v1746, %v1750
        %v1754 = vpack.c.bf16 %v1752, %v1751
        %v1755 = vpack.c.bf16 %v1753, %v1753
        %v1756 = vld [vmem:[%s5] sm:$0xf]
        %v1757 = vld [vmem:[%s5 + $0x4] sm:$0xf]
        %v1758 = vld [vmem:[%s5 + $0x8] sm:$0xf]
        %v1759 = vld [vmem:[%s5 + $0xc] sm:$0xf]
        %v1760 = vlaneseq
        %v1761 = vshrl.u32 %v1760, 7
        %v1762 = vsub.s32 0, %v1761
        %v1763 = vrot.slane %v429, %v1762
        %v1768 = vunpack.c.l.b16 %v1756
        %v1769 = vunpack.c.l.b16 %v1757
        %v1770 = vunpack.c.l.b16 %v1758
        %v1771 = vunpack.c.l.b16 %v1759
        %v1772 = vpack.c.b16 %v1769, %v1768
        %v1773 = vpack.c.b16 %v1771, %v1770
        %v1777 = vsel %vm431, %v1754, 0
        %v1780 = vsel %vm431, %v1755, 0
        %1782 = vmatprep.subr.bf16.mxu0 0
        %1783 = vmatpush1.bf16.msra.mxu0 %v1772
        %1784 = vmatprep.subr.bf16.mxu0 0
        %1785 = vmatpush1.bf16.msra.mxu0 %v1773
        %1786 = vmatprep.subr.bf16.mxu0 0
        %1787 = vmatpush1.bf16.msra.mxu0 0
        %1788 = vmatprep.subr.bf16.mxu0 0
        %1789 = vmatpush1.bf16.msra.mxu0 0
        %1790 = vmatprep.subr.bf16.mxu0 0
        %1791 = vmatpush1.bf16.msra.mxu0 0
        %1792 = vmatprep.subr.bf16.mxu0 0
        %1793 = vmatpush1.bf16.msra.mxu0 0
        %1794 = vmatprep.subr.bf16.mxu0 0
        %1795 = vmatpush1.bf16.msra.mxu0 0
        %1796 = vmatprep.subr.bf16.mxu0 0
        %1797 = vmatpush1.bf16.msra.mxu0 0
        %1798 = vmatprep.subr.bf16.mxu0 0
        %1799 = vmatpush1.bf16.msra.mxu0 0
        %1800 = vmatprep.subr.bf16.mxu0 0
        %1801 = vmatpush1.bf16.msra.mxu0 0
        %1802 = vmatprep.subr.bf16.mxu0 0
        %1803 = vmatpush1.bf16.msra.mxu0 0
        %1804 = vmatprep.subr.bf16.mxu0 0
        %1805 = vmatpush1.bf16.msra.mxu0 0
        %1806 = vmatprep.subr.bf16.mxu0 0
        %1807 = vmatpush1.bf16.msra.mxu0 0
        %1808 = vmatprep.subr.bf16.mxu0 0
        %1809 = vmatpush1.bf16.msra.mxu0 0
        %1810 = vmatprep.subr.bf16.mxu0 0
        %1811 = vmatpush1.bf16.msra.mxu0 0
        %1812 = vmatprep.subr.bf16.mxu0 0
        %1813 = vmatpush1.bf16.msra.mxu0 0
        %1814 = vmatprep.mubr.bf16.mxu0 0
        %1815 = vmatmul.mubr.bf16.gmra.mrb[0].mxu0 %v1777
        %v1816 = vpop.f32.mrb[0].mxu0
        %v1817 = vadd.f32 %v1763, %v1816
        %v1818 = vpop.f32.mrb[0].mxu0
        %v1819 = vpop.f32.mrb[0].mxu0
        %v1820 = vadd.f32 %v1763, %v1819
        %v1821 = vpop.f32.mrb[0].mxu0
        %1822 = vmatprep.mubr.bf16.mxu0 0
        %1823 = vmatmul.mubr.bf16.gmra.mrb[0].mxu0 %v1780
        %v1824 = vpop.f32.mrb[0].mxu0
        %v1825 = vadd.f32 %v1763, %v1824
        %v1826 = vpop.f32.mrb[0].mxu0
        %v1827 = vpop.f32.mrb[0].mxu0
        %v1828 = vpop.f32.mrb[0].mxu0
        %1829 = vdwg.mxu0
        %v1830 = vmul.f32 %v1817, 0.5
        %v1831 = vmul.f32 %v1820, 0.5
        %v1832 = vmul.f32 %v1825, 0.5
        %v1833 = vmul.f32 %v1817, 0.70710677
        %v1834 = vmul.f32 %v1820, 0.70710677
        %v1835 = vmul.f32 %v1825, 0.70710677
        %v1836 = vand.u32 2147483647, %v1833
        %v1837 = vand.u32 2147483647, %v1834
        %v1838 = vand.u32 2147483647, %v1835
        %v1839 = vmul.f32 %v1836, 0.3275911
        %v1840 = vmul.f32 %v1837, 0.3275911
        %v1841 = vmul.f32 %v1838, 0.3275911
        %v1842 = vadd.f32 %v1839, 1.0
        %v1843 = vadd.f32 %v1840, 1.0
        %v1844 = vadd.f32 %v1841, 1.0
        %v1845 = vrcp.pop %v1842
        %v1846 = vrcp.pop %v1843
        %v1847 = vrcp.pop %v1844
        %v1848 = vmul.f32 %v1845, 1.0614054
        %v1849 = vmul.f32 %v1846, 1.0614054
        %v1850 = vmul.f32 %v1847, 1.0614054
        %v1851 = vadd.f32 %v1848, -1.4531521
        %v1852 = vadd.f32 %v1849, -1.4531521
        %v1853 = vadd.f32 %v1850, -1.4531521
        %v1854 = vmul.f32 %v1851, %v1845
        %v1855 = vmul.f32 %v1852, %v1846
        %v1856 = vmul.f32 %v1853, %v1847
        %v1857 = vadd.f32 %v1854, 1.4214138
        %v1858 = vadd.f32 %v1855, 1.4214138
        %v1859 = vadd.f32 %v1856, 1.4214138
        %v1860 = vmul.f32 %v1857, %v1845
        %v1861 = vmul.f32 %v1858, %v1846
        %v1862 = vmul.f32 %v1859, %v1847
        %v1863 = vadd.f32 %v1860, -0.28449672
        %v1864 = vadd.f32 %v1861, -0.28449672
        %v1865 = vadd.f32 %v1862, -0.28449672
        %v1866 = vmul.f32 %v1863, %v1845
        %v1867 = vmul.f32 %v1864, %v1846
        %v1868 = vmul.f32 %v1865, %v1847
        %v1869 = vadd.f32 %v1866, 0.2548296
        %v1870 = vadd.f32 %v1867, 0.2548296
        %v1871 = vadd.f32 %v1868, 0.2548296
        %v1872 = vmul.f32 %v1869, %v1845
        %v1873 = vmul.f32 %v1870, %v1846
        %v1874 = vmul.f32 %v1871, %v1847
        %v1875 = vsub.f32 0.0, %v1836
        %v1876 = vsub.f32 0.0, %v1837
        %v1877 = vsub.f32 0.0, %v1838
        %v1878 = vmul.f32 %v1875, %v1836
        %v1879 = vmul.f32 %v1876, %v1837
        %v1880 = vmul.f32 %v1877, %v1838
        %v1881 = vmul.f32 %v1878, 1.442695
        %v1882 = vpow.pop %v1881
        %v1883 = vmul.f32 %v1879, 1.442695
        %v1884 = vpow.pop %v1883
        %v1885 = vmul.f32 %v1880, 1.442695
        %v1886 = vpow.pop %v1885
        %v1887 = vmul.f32 %v1872, %v1882
        %v1888 = vmul.f32 %v1873, %v1884
        %v1889 = vmul.f32 %v1874, %v1886
        %v1890 = vsub.f32 1.0, %v1887
        %v1891 = vsub.f32 1.0, %v1888
        %v1892 = vsub.f32 1.0, %v1889
        %vm1893 = vcmp.ge.f32.partialorder %v1833, 0.0
        %vm1894 = vcmp.ge.f32.partialorder %v1834, 0.0
        %vm1895 = vcmp.ge.f32.partialorder %v1835, 0.0
        %v1896 = vsub.f32 0.0, %v1890
        %v1897 = vsub.f32 0.0, %v1891
        %v1898 = vsub.f32 0.0, %v1892
        %v1899 = vsel %vm1893, %v1890, %v1896
        %v1900 = vsel %vm1894, %v1891, %v1897
        %v1901 = vsel %vm1895, %v1892, %v1898
        %v1902 = vadd.f32 %v1899, 1.0
        %v1903 = vadd.f32 %v1900, 1.0
        %v1904 = vadd.f32 %v1901, 1.0
        %v1905 = vmul.f32 %v1830, %v1902
        %v1906 = vmul.f32 %v1831, %v1903
        %v1907 = vmul.f32 %v1832, %v1904
        %v1908 = vpack.c.bf16 %v1906, %v1905
        %v1909 = vpack.c.bf16 %v1907, %v1907
        %v1910 = vld [vmem:[%s6] sm:$0xf]
        %v1911 = vld [vmem:[%s6 + $0x4] sm:$0xf]
        %v1912 = vld [vmem:[%s6 + $0x8] sm:$0xf]
        %v1913 = vld [vmem:[%s6 + $0xc] sm:$0xf]
        %v1914 = vld [vmem:[%s6 + $0x10] sm:$0xf]
        %v1915 = vld [vmem:[%s6 + $0x14] sm:$0xf]
        %v1916 = vld [vmem:[%s6 + $0x18] sm:$0xf]
        %v1917 = vld [vmem:[%s6 + $0x1c] sm:$0xf]
        %v1918 = vld [vmem:[%s6 + $0x20] sm:$0xf]
        %v1919 = vld [vmem:[%s6 + $0x24] sm:$0xf]
        %v1920 = vld [vmem:[%s6 + $0x28] sm:$0xf]
        %v1921 = vld [vmem:[%s6 + $0x2c] sm:$0xf]
        %v1922 = vld [vmem:[%s6 + $0x30] sm:$0xf]
        %v1923 = vld [vmem:[%s6 + $0x34] sm:$0xf]
        %v1924 = vld [vmem:[%s6 + $0x38] sm:$0xf]
        %v1925 = vld [vmem:[%s6 + $0x3c] sm:$0xf]
        %v1926 = vlaneseq
        %v1927 = vshrl.u32 %v1926, 7
        %v1928 = vsub.s32 0, %v1927
        %v1929 = vrot.slane %v430, %v1928
        %v1946 = vunpack.c.l.b16 %v1910
        %v1947 = vunpack.c.l.b16 %v1911
        %v1948 = vunpack.c.l.b16 %v1912
        %v1949 = vunpack.c.l.b16 %v1913
        %v1950 = vunpack.c.l.b16 %v1914
        %v1951 = vunpack.c.l.b16 %v1915
        %v1952 = vunpack.c.l.b16 %v1916
        %v1953 = vunpack.c.l.b16 %v1917
        %v1954 = vunpack.c.l.b16 %v1918
        %v1955 = vunpack.c.l.b16 %v1919
        %v1956 = vunpack.c.l.b16 %v1920
        %v1957 = vunpack.c.l.b16 %v1921
        %v1958 = vunpack.c.l.b16 %v1922
        %v1959 = vunpack.c.l.b16 %v1923
        %v1960 = vunpack.c.l.b16 %v1924
        %v1961 = vunpack.c.l.b16 %v1925
        %v1962 = vpack.c.b16 %v1947, %v1946
        %v1963 = vpack.c.b16 %v1949, %v1948
        %v1964 = vpack.c.b16 %v1951, %v1950
        %v1965 = vpack.c.b16 %v1953, %v1952
        %v1966 = vpack.c.b16 %v1955, %v1954
        %v1967 = vpack.c.b16 %v1957, %v1956
        %v1968 = vpack.c.b16 %v1959, %v1958
        %v1969 = vpack.c.b16 %v1961, %v1960
        %1978 = vmatprep.subr.bf16.mxu0 0
        %1979 = vmatpush1.bf16.msra.mxu0 %v1962
        %1980 = vmatprep.subr.bf16.mxu0 0
        %1981 = vmatpush1.bf16.msra.mxu0 %v1963
        %1982 = vmatprep.subr.bf16.mxu0 0
        %1983 = vmatpush1.bf16.msra.mxu0 %v1964
        %1984 = vmatprep.subr.bf16.mxu0 0
        %1985 = vmatpush1.bf16.msra.mxu0 %v1965
        %1986 = vmatprep.subr.bf16.mxu0 0
        %1987 = vmatpush1.bf16.msra.mxu0 %v1966
        %1988 = vmatprep.subr.bf16.mxu0 0
        %1989 = vmatpush1.bf16.msra.mxu0 %v1967
        %1990 = vmatprep.subr.bf16.mxu0 0
        %1991 = vmatpush1.bf16.msra.mxu0 %v1968
        %1992 = vmatprep.subr.bf16.mxu0 0
        %1993 = vmatpush1.bf16.msra.mxu0 %v1969
        %1994 = vmatprep.subr.bf16.mxu0 0
        %1995 = vmatpush1.bf16.msra.mxu0 0
        %1996 = vmatprep.subr.bf16.mxu0 0
        %1997 = vmatpush1.bf16.msra.mxu0 0
        %1998 = vmatprep.subr.bf16.mxu0 0
        %1999 = vmatpush1.bf16.msra.mxu0 0
        %2000 = vmatprep.subr.bf16.mxu0 0
        %2001 = vmatpush1.bf16.msra.mxu0 0
        %2002 = vmatprep.subr.bf16.mxu0 0
        %2003 = vmatpush1.bf16.msra.mxu0 0
        %2004 = vmatprep.subr.bf16.mxu0 0
        %2005 = vmatpush1.bf16.msra.mxu0 0
        %2006 = vmatprep.subr.bf16.mxu0 0
        %2007 = vmatpush1.bf16.msra.mxu0 0
        %2008 = vmatprep.subr.bf16.mxu0 0
        %2009 = vmatpush1.bf16.msra.mxu0 0
        %2010 = vmatprep.mubr.bf16.mxu0 0
        %2011 = vmatmul.mubr.bf16.gmra.mrb[0].mxu0 %v1908
        %v2012 = vpop.f32.mrb[0].mxu0
        %v2013 = vadd.f32 %v1929, %v2012
        %v2014 = vpop.f32.mrb[0].mxu0
        %v2015 = vpop.f32.mrb[0].mxu0
        %v2016 = vadd.f32 %v1929, %v2015
        %v2017 = vpop.f32.mrb[0].mxu0
        %2018 = vmatprep.mubr.bf16.mxu0 0
        %2019 = vmatmul.mubr.bf16.gmra.mrb[0].mxu0 %v1909
        %v2020 = vpop.f32.mrb[0].mxu0
        %v2021 = vadd.f32 %v1929, %v2020
        %v2022 = vpop.f32.mrb[0].mxu0
        %v2023 = vpop.f32.mrb[0].mxu0
        %v2024 = vpop.f32.mrb[0].mxu0
        %2025 = vdwg.mxu0
        %v2026 = vadd.f32 %v1698, %v2013
        %v2027 = vadd.f32 %v1699, %v2016
        %v2028 = vadd.f32 %v1700, %v2021
        %v2029 = vld [vmem:[%s7 + $0x7] sm:$0x1]
        %v2030 = vld [vmem:[%s7 + $0x8] sm:$0x1]
        %v2031 = vld [vmem:[%s7 + $0x9] sm:$0x1]
        %v2032 = vld [vmem:[%s7 + $0xa] sm:$0x1]
        %v2033 = vld [vmem:[%s7 + $0xb] sm:$0x1]
        %v2034 = vld [vmem:[%s7 + $0xc] sm:$0x1]
        %v2035 = vld [vmem:[%s7 + $0xd] sm:$0x1]
        %v2036 = vsel %vm431, %v2026, 0.0
        %2037 = vadd.xlane.f32.xlu0 %v2036
        %v2038 = vpop.xlane.xlu0 %2037
        %v2039 = vsel %vm431, %v2027, 0.0
        %2040 = vadd.xlane.f32.xlu0 %v2039
        %v2041 = vpop.xlane.xlu0 %2040
        %v2042 = vsel %vm438, %v2028, 0.0
        %2043 = vadd.xlane.f32.xlu0 %v2042
        %v2044 = vpop.xlane.xlu0 %2043
        %v2045 = vmul.f32 %v2038, %v442
        %v2046 = vmul.f32 %v2041, %v442
        %v2047 = vmul.f32 %v2044, %v442
        %v2048 = vsub.f32 %v2026, %v2045
        %v2049 = vsub.f32 %v2027, %v2046
        %v2050 = vsub.f32 %v2028, %v2047
        %v2051 = vmul.f32 %v2048, %v2048
        %v2052 = vmul.f32 %v2049, %v2049
        %v2053 = vmul.f32 %v2050, %v2050
        %v2054 = vsel %vm431, %v2051, 0.0
        %2055 = vadd.xlane.f32.xlu0 %v2054
        %v2056 = vpop.xlane.xlu0 %2055
        %v2057 = vsel %vm431, %v2052, 0.0
        %2058 = vadd.xlane.f32.xlu0 %v2057
        %v2059 = vpop.xlane.xlu0 %2058
        %v2060 = vsel %vm438, %v2053, 0.0
        %2061 = vadd.xlane.f32.xlu0 %v2060
        %v2062 = vpop.xlane.xlu0 %2061
        %v2063 = vmul.f32 %v2056, %v442
        %v2064 = vmul.f32 %v2059, %v442
        %v2065 = vmul.f32 %v2062, %v442
        %v2066 = vadd.f32 %v2063, 1e-05
        %v2067 = vadd.f32 %v2064, 1e-05
        %v2068 = vadd.f32 %v2065, 1e-05
        %v2069 = vrsqrt.pop %v2066
        %v2070 = vrsqrt.pop %v2067
        %v2071 = vrsqrt.pop %v2068
        %v2072 = vmul.f32 %v2048, %v2069
        %v2073 = vmul.f32 %v2049, %v2070
        %v2074 = vmul.f32 %v2050, %v2071
        %v2075 = vlaneseq
        %v2076 = vshrl.u32 %v2075, 7
        %v2077 = vsub.s32 0, %v2076
        %v2078 = vrot.slane %v2029, %v2077
        %v2079 = vmul.f32 %v2072, %v2078
        %v2080 = vmul.f32 %v2073, %v2078
        %v2081 = vmul.f32 %v2074, %v2078
        %v2082 = vlaneseq
        %v2083 = vshrl.u32 %v2082, 7
        %v2084 = vsub.s32 0, %v2083
        %v2085 = vrot.slane %v2030, %v2084
        %v2086 = vadd.f32 %v2079, %v2085
        %v2087 = vadd.f32 %v2080, %v2085
        %v2088 = vadd.f32 %v2081, %v2085
        %v2089 = vpack.c.bf16 %v2087, %v2086
        %v2090 = vpack.c.bf16 %v2088, %v2088
        %s2091 = scalar_lea.vmem %s3, 64
        %v2092 = vld [vmem:[%s2091] sm:$0xf]
        %v2093 = vld [vmem:[%s2091 + $0x4] sm:$0xf]
        %v2094 = vld [vmem:[%s2091 + $0x8] sm:$0xf]
        %v2095 = vld [vmem:[%s2091 + $0xc] sm:$0xf]
        %v2096 = vld [vmem:[%s2091 + $0x10] sm:$0xf]
        %v2097 = vld [vmem:[%s2091 + $0x14] sm:$0xf]
        %v2098 = vld [vmem:[%s2091 + $0x18] sm:$0xf]
        %v2099 = vld [vmem:[%s2091 + $0x1c] sm:$0xf]
        %v2100 = vld [vmem:[%s2091 + $0x20] sm:$0xf]
        %v2101 = vld [vmem:[%s2091 + $0x24] sm:$0xf]
        %v2102 = vld [vmem:[%s2091 + $0x28] sm:$0xf]
        %v2103 = vld [vmem:[%s2091 + $0x2c] sm:$0xf]
        %v2104 = vld [vmem:[%s2091 + $0x30] sm:$0xf]
        %v2105 = vld [vmem:[%s2091 + $0x34] sm:$0xf]
        %v2106 = vld [vmem:[%s2091 + $0x38] sm:$0xf]
        %v2107 = vld [vmem:[%s2091 + $0x3c] sm:$0xf]
        %v2112 = vunpack.c.l.b16 %v2092
        %v2113 = vunpack.c.l.b16 %v2093
        %v2114 = vunpack.c.l.b16 %v2094
        %v2115 = vunpack.c.l.b16 %v2095
        %v2116 = vpack.c.b16 %v2113, %v2112
        %v2117 = vpack.c.b16 %v2115, %v2114
        %v2121 = vsel %vm431, %v2089, 0
        %v2124 = vsel %vm431, %v2090, 0
        %2126 = vmatprep.subr.bf16.mxu0 0
        %2127 = vmatpush1.bf16.msra.mxu0 %v2116
        %2128 = vmatprep.subr.bf16.mxu0 0
        %2129 = vmatpush1.bf16.msra.mxu0 %v2117
        %2130 = vmatprep.subr.bf16.mxu0 0
        %2131 = vmatpush1.bf16.msra.mxu0 0
        %2132 = vmatprep.subr.bf16.mxu0 0
        %2133 = vmatpush1.bf16.msra.mxu0 0
        %2134 = vmatprep.subr.bf16.mxu0 0
        %2135 = vmatpush1.bf16.msra.mxu0 0
        %2136 = vmatprep.subr.bf16.mxu0 0
        %2137 = vmatpush1.bf16.msra.mxu0 0
        %2138 = vmatprep.subr.bf16.mxu0 0
        %2139 = vmatpush1.bf16.msra.mxu0 0
        %2140 = vmatprep.subr.bf16.mxu0 0
        %2141 = vmatpush1.bf16.msra.mxu0 0
        %2142 = vmatprep.subr.bf16.mxu0 0
        %2143 = vmatpush1.bf16.msra.mxu0 0
        %2144 = vmatprep.subr.bf16.mxu0 0
        %2145 = vmatpush1.bf16.msra.mxu0 0
        %2146 = vmatprep.subr.bf16.mxu0 0
        %2147 = vmatpush1.bf16.msra.mxu0 0
        %2148 = vmatprep.subr.bf16.mxu0 0
        %2149 = vmatpush1.bf16.msra.mxu0 0
        %2150 = vmatprep.subr.bf16.mxu0 0
        %2151 = vmatpush1.bf16.msra.mxu0 0
        %2152 = vmatprep.subr.bf16.mxu0 0
        %2153 = vmatpush1.bf16.msra.mxu0 0
        %2154 = vmatprep.subr.bf16.mxu0 0
        %2155 = vmatpush1.bf16.msra.mxu0 0
        %2156 = vmatprep.subr.bf16.mxu0 0
        %2157 = vmatpush1.bf16.msra.mxu0 0
        %2158 = vmatprep.mubr.bf16.mxu0 0
        %2159 = vmatmul.mubr.bf16.gmra.mrb[0].mxu0 %v2121
        %v2160 = vpop.f32.mrb[0].mxu0
        %v2161 = vadd.f32 0.0, %v2160
        %v2162 = vpop.f32.mrb[0].mxu0
        %v2163 = vpop.f32.mrb[0].mxu0
        %v2164 = vadd.f32 0.0, %v2163
        %v2165 = vpop.f32.mrb[0].mxu0
        %2166 = vmatprep.mubr.bf16.mxu0 0
        %2167 = vmatmul.mubr.bf16.gmra.mrb[0].mxu0 %v2124
        %v2168 = vpop.f32.mrb[0].mxu0
        %v2169 = vadd.f32 0.0, %v2168
        %v2170 = vpop.f32.mrb[0].mxu0
        %v2171 = vpop.f32.mrb[0].mxu0
        %v2172 = vpop.f32.mrb[0].mxu0
        %2173 = vdwg.mxu0
        %v2178 = vunpack.c.l.b16 %v2096
        %v2179 = vunpack.c.l.b16 %v2097
        %v2180 = vunpack.c.l.b16 %v2098
        %v2181 = vunpack.c.l.b16 %v2099
        %v2182 = vpack.c.b16 %v2179, %v2178
        %v2183 = vpack.c.b16 %v2181, %v2180
        %2186 = vmatprep.subr.bf16.mxu0 0
        %2187 = vmatpush1.bf16.msra.mxu0 %v2182
        %2188 = vmatprep.subr.bf16.mxu0 0
        %2189 = vmatpush1.bf16.msra.mxu0 %v2183
        %2190 = vmatprep.subr.bf16.mxu0 0
        %2191 = vmatpush1.bf16.msra.mxu0 0
        %2192 = vmatprep.subr.bf16.mxu0 0
        %2193 = vmatpush1.bf16.msra.mxu0 0
        %2194 = vmatprep.subr.bf16.mxu0 0
        %2195 = vmatpush1.bf16.msra.mxu0 0
        %2196 = vmatprep.subr.bf16.mxu0 0
        %2197 = vmatpush1.bf16.msra.mxu0 0
        %2198 = vmatprep.subr.bf16.mxu0 0
        %2199 = vmatpush1.bf16.msra.mxu0 0
        %2200 = vmatprep.subr.bf16.mxu0 0
        %2201 = vmatpush1.bf16.msra.mxu0 0
        %2202 = vmatprep.subr.bf16.mxu0 0
        %2203 = vmatpush1.bf16.msra.mxu0 0
        %2204 = vmatprep.subr.bf16.mxu0 0
        %2205 = vmatpush1.bf16.msra.mxu0 0
        %2206 = vmatprep.subr.bf16.mxu0 0
        %2207 = vmatpush1.bf16.msra.mxu0 0
        %2208 = vmatprep.subr.bf16.mxu0 0
        %2209 = vmatpush1.bf16.msra.mxu0 0
        %2210 = vmatprep.subr.bf16.mxu0 0
        %2211 = vmatpush1.bf16.msra.mxu0 0
        %2212 = vmatprep.subr.bf16.mxu0 0
        %2213 = vmatpush1.bf16.msra.mxu0 0
        %2214 = vmatprep.subr.bf16.mxu0 0
        %2215 = vmatpush1.bf16.msra.mxu0 0
        %2216 = vmatprep.subr.bf16.mxu0 0
        %2217 = vmatpush1.bf16.msra.mxu0 0
        %2218 = vmatprep.mubr.bf16.mxu0 0
        %2219 = vmatmul.mubr.bf16.gmra.mrb[0].mxu0 %v2121
        %v2220 = vpop.f32.mrb[0].mxu0
        %v2221 = vadd.f32 0.0, %v2220
        %v2222 = vpop.f32.mrb[0].mxu0
        %v2223 = vpop.f32.mrb[0].mxu0
        %v2224 = vadd.f32 0.0, %v2223
        %v2225 = vpop.f32.mrb[0].mxu0
        %2226 = vmatprep.mubr.bf16.mxu0 0
        %2227 = vmatmul.mubr.bf16.gmra.mrb[0].mxu0 %v2124
        %v2228 = vpop.f32.mrb[0].mxu0
        %v2229 = vadd.f32 0.0, %v2228
        %v2230 = vpop.f32.mrb[0].mxu0
        %v2231 = vpop.f32.mrb[0].mxu0
        %v2232 = vpop.f32.mrb[0].mxu0
        %2233 = vdwg.mxu0
        %v2238 = vunpack.c.l.b16 %v2100
        %v2239 = vunpack.c.l.b16 %v2101
        %v2240 = vunpack.c.l.b16 %v2102
        %v2241 = vunpack.c.l.b16 %v2103
        %v2242 = vpack.c.b16 %v2239, %v2238
        %v2243 = vpack.c.b16 %v2241, %v2240
        %2246 = vmatprep.subr.bf16.mxu0 0
        %2247 = vmatpush1.bf16.msra.mxu0 %v2242
        %2248 = vmatprep.subr.bf16.mxu0 0
        %2249 = vmatpush1.bf16.msra.mxu0 %v2243
        %2250 = vmatprep.subr.bf16.mxu0 0
        %2251 = vmatpush1.bf16.msra.mxu0 0
        %2252 = vmatprep.subr.bf16.mxu0 0
        %2253 = vmatpush1.bf16.msra.mxu0 0
        %2254 = vmatprep.subr.bf16.mxu0 0
        %2255 = vmatpush1.bf16.msra.mxu0 0
        %2256 = vmatprep.subr.bf16.mxu0 0
        %2257 = vmatpush1.bf16.msra.mxu0 0
        %2258 = vmatprep.subr.bf16.mxu0 0
        %2259 = vmatpush1.bf16.msra.mxu0 0
        %2260 = vmatprep.subr.bf16.mxu0 0
        %2261 = vmatpush1.bf16.msra.mxu0 0
        %2262 = vmatprep.subr.bf16.mxu0 0
        %2263 = vmatpush1.bf16.msra.mxu0 0
        %2264 = vmatprep.subr.bf16.mxu0 0
        %2265 = vmatpush1.bf16.msra.mxu0 0
        %2266 = vmatprep.subr.bf16.mxu0 0
        %2267 = vmatpush1.bf16.msra.mxu0 0
        %2268 = vmatprep.subr.bf16.mxu0 0
        %2269 = vmatpush1.bf16.msra.mxu0 0
        %2270 = vmatprep.subr.bf16.mxu0 0
        %2271 = vmatpush1.bf16.msra.mxu0 0
        %2272 = vmatprep.subr.bf16.mxu0 0
        %2273 = vmatpush1.bf16.msra.mxu0 0
        %2274 = vmatprep.subr.bf16.mxu0 0
        %2275 = vmatpush1.bf16.msra.mxu0 0
        %2276 = vmatprep.subr.bf16.mxu0 0
        %2277 = vmatpush1.bf16.msra.mxu0 0
        %2278 = vmatprep.mubr.bf16.mxu0 0
        %2279 = vmatmul.mubr.bf16.gmra.mrb[0].mxu0 %v2121
        %v2280 = vpop.f32.mrb[0].mxu0
        %v2281 = vadd.f32 0.0, %v2280
        %v2282 = vpop.f32.mrb[0].mxu0
        %v2283 = vpop.f32.mrb[0].mxu0
        %v2284 = vadd.f32 0.0, %v2283
        %v2285 = vpop.f32.mrb[0].mxu0
        %2286 = vmatprep.mubr.bf16.mxu0 0
        %2287 = vmatmul.mubr.bf16.gmra.mrb[0].mxu0 %v2124
        %v2288 = vpop.f32.mrb[0].mxu0
        %v2289 = vadd.f32 0.0, %v2288
        %v2290 = vpop.f32.mrb[0].mxu0
        %v2291 = vpop.f32.mrb[0].mxu0
        %v2292 = vpop.f32.mrb[0].mxu0
        %2293 = vdwg.mxu0
        %v2298 = vunpack.c.l.b16 %v2104
        %v2299 = vunpack.c.l.b16 %v2105
        %v2300 = vunpack.c.l.b16 %v2106
        %v2301 = vunpack.c.l.b16 %v2107
        %v2302 = vpack.c.b16 %v2299, %v2298
        %v2303 = vpack.c.b16 %v2301, %v2300
        %2306 = vmatprep.subr.bf16.mxu0 0
        %2307 = vmatpush1.bf16.msra.mxu0 %v2302
        %2308 = vmatprep.subr.bf16.mxu0 0
        %2309 = vmatpush1.bf16.msra.mxu0 %v2303
        %2310 = vmatprep.subr.bf16.mxu0 0
        %2311 = vmatpush1.bf16.msra.mxu0 0
        %2312 = vmatprep.subr.bf16.mxu0 0
        %2313 = vmatpush1.bf16.msra.mxu0 0
        %2314 = vmatprep.subr.bf16.mxu0 0
        %2315 = vmatpush1.bf16.msra.mxu0 0
        %2316 = vmatprep.subr.bf16.mxu0 0
        %2317 = vmatpush1.bf16.msra.mxu0 0
        %2318 = vmatprep.subr.bf16.mxu0 0
        %2319 = vmatpush1.bf16.msra.mxu0 0
        %2320 = vmatprep.subr.bf16.mxu0 0
        %2321 = vmatpush1.bf16.msra.mxu0 0
        %2322 = vmatprep.subr.bf16.mxu0 0
        %2323 = vmatpush1.bf16.msra.mxu0 0
        %2324 = vmatprep.subr.bf16.mxu0 0
        %2325 = vmatpush1.bf16.msra.mxu0 0
        %2326 = vmatprep.subr.bf16.mxu0 0
        %2327 = vmatpush1.bf16.msra.mxu0 0
        %2328 = vmatprep.subr.bf16.mxu0 0
        %2329 = vmatpush1.bf16.msra.mxu0 0
        %2330 = vmatprep.subr.bf16.mxu0 0
        %2331 = vmatpush1.bf16.msra.mxu0 0
        %2332 = vmatprep.subr.bf16.mxu0 0
        %2333 = vmatpush1.bf16.msra.mxu0 0
        %2334 = vmatprep.subr.bf16.mxu0 0
        %2335 = vmatpush1.bf16.msra.mxu0 0
        %2336 = vmatprep.subr.bf16.mxu0 0
        %2337 = vmatpush1.bf16.msra.mxu0 0
        %2338 = vmatprep.mubr.bf16.mxu0 0
        %2339 = vmatmul.mubr.bf16.gmra.mrb[0].mxu0 %v2121
        %v2340 = vpop.f32.mrb[0].mxu0
        %v2341 = vadd.f32 0.0, %v2340
        %v2342 = vpop.f32.mrb[0].mxu0
        %v2343 = vpop.f32.mrb[0].mxu0
        %v2344 = vadd.f32 0.0, %v2343
        %v2345 = vpop.f32.mrb[0].mxu0
        %2346 = vmatprep.mubr.bf16.mxu0 0
        %2347 = vmatmul.mubr.bf16.gmra.mrb[0].mxu0 %v2124
        %v2348 = vpop.f32.mrb[0].mxu0
        %v2349 = vadd.f32 0.0, %v2348
        %v2350 = vpop.f32.mrb[0].mxu0
        %v2351 = vpop.f32.mrb[0].mxu0
        %v2352 = vpop.f32.mrb[0].mxu0
        %2353 = vdwg.mxu0
        %v2354 = vpack.c.bf16 %v2164, %v2161
        %v2355 = vpack.c.bf16 %v2169, %v2169
        %v2356 = vpack.c.bf16 %v2224, %v2221
        %v2357 = vpack.c.bf16 %v2229, %v2229
        %v2358 = vpack.c.bf16 %v2284, %v2281
        %v2359 = vpack.c.bf16 %v2289, %v2289
        %v2360 = vpack.c.bf16 %v2344, %v2341
        %v2361 = vpack.c.bf16 %v2349, %v2349
        %2364 = vrot.lane.b32.xlu0 %v2354, 120
        %v2365 = vpop.permute.xlu0 %2364
        %2366 = vrot.lane.b32.xlu0 %v2355, 120
        %v2367 = vpop.permute.xlu0 %2366
        %v2369 = vsel %vm765, %v2354, 0
        %v2372 = vsel %vm765, %v2355, 0
        %v2375 = vsel %vm765, %v2365, 0
        %v2378 = vsel %vm765, %v2367, 0
        %2380 = vmatprep.subr.bf16.mxu0 0
        %2381 = vmatpush1.bf16.xpose.msra.mxu0 %v2375
        %2382 = vmatprep.subr.bf16.mxu0 0
        %2383 = vmatpush1.bf16.xpose.msra.mxu0 %v2378
        %2384 = vmatprep.subr.bf16.mxu0 0
        %2385 = vmatpush1.bf16.xpose.msra.mxu0 0
        %2386 = vmatprep.subr.bf16.mxu0 0
        %2387 = vmatpush1.bf16.xpose.msra.mxu0 0
        %2388 = vmatprep.subr.bf16.mxu0 0
        %2389 = vmatpush1.bf16.xpose.msra.mxu0 0
        %2390 = vmatprep.subr.bf16.mxu0 0
        %2391 = vmatpush1.bf16.xpose.msra.mxu0 0
        %2392 = vmatprep.subr.bf16.mxu0 0
        %2393 = vmatpush1.bf16.xpose.msra.mxu0 0
        %2394 = vmatprep.subr.bf16.mxu0 0
        %2395 = vmatpush1.bf16.xpose.msra.mxu0 0
        %2396 = vmatprep.subr.bf16.mxu0 0
        %2397 = vmatpush1.bf16.xpose.msra.mxu0 0
        %2398 = vmatprep.subr.bf16.mxu0 0
        %2399 = vmatpush1.bf16.xpose.msra.mxu0 0
        %2400 = vmatprep.subr.bf16.mxu0 0
        %2401 = vmatpush1.bf16.xpose.msra.mxu0 0
        %2402 = vmatprep.subr.bf16.mxu0 0
        %2403 = vmatpush1.bf16.xpose.msra.mxu0 0
        %2404 = vmatprep.subr.bf16.mxu0 0
        %2405 = vmatpush1.bf16.xpose.msra.mxu0 0
        %2406 = vmatprep.subr.bf16.mxu0 0
        %2407 = vmatpush1.bf16.xpose.msra.mxu0 0
        %2408 = vmatprep.subr.bf16.mxu0 0
        %2409 = vmatpush1.bf16.xpose.msra.mxu0 0
        %2410 = vmatprep.subr.bf16.mxu0 0
        %2411 = vmatpush1.bf16.xpose.msra.mxu0 0
        %2412 = vmatprep.mubr.bf16.mxu0 0
        %2413 = vmatmul.mubr.bf16.gmra.mrb[0].mxu0 %v2369
        %v2414 = vpop.f32.mrb[0].mxu0
        %v2415 = vadd.f32 0.0, %v2414
        %v2416 = vpop.f32.mrb[0].mxu0
        %v2417 = vpop.f32.mrb[0].mxu0
        %v2418 = vadd.f32 0.0, %v2417
        %v2419 = vpop.f32.mrb[0].mxu0
        %2420 = vmatprep.mubr.bf16.mxu0 0
        %2421 = vmatmul.mubr.bf16.gmra.mrb[0].mxu0 %v2372
        %v2422 = vpop.f32.mrb[0].mxu0
        %v2423 = vadd.f32 0.0, %v2422
        %v2424 = vpop.f32.mrb[0].mxu0
        %v2425 = vpop.f32.mrb[0].mxu0
        %v2426 = vpop.f32.mrb[0].mxu0
        %2427 = vdwg.mxu0
        %2430 = vrot.lane.b32.xlu0 %v2356, 120
        %v2431 = vpop.permute.xlu0 %2430
        %2432 = vrot.lane.b32.xlu0 %v2357, 120
        %v2433 = vpop.permute.xlu0 %2432
        %v2435 = vsel %vm765, %v2356, 0
        %v2438 = vsel %vm765, %v2357, 0
        %v2441 = vsel %vm765, %v2431, 0
        %v2444 = vsel %vm765, %v2433, 0
        %2446 = vmatprep.subr.bf16.mxu0 0
        %2447 = vmatpush1.bf16.xpose.msra.mxu0 %v2441
        %2448 = vmatprep.subr.bf16.mxu0 0
        %2449 = vmatpush1.bf16.xpose.msra.mxu0 %v2444
        %2450 = vmatprep.subr.bf16.mxu0 0
        %2451 = vmatpush1.bf16.xpose.msra.mxu0 0
        %2452 = vmatprep.subr.bf16.mxu0 0
        %2453 = vmatpush1.bf16.xpose.msra.mxu0 0
        %2454 = vmatprep.subr.bf16.mxu0 0
        %2455 = vmatpush1.bf16.xpose.msra.mxu0 0
        %2456 = vmatprep.subr.bf16.mxu0 0
        %2457 = vmatpush1.bf16.xpose.msra.mxu0 0
        %2458 = vmatprep.subr.bf16.mxu0 0
        %2459 = vmatpush1.bf16.xpose.msra.mxu0 0
        %2460 = vmatprep.subr.bf16.mxu0 0
        %2461 = vmatpush1.bf16.xpose.msra.mxu0 0
        %2462 = vmatprep.subr.bf16.mxu0 0
        %2463 = vmatpush1.bf16.xpose.msra.mxu0 0
        %2464 = vmatprep.subr.bf16.mxu0 0
        %2465 = vmatpush1.bf16.xpose.msra.mxu0 0
        %2466 = vmatprep.subr.bf16.mxu0 0
        %2467 = vmatpush1.bf16.xpose.msra.mxu0 0
        %2468 = vmatprep.subr.bf16.mxu0 0
        %2469 = vmatpush1.bf16.xpose.msra.mxu0 0
        %2470 = vmatprep.subr.bf16.mxu0 0
        %2471 = vmatpush1.bf16.xpose.msra.mxu0 0
        %2472 = vmatprep.subr.bf16.mxu0 0
        %2473 = vmatpush1.bf16.xpose.msra.mxu0 0
        %2474 = vmatprep.subr.bf16.mxu0 0
        %2475 = vmatpush1.bf16.xpose.msra.mxu0 0
        %2476 = vmatprep.subr.bf16.mxu0 0
        %2477 = vmatpush1.bf16.xpose.msra.mxu0 0
        %2478 = vmatprep.mubr.bf16.mxu0 0
        %2479 = vmatmul.mubr.bf16.gmra.mrb[0].mxu0 %v2435
        %v2480 = vpop.f32.mrb[0].mxu0
        %v2481 = vadd.f32 0.0, %v2480
        %v2482 = vpop.f32.mrb[0].mxu0
        %v2483 = vpop.f32.mrb[0].mxu0
        %v2484 = vadd.f32 0.0, %v2483
        %v2485 = vpop.f32.mrb[0].mxu0
        %2486 = vmatprep.mubr.bf16.mxu0 0
        %2487 = vmatmul.mubr.bf16.gmra.mrb[0].mxu0 %v2438
        %v2488 = vpop.f32.mrb[0].mxu0
        %v2489 = vadd.f32 0.0, %v2488
        %v2490 = vpop.f32.mrb[0].mxu0
        %v2491 = vpop.f32.mrb[0].mxu0
        %v2492 = vpop.f32.mrb[0].mxu0
        %2493 = vdwg.mxu0
        %2496 = vrot.lane.b32.xlu0 %v2358, 120
        %v2497 = vpop.permute.xlu0 %2496
        %2498 = vrot.lane.b32.xlu0 %v2359, 120
        %v2499 = vpop.permute.xlu0 %2498
        %v2501 = vsel %vm765, %v2358, 0
        %v2504 = vsel %vm765, %v2359, 0
        %v2507 = vsel %vm765, %v2497, 0
        %v2510 = vsel %vm765, %v2499, 0
        %2512 = vmatprep.subr.bf16.mxu0 0
        %2513 = vmatpush1.bf16.xpose.msra.mxu0 %v2507
        %2514 = vmatprep.subr.bf16.mxu0 0
        %2515 = vmatpush1.bf16.xpose.msra.mxu0 %v2510
        %2516 = vmatprep.subr.bf16.mxu0 0
        %2517 = vmatpush1.bf16.xpose.msra.mxu0 0
        %2518 = vmatprep.subr.bf16.mxu0 0
        %2519 = vmatpush1.bf16.xpose.msra.mxu0 0
        %2520 = vmatprep.subr.bf16.mxu0 0
        %2521 = vmatpush1.bf16.xpose.msra.mxu0 0
        %2522 = vmatprep.subr.bf16.mxu0 0
        %2523 = vmatpush1.bf16.xpose.msra.mxu0 0
        %2524 = vmatprep.subr.bf16.mxu0 0
        %2525 = vmatpush1.bf16.xpose.msra.mxu0 0
        %2526 = vmatprep.subr.bf16.mxu0 0
        %2527 = vmatpush1.bf16.xpose.msra.mxu0 0
        %2528 = vmatprep.subr.bf16.mxu0 0
        %2529 = vmatpush1.bf16.xpose.msra.mxu0 0
        %2530 = vmatprep.subr.bf16.mxu0 0
        %2531 = vmatpush1.bf16.xpose.msra.mxu0 0
        %2532 = vmatprep.subr.bf16.mxu0 0
        %2533 = vmatpush1.bf16.xpose.msra.mxu0 0
        %2534 = vmatprep.subr.bf16.mxu0 0
        %2535 = vmatpush1.bf16.xpose.msra.mxu0 0
        %2536 = vmatprep.subr.bf16.mxu0 0
        %2537 = vmatpush1.bf16.xpose.msra.mxu0 0
        %2538 = vmatprep.subr.bf16.mxu0 0
        %2539 = vmatpush1.bf16.xpose.msra.mxu0 0
        %2540 = vmatprep.subr.bf16.mxu0 0
        %2541 = vmatpush1.bf16.xpose.msra.mxu0 0
        %2542 = vmatprep.subr.bf16.mxu0 0
        %2543 = vmatpush1.bf16.xpose.msra.mxu0 0
        %2544 = vmatprep.mubr.bf16.mxu0 0
        %2545 = vmatmul.mubr.bf16.gmra.mrb[0].mxu0 %v2501
        %v2546 = vpop.f32.mrb[0].mxu0
        %v2547 = vadd.f32 0.0, %v2546
        %v2548 = vpop.f32.mrb[0].mxu0
        %v2549 = vpop.f32.mrb[0].mxu0
        %v2550 = vadd.f32 0.0, %v2549
        %v2551 = vpop.f32.mrb[0].mxu0
        %2552 = vmatprep.mubr.bf16.mxu0 0
        %2553 = vmatmul.mubr.bf16.gmra.mrb[0].mxu0 %v2504
        %v2554 = vpop.f32.mrb[0].mxu0
        %v2555 = vadd.f32 0.0, %v2554
        %v2556 = vpop.f32.mrb[0].mxu0
        %v2557 = vpop.f32.mrb[0].mxu0
        %v2558 = vpop.f32.mrb[0].mxu0
        %2559 = vdwg.mxu0
        %2562 = vrot.lane.b32.xlu0 %v2360, 120
        %v2563 = vpop.permute.xlu0 %2562
        %2564 = vrot.lane.b32.xlu0 %v2361, 120
        %v2565 = vpop.permute.xlu0 %2564
        %v2567 = vsel %vm765, %v2360, 0
        %v2570 = vsel %vm765, %v2361, 0
        %v2573 = vsel %vm765, %v2563, 0
        %v2576 = vsel %vm765, %v2565, 0
        %2578 = vmatprep.subr.bf16.mxu0 0
        %2579 = vmatpush1.bf16.xpose.msra.mxu0 %v2573
        %2580 = vmatprep.subr.bf16.mxu0 0
        %2581 = vmatpush1.bf16.xpose.msra.mxu0 %v2576
        %2582 = vmatprep.subr.bf16.mxu0 0
        %2583 = vmatpush1.bf16.xpose.msra.mxu0 0
        %2584 = vmatprep.subr.bf16.mxu0 0
        %2585 = vmatpush1.bf16.xpose.msra.mxu0 0
        %2586 = vmatprep.subr.bf16.mxu0 0
        %2587 = vmatpush1.bf16.xpose.msra.mxu0 0
        %2588 = vmatprep.subr.bf16.mxu0 0
        %2589 = vmatpush1.bf16.xpose.msra.mxu0 0
        %2590 = vmatprep.subr.bf16.mxu0 0
        %2591 = vmatpush1.bf16.xpose.msra.mxu0 0
        %2592 = vmatprep.subr.bf16.mxu0 0
        %2593 = vmatpush1.bf16.xpose.msra.mxu0 0
        %2594 = vmatprep.subr.bf16.mxu0 0
        %2595 = vmatpush1.bf16.xpose.msra.mxu0 0
        %2596 = vmatprep.subr.bf16.mxu0 0
        %2597 = vmatpush1.bf16.xpose.msra.mxu0 0
        %2598 = vmatprep.subr.bf16.mxu0 0
        %2599 = vmatpush1.bf16.xpose.msra.mxu0 0
        %2600 = vmatprep.subr.bf16.mxu0 0
        %2601 = vmatpush1.bf16.xpose.msra.mxu0 0
        %2602 = vmatprep.subr.bf16.mxu0 0
        %2603 = vmatpush1.bf16.xpose.msra.mxu0 0
        %2604 = vmatprep.subr.bf16.mxu0 0
        %2605 = vmatpush1.bf16.xpose.msra.mxu0 0
        %2606 = vmatprep.subr.bf16.mxu0 0
        %2607 = vmatpush1.bf16.xpose.msra.mxu0 0
        %2608 = vmatprep.subr.bf16.mxu0 0
        %2609 = vmatpush1.bf16.xpose.msra.mxu0 0
        %2610 = vmatprep.mubr.bf16.mxu0 0
        %2611 = vmatmul.mubr.bf16.gmra.mrb[0].mxu0 %v2567
        %v2612 = vpop.f32.mrb[0].mxu0
        %v2613 = vadd.f32 0.0, %v2612
        %v2614 = vpop.f32.mrb[0].mxu0
        %v2615 = vpop.f32.mrb[0].mxu0
        %v2616 = vadd.f32 0.0, %v2615
        %v2617 = vpop.f32.mrb[0].mxu0
        %2618 = vmatprep.mubr.bf16.mxu0 0
        %2619 = vmatmul.mubr.bf16.gmra.mrb[0].mxu0 %v2570
        %v2620 = vpop.f32.mrb[0].mxu0
        %v2621 = vadd.f32 0.0, %v2620
        %v2622 = vpop.f32.mrb[0].mxu0
        %v2623 = vpop.f32.mrb[0].mxu0
        %v2624 = vpop.f32.mrb[0].mxu0
        %2625 = vdwg.mxu0
        %v2626 = vmul.f32 %v2415, 0.35355338
        %v2627 = vmul.f32 %v2418, 0.35355338
        %v2628 = vmul.f32 %v2423, 0.35355338
        %v2629 = vmul.f32 %v2481, 0.35355338
        %v2630 = vmul.f32 %v2484, 0.35355338
        %v2631 = vmul.f32 %v2489, 0.35355338
        %v2632 = vmul.f32 %v2547, 0.35355338
        %v2633 = vmul.f32 %v2550, 0.35355338
        %v2634 = vmul.f32 %v2555, 0.35355338
        %v2635 = vmul.f32 %v2613, 0.35355338
        %v2636 = vmul.f32 %v2616, 0.35355338
        %v2637 = vmul.f32 %v2621, 0.35355338
        %v2638 = vsel %vm1036, %v2626, -inf
        %2639 = vmax.xlane.f32.xlu0 %v2638
        %v2640 = vpop.xlane.xlu0 %2639
        %v2641 = vsel %vm1036, %v2627, -inf
        %2642 = vmax.xlane.f32.xlu0 %v2641
        %v2643 = vpop.xlane.xlu0 %2642
        %v2644 = vsel %vm1043, %v2628, -inf
        %2645 = vmax.xlane.f32.xlu0 %v2644
        %v2646 = vpop.xlane.xlu0 %2645
        %v2647 = vsel %vm1036, %v2629, -inf
        %2648 = vmax.xlane.f32.xlu0 %v2647
        %v2649 = vpop.xlane.xlu0 %2648
        %v2650 = vsel %vm1036, %v2630, -inf
        %2651 = vmax.xlane.f32.xlu0 %v2650
        %v2652 = vpop.xlane.xlu0 %2651
        %v2653 = vsel %vm1043, %v2631, -inf
        %2654 = vmax.xlane.f32.xlu0 %v2653
        %v2655 = vpop.xlane.xlu0 %2654
        %v2656 = vsel %vm1036, %v2632, -inf
        %2657 = vmax.xlane.f32.xlu0 %v2656
        %v2658 = vpop.xlane.xlu0 %2657
        %v2659 = vsel %vm1036, %v2633, -inf
        %2660 = vmax.xlane.f32.xlu0 %v2659
        %v2661 = vpop.xlane.xlu0 %2660
        %v2662 = vsel %vm1043, %v2634, -inf
        %2663 = vmax.xlane.f32.xlu0 %v2662
        %v2664 = vpop.xlane.xlu0 %2663
        %v2665 = vsel %vm1036, %v2635, -inf
        %2666 = vmax.xlane.f32.xlu0 %v2665
        %v2667 = vpop.xlane.xlu0 %2666
        %v2668 = vsel %vm1036, %v2636, -inf
        %2669 = vmax.xlane.f32.xlu0 %v2668
        %v2670 = vpop.xlane.xlu0 %2669
        %v2671 = vsel %vm1043, %v2637, -inf
        %2672 = vmax.xlane.f32.xlu0 %v2671
        %v2673 = vpop.xlane.xlu0 %2672
        %v2674 = vsub.f32 %v2626, %v2640
        %v2675 = vsub.f32 %v2627, %v2643
        %v2676 = vsub.f32 %v2628, %v2646
        %v2677 = vsub.f32 %v2629, %v2649
        %v2678 = vsub.f32 %v2630, %v2652
        %v2679 = vsub.f32 %v2631, %v2655
        %v2680 = vsub.f32 %v2632, %v2658
        %v2681 = vsub.f32 %v2633, %v2661
        %v2682 = vsub.f32 %v2634, %v2664
        %v2683 = vsub.f32 %v2635, %v2667
        %v2684 = vsub.f32 %v2636, %v2670
        %v2685 = vsub.f32 %v2637, %v2673
        %v2686 = vmul.f32 %v2674, 1.442695
        %v2687 = vpow.pop %v2686
        %v2688 = vmul.f32 %v2675, 1.442695
        %v2689 = vpow.pop %v2688
        %v2690 = vmul.f32 %v2676, 1.442695
        %v2691 = vpow.pop %v2690
        %v2692 = vmul.f32 %v2677, 1.442695
        %v2693 = vpow.pop %v2692
        %v2694 = vmul.f32 %v2678, 1.442695
        %v2695 = vpow.pop %v2694
        %v2696 = vmul.f32 %v2679, 1.442695
        %v2697 = vpow.pop %v2696
        %v2698 = vmul.f32 %v2680, 1.442695
        %v2699 = vpow.pop %v2698
        %v2700 = vmul.f32 %v2681, 1.442695
        %v2701 = vpow.pop %v2700
        %v2702 = vmul.f32 %v2682, 1.442695
        %v2703 = vpow.pop %v2702
        %v2704 = vmul.f32 %v2683, 1.442695
        %v2705 = vpow.pop %v2704
        %v2706 = vmul.f32 %v2684, 1.442695
        %v2707 = vpow.pop %v2706
        %v2708 = vmul.f32 %v2685, 1.442695
        %v2709 = vpow.pop %v2708
        %v2710 = vsel %vm1036, %v2687, 0.0
        %2711 = vadd.xlane.f32.xlu0 %v2710
        %v2712 = vpop.xlane.xlu0 %2711
        %v2713 = vsel %vm1036, %v2689, 0.0
        %2714 = vadd.xlane.f32.xlu0 %v2713
        %v2715 = vpop.xlane.xlu0 %2714
        %v2716 = vsel %vm1043, %v2691, 0.0
        %2717 = vadd.xlane.f32.xlu0 %v2716
        %v2718 = vpop.xlane.xlu0 %2717
        %v2719 = vsel %vm1036, %v2693, 0.0
        %2720 = vadd.xlane.f32.xlu0 %v2719
        %v2721 = vpop.xlane.xlu0 %2720
        %v2722 = vsel %vm1036, %v2695, 0.0
        %2723 = vadd.xlane.f32.xlu0 %v2722
        %v2724 = vpop.xlane.xlu0 %2723
        %v2725 = vsel %vm1043, %v2697, 0.0
        %2726 = vadd.xlane.f32.xlu0 %v2725
        %v2727 = vpop.xlane.xlu0 %2726
        %v2728 = vsel %vm1036, %v2699, 0.0
        %2729 = vadd.xlane.f32.xlu0 %v2728
        %v2730 = vpop.xlane.xlu0 %2729
        %v2731 = vsel %vm1036, %v2701, 0.0
        %2732 = vadd.xlane.f32.xlu0 %v2731
        %v2733 = vpop.xlane.xlu0 %2732
        %v2734 = vsel %vm1043, %v2703, 0.0
        %2735 = vadd.xlane.f32.xlu0 %v2734
        %v2736 = vpop.xlane.xlu0 %2735
        %v2737 = vsel %vm1036, %v2705, 0.0
        %2738 = vadd.xlane.f32.xlu0 %v2737
        %v2739 = vpop.xlane.xlu0 %2738
        %v2740 = vsel %vm1036, %v2707, 0.0
        %2741 = vadd.xlane.f32.xlu0 %v2740
        %v2742 = vpop.xlane.xlu0 %2741
        %v2743 = vsel %vm1043, %v2709, 0.0
        %2744 = vadd.xlane.f32.xlu0 %v2743
        %v2745 = vpop.xlane.xlu0 %2744
        %v2746 = vrcp.pop %v2712
        %v2747 = vrcp.pop %v2715
        %v2748 = vrcp.pop %v2718
        %v2749 = vrcp.pop %v2721
        %v2750 = vrcp.pop %v2724
        %v2751 = vrcp.pop %v2727
        %v2752 = vrcp.pop %v2730
        %v2753 = vrcp.pop %v2733
        %v2754 = vrcp.pop %v2736
        %v2755 = vrcp.pop %v2739
        %v2756 = vrcp.pop %v2742
        %v2757 = vrcp.pop %v2745
        %v2758 = vmul.f32 %v2687, %v2746
        %v2759 = vmul.f32 %v2689, %v2747
        %v2760 = vmul.f32 %v2691, %v2748
        %v2761 = vmul.f32 %v2693, %v2749
        %v2762 = vmul.f32 %v2695, %v2750
        %v2763 = vmul.f32 %v2697, %v2751
        %v2764 = vmul.f32 %v2699, %v2752
        %v2765 = vmul.f32 %v2701, %v2753
        %v2766 = vmul.f32 %v2703, %v2754
        %v2767 = vmul.f32 %v2705, %v2755
        %v2768 = vmul.f32 %v2707, %v2756
        %v2769 = vmul.f32 %v2709, %v2757
        %v2770 = vpack.c.bf16 %v2759, %v2758
        %v2771 = vpack.c.bf16 %v2760, %v2760
        %v2772 = vpack.c.bf16 %v2762, %v2761
        %v2773 = vpack.c.bf16 %v2763, %v2763
        %v2774 = vpack.c.bf16 %v2765, %v2764
        %v2775 = vpack.c.bf16 %v2766, %v2766
        %v2776 = vpack.c.bf16 %v2768, %v2767
        %v2777 = vpack.c.bf16 %v2769, %v2769
        %2778 = vrot.lane.b32.xlu0 %v2354, 112
        %v2779 = vpop.permute.xlu0 %2778
        %2780 = vrot.lane.b32.xlu0 %v2355, 112
        %v2781 = vpop.permute.xlu0 %2780
        %v2784 = vsel %vm1036, %v2770, 0
        %v2787 = vsel %vm1036, %v2771, 0
        %v2790 = vand.u32 %v2781, %v1191
        %2792 = vmatprep.subr.bf16.mxu0 0
        %2793 = vmatpush1.bf16.msra.mxu0 %v2779
        %2794 = vmatprep.subr.bf16.mxu0 0
        %2795 = vmatpush1.bf16.msra.mxu0 %v2790
        %2796 = vmatprep.subr.bf16.mxu0 0
        %2797 = vmatpush1.bf16.msra.mxu0 0
        %2798 = vmatprep.subr.bf16.mxu0 0
        %2799 = vmatpush1.bf16.msra.mxu0 0
        %2800 = vmatprep.subr.bf16.mxu0 0
        %2801 = vmatpush1.bf16.msra.mxu0 0
        %2802 = vmatprep.subr.bf16.mxu0 0
        %2803 = vmatpush1.bf16.msra.mxu0 0
        %2804 = vmatprep.subr.bf16.mxu0 0
        %2805 = vmatpush1.bf16.msra.mxu0 0
        %2806 = vmatprep.subr.bf16.mxu0 0
        %2807 = vmatpush1.bf16.msra.mxu0 0
        %2808 = vmatprep.subr.bf16.mxu0 0
        %2809 = vmatpush1.bf16.msra.mxu0 0
        %2810 = vmatprep.subr.bf16.mxu0 0
        %2811 = vmatpush1.bf16.msra.mxu0 0
        %2812 = vmatprep.subr.bf16.mxu0 0
        %2813 = vmatpush1.bf16.msra.mxu0 0
        %2814 = vmatprep.subr.bf16.mxu0 0
        %2815 = vmatpush1.bf16.msra.mxu0 0
        %2816 = vmatprep.subr.bf16.mxu0 0
        %2817 = vmatpush1.bf16.msra.mxu0 0
        %2818 = vmatprep.subr.bf16.mxu0 0
        %2819 = vmatpush1.bf16.msra.mxu0 0
        %2820 = vmatprep.subr.bf16.mxu0 0
        %2821 = vmatpush1.bf16.msra.mxu0 0
        %2822 = vmatprep.subr.bf16.mxu0 0
        %2823 = vmatpush1.bf16.msra.mxu0 0
        %2824 = vmatprep.mubr.bf16.mxu0 0
        %2825 = vmatmul.mubr.bf16.gmra.mrb[0].mxu0 %v2784
        %v2826 = vpop.f32.mrb[0].mxu0
        %v2827 = vadd.f32 0.0, %v2826
        %v2828 = vpop.f32.mrb[0].mxu0
        %v2829 = vpop.f32.mrb[0].mxu0
        %v2830 = vadd.f32 0.0, %v2829
        %v2831 = vpop.f32.mrb[0].mxu0
        %2832 = vmatprep.mubr.bf16.mxu0 0
        %2833 = vmatmul.mubr.bf16.gmra.mrb[0].mxu0 %v2787
        %v2834 = vpop.f32.mrb[0].mxu0
        %v2835 = vadd.f32 0.0, %v2834
        %v2836 = vpop.f32.mrb[0].mxu0
        %v2837 = vpop.f32.mrb[0].mxu0
        %v2838 = vpop.f32.mrb[0].mxu0
        %2839 = vdwg.mxu0
        %2840 = vrot.lane.b32.xlu0 %v2356, 112
        %v2841 = vpop.permute.xlu0 %2840
        %2842 = vrot.lane.b32.xlu0 %v2357, 112
        %v2843 = vpop.permute.xlu0 %2842
        %v2846 = vsel %vm1036, %v2772, 0
        %v2849 = vsel %vm1036, %v2773, 0
        %v2852 = vand.u32 %v2843, %v1191
        %2854 = vmatprep.subr.bf16.mxu0 0
        %2855 = vmatpush1.bf16.msra.mxu0 %v2841
        %2856 = vmatprep.subr.bf16.mxu0 0
        %2857 = vmatpush1.bf16.msra.mxu0 %v2852
        %2858 = vmatprep.subr.bf16.mxu0 0
        %2859 = vmatpush1.bf16.msra.mxu0 0
        %2860 = vmatprep.subr.bf16.mxu0 0
        %2861 = vmatpush1.bf16.msra.mxu0 0
        %2862 = vmatprep.subr.bf16.mxu0 0
        %2863 = vmatpush1.bf16.msra.mxu0 0
        %2864 = vmatprep.subr.bf16.mxu0 0
        %2865 = vmatpush1.bf16.msra.mxu0 0
        %2866 = vmatprep.subr.bf16.mxu0 0
        %2867 = vmatpush1.bf16.msra.mxu0 0
        %2868 = vmatprep.subr.bf16.mxu0 0
        %2869 = vmatpush1.bf16.msra.mxu0 0
        %2870 = vmatprep.subr.bf16.mxu0 0
        %2871 = vmatpush1.bf16.msra.mxu0 0
        %2872 = vmatprep.subr.bf16.mxu0 0
        %2873 = vmatpush1.bf16.msra.mxu0 0
        %2874 = vmatprep.subr.bf16.mxu0 0
        %2875 = vmatpush1.bf16.msra.mxu0 0
        %2876 = vmatprep.subr.bf16.mxu0 0
        %2877 = vmatpush1.bf16.msra.mxu0 0
        %2878 = vmatprep.subr.bf16.mxu0 0
        %2879 = vmatpush1.bf16.msra.mxu0 0
        %2880 = vmatprep.subr.bf16.mxu0 0
        %2881 = vmatpush1.bf16.msra.mxu0 0
        %2882 = vmatprep.subr.bf16.mxu0 0
        %2883 = vmatpush1.bf16.msra.mxu0 0
        %2884 = vmatprep.subr.bf16.mxu0 0
        %2885 = vmatpush1.bf16.msra.mxu0 0
        %2886 = vmatprep.mubr.bf16.mxu0 0
        %2887 = vmatmul.mubr.bf16.gmra.mrb[0].mxu0 %v2846
        %v2888 = vpop.f32.mrb[0].mxu0
        %v2889 = vadd.f32 0.0, %v2888
        %v2890 = vpop.f32.mrb[0].mxu0
        %v2891 = vpop.f32.mrb[0].mxu0
        %v2892 = vadd.f32 0.0, %v2891
        %v2893 = vpop.f32.mrb[0].mxu0
        %2894 = vmatprep.mubr.bf16.mxu0 0
        %2895 = vmatmul.mubr.bf16.gmra.mrb[0].mxu0 %v2849
        %v2896 = vpop.f32.mrb[0].mxu0
        %v2897 = vadd.f32 0.0, %v2896
        %v2898 = vpop.f32.mrb[0].mxu0
        %v2899 = vpop.f32.mrb[0].mxu0
        %v2900 = vpop.f32.mrb[0].mxu0
        %2901 = vdwg.mxu0
        %2902 = vrot.lane.b32.xlu0 %v2358, 112
        %v2903 = vpop.permute.xlu0 %2902
        %2904 = vrot.lane.b32.xlu0 %v2359, 112
        %v2905 = vpop.permute.xlu0 %2904
        %v2908 = vsel %vm1036, %v2774, 0
        %v2911 = vsel %vm1036, %v2775, 0
        %v2914 = vand.u32 %v2905, %v1191
        %2916 = vmatprep.subr.bf16.mxu0 0
        %2917 = vmatpush1.bf16.msra.mxu0 %v2903
        %2918 = vmatprep.subr.bf16.mxu0 0
        %2919 = vmatpush1.bf16.msra.mxu0 %v2914
        %2920 = vmatprep.subr.bf16.mxu0 0
        %2921 = vmatpush1.bf16.msra.mxu0 0
        %2922 = vmatprep.subr.bf16.mxu0 0
        %2923 = vmatpush1.bf16.msra.mxu0 0
        %2924 = vmatprep.subr.bf16.mxu0 0
        %2925 = vmatpush1.bf16.msra.mxu0 0
        %2926 = vmatprep.subr.bf16.mxu0 0
        %2927 = vmatpush1.bf16.msra.mxu0 0
        %2928 = vmatprep.subr.bf16.mxu0 0
        %2929 = vmatpush1.bf16.msra.mxu0 0
        %2930 = vmatprep.subr.bf16.mxu0 0
        %2931 = vmatpush1.bf16.msra.mxu0 0
        %2932 = vmatprep.subr.bf16.mxu0 0
        %2933 = vmatpush1.bf16.msra.mxu0 0
        %2934 = vmatprep.subr.bf16.mxu0 0
        %2935 = vmatpush1.bf16.msra.mxu0 0
        %2936 = vmatprep.subr.bf16.mxu0 0
        %2937 = vmatpush1.bf16.msra.mxu0 0
        %2938 = vmatprep.subr.bf16.mxu0 0
        %2939 = vmatpush1.bf16.msra.mxu0 0
        %2940 = vmatprep.subr.bf16.mxu0 0
        %2941 = vmatpush1.bf16.msra.mxu0 0
        %2942 = vmatprep.subr.bf16.mxu0 0
        %2943 = vmatpush1.bf16.msra.mxu0 0
        %2944 = vmatprep.subr.bf16.mxu0 0
        %2945 = vmatpush1.bf16.msra.mxu0 0
        %2946 = vmatprep.subr.bf16.mxu0 0
        %2947 = vmatpush1.bf16.msra.mxu0 0
        %2948 = vmatprep.mubr.bf16.mxu0 0
        %2949 = vmatmul.mubr.bf16.gmra.mrb[0].mxu0 %v2908
        %v2950 = vpop.f32.mrb[0].mxu0
        %v2951 = vadd.f32 0.0, %v2950
        %v2952 = vpop.f32.mrb[0].mxu0
        %v2953 = vpop.f32.mrb[0].mxu0
        %v2954 = vadd.f32 0.0, %v2953
        %v2955 = vpop.f32.mrb[0].mxu0
        %2956 = vmatprep.mubr.bf16.mxu0 0
        %2957 = vmatmul.mubr.bf16.gmra.mrb[0].mxu0 %v2911
        %v2958 = vpop.f32.mrb[0].mxu0
        %v2959 = vadd.f32 0.0, %v2958
        %v2960 = vpop.f32.mrb[0].mxu0
        %v2961 = vpop.f32.mrb[0].mxu0
        %v2962 = vpop.f32.mrb[0].mxu0
        %2963 = vdwg.mxu0
        %2964 = vrot.lane.b32.xlu0 %v2360, 112
        %v2965 = vpop.permute.xlu0 %2964
        %2966 = vrot.lane.b32.xlu0 %v2361, 112
        %v2967 = vpop.permute.xlu0 %2966
        %v2970 = vsel %vm1036, %v2776, 0
        %v2973 = vsel %vm1036, %v2777, 0
        %v2976 = vand.u32 %v2967, %v1191
        %2978 = vmatprep.subr.bf16.mxu0 0
        %2979 = vmatpush1.bf16.msra.mxu0 %v2965
        %2980 = vmatprep.subr.bf16.mxu0 0
        %2981 = vmatpush1.bf16.msra.mxu0 %v2976
        %2982 = vmatprep.subr.bf16.mxu0 0
        %2983 = vmatpush1.bf16.msra.mxu0 0
        %2984 = vmatprep.subr.bf16.mxu0 0
        %2985 = vmatpush1.bf16.msra.mxu0 0
        %2986 = vmatprep.subr.bf16.mxu0 0
        %2987 = vmatpush1.bf16.msra.mxu0 0
        %2988 = vmatprep.subr.bf16.mxu0 0
        %2989 = vmatpush1.bf16.msra.mxu0 0
        %2990 = vmatprep.subr.bf16.mxu0 0
        %2991 = vmatpush1.bf16.msra.mxu0 0
        %2992 = vmatprep.subr.bf16.mxu0 0
        %2993 = vmatpush1.bf16.msra.mxu0 0
        %2994 = vmatprep.subr.bf16.mxu0 0
        %2995 = vmatpush1.bf16.msra.mxu0 0
        %2996 = vmatprep.subr.bf16.mxu0 0
        %2997 = vmatpush1.bf16.msra.mxu0 0
        %2998 = vmatprep.subr.bf16.mxu0 0
        %2999 = vmatpush1.bf16.msra.mxu0 0
        %3000 = vmatprep.subr.bf16.mxu0 0
        %3001 = vmatpush1.bf16.msra.mxu0 0
        %3002 = vmatprep.subr.bf16.mxu0 0
        %3003 = vmatpush1.bf16.msra.mxu0 0
        %3004 = vmatprep.subr.bf16.mxu0 0
        %3005 = vmatpush1.bf16.msra.mxu0 0
        %3006 = vmatprep.subr.bf16.mxu0 0
        %3007 = vmatpush1.bf16.msra.mxu0 0
        %3008 = vmatprep.subr.bf16.mxu0 0
        %3009 = vmatpush1.bf16.msra.mxu0 0
        %3010 = vmatprep.mubr.bf16.mxu0 0
        %3011 = vmatmul.mubr.bf16.gmra.mrb[0].mxu0 %v2970
        %v3012 = vpop.f32.mrb[0].mxu0
        %v3013 = vadd.f32 0.0, %v3012
        %v3014 = vpop.f32.mrb[0].mxu0
        %v3015 = vpop.f32.mrb[0].mxu0
        %v3016 = vadd.f32 0.0, %v3015
        %v3017 = vpop.f32.mrb[0].mxu0
        %3018 = vmatprep.mubr.bf16.mxu0 0
        %3019 = vmatmul.mubr.bf16.gmra.mrb[0].mxu0 %v2973
        %v3020 = vpop.f32.mrb[0].mxu0
        %v3021 = vadd.f32 0.0, %v3020
        %v3022 = vpop.f32.mrb[0].mxu0
        %v3023 = vpop.f32.mrb[0].mxu0
        %v3024 = vpop.f32.mrb[0].mxu0
        %3025 = vdwg.mxu0
        %v3026 = vpack.c.bf16 %v2830, %v2827
        %v3027 = vpack.c.bf16 %v2835, %v2835
        %v3028 = vpack.c.bf16 %v2892, %v2889
        %v3029 = vpack.c.bf16 %v2897, %v2897
        %v3030 = vpack.c.bf16 %v2954, %v2951
        %v3031 = vpack.c.bf16 %v2959, %v2959
        %v3032 = vpack.c.bf16 %v3016, %v3013
        %v3033 = vpack.c.bf16 %v3021, %v3021
        %s3034 = scalar_lea.vmem %s4, 16
        %v3035 = vld [vmem:[%s3034] sm:$0xf]
        %v3036 = vld [vmem:[%s3034 + $0x4] sm:$0xf]
        %v3037 = vld [vmem:[%s3034 + $0x8] sm:$0xf]
        %v3038 = vld [vmem:[%s3034 + $0xc] sm:$0xf]
        %v3040 = vsel %vm765, %v3026, 0
        %v3043 = vsel %vm765, %v3027, 0
        %v3046 = vsel %vm1447, %v3035, 0
        %3048 = vmatprep.subr.bf16.mxu0 0
        %3049 = vmatpush1.bf16.msra.mxu0 %v3046
        %3050 = vmatprep.subr.bf16.mxu0 0
        %3051 = vmatpush1.bf16.msra.mxu0 0
        %3052 = vmatprep.subr.bf16.mxu0 0
        %3053 = vmatpush1.bf16.msra.mxu0 0
        %3054 = vmatprep.subr.bf16.mxu0 0
        %3055 = vmatpush1.bf16.msra.mxu0 0
        %3056 = vmatprep.subr.bf16.mxu0 0
        %3057 = vmatpush1.bf16.msra.mxu0 0
        %3058 = vmatprep.subr.bf16.mxu0 0
        %3059 = vmatpush1.bf16.msra.mxu0 0
        %3060 = vmatprep.subr.bf16.mxu0 0
        %3061 = vmatpush1.bf16.msra.mxu0 0
        %3062 = vmatprep.subr.bf16.mxu0 0
        %3063 = vmatpush1.bf16.msra.mxu0 0
        %3064 = vmatprep.subr.bf16.mxu0 0
        %3065 = vmatpush1.bf16.msra.mxu0 0
        %3066 = vmatprep.subr.bf16.mxu0 0
        %3067 = vmatpush1.bf16.msra.mxu0 0
        %3068 = vmatprep.subr.bf16.mxu0 0
        %3069 = vmatpush1.bf16.msra.mxu0 0
        %3070 = vmatprep.subr.bf16.mxu0 0
        %3071 = vmatpush1.bf16.msra.mxu0 0
        %3072 = vmatprep.subr.bf16.mxu0 0
        %3073 = vmatpush1.bf16.msra.mxu0 0
        %3074 = vmatprep.subr.bf16.mxu0 0
        %3075 = vmatpush1.bf16.msra.mxu0 0
        %3076 = vmatprep.subr.bf16.mxu0 0
        %3077 = vmatpush1.bf16.msra.mxu0 0
        %3078 = vmatprep.subr.bf16.mxu0 0
        %3079 = vmatpush1.bf16.msra.mxu0 0
        %3080 = vmatprep.mubr.bf16.mxu0 0
        %3081 = vmatmul.mubr.bf16.gmra.mrb[0].mxu0 %v3040
        %v3082 = vpop.f32.mrb[0].mxu0
        %v3083 = vadd.f32 0.0, %v3082
        %v3084 = vpop.f32.mrb[0].mxu0
        %v3085 = vpop.f32.mrb[0].mxu0
        %v3086 = vadd.f32 0.0, %v3085
        %v3087 = vpop.f32.mrb[0].mxu0
        %3088 = vmatprep.mubr.bf16.mxu0 0
        %3089 = vmatmul.mubr.bf16.gmra.mrb[0].mxu0 %v3043
        %v3090 = vpop.f32.mrb[0].mxu0
        %v3091 = vadd.f32 0.0, %v3090
        %v3092 = vpop.f32.mrb[0].mxu0
        %v3093 = vpop.f32.mrb[0].mxu0
        %v3094 = vpop.f32.mrb[0].mxu0
        %3095 = vdwg.mxu0
        %v3097 = vsel %vm765, %v3028, 0
        %v3100 = vsel %vm765, %v3029, 0
        %v3103 = vsel %vm1447, %v3036, 0
        %3105 = vmatprep.subr.bf16.mxu0 0
        %3106 = vmatpush1.bf16.msra.mxu0 %v3103
        %3107 = vmatprep.subr.bf16.mxu0 0
        %3108 = vmatpush1.bf16.msra.mxu0 0
        %3109 = vmatprep.subr.bf16.mxu0 0
        %3110 = vmatpush1.bf16.msra.mxu0 0
        %3111 = vmatprep.subr.bf16.mxu0 0
        %3112 = vmatpush1.bf16.msra.mxu0 0
        %3113 = vmatprep.subr.bf16.mxu0 0
        %3114 = vmatpush1.bf16.msra.mxu0 0
        %3115 = vmatprep.subr.bf16.mxu0 0
        %3116 = vmatpush1.bf16.msra.mxu0 0
        %3117 = vmatprep.subr.bf16.mxu0 0
        %3118 = vmatpush1.bf16.msra.mxu0 0
        %3119 = vmatprep.subr.bf16.mxu0 0
        %3120 = vmatpush1.bf16.msra.mxu0 0
        %3121 = vmatprep.subr.bf16.mxu0 0
        %3122 = vmatpush1.bf16.msra.mxu0 0
        %3123 = vmatprep.subr.bf16.mxu0 0
        %3124 = vmatpush1.bf16.msra.mxu0 0
        %3125 = vmatprep.subr.bf16.mxu0 0
        %3126 = vmatpush1.bf16.msra.mxu0 0
        %3127 = vmatprep.subr.bf16.mxu0 0
        %3128 = vmatpush1.bf16.msra.mxu0 0
        %3129 = vmatprep.subr.bf16.mxu0 0
        %3130 = vmatpush1.bf16.msra.mxu0 0
        %3131 = vmatprep.subr.bf16.mxu0 0
        %3132 = vmatpush1.bf16.msra.mxu0 0
        %3133 = vmatprep.subr.bf16.mxu0 0
        %3134 = vmatpush1.bf16.msra.mxu0 0
        %3135 = vmatprep.subr.bf16.mxu0 0
        %3136 = vmatpush1.bf16.msra.mxu0 0
        %3137 = vmatprep.mubr.bf16.mxu0 0
        %3138 = vmatmul.mubr.bf16.gmra.mrb[0].mxu0 %v3097
        %v3139 = vpop.f32.mrb[0].mxu0
        %v3140 = vadd.f32 0.0, %v3139
        %v3141 = vpop.f32.mrb[0].mxu0
        %v3142 = vpop.f32.mrb[0].mxu0
        %v3143 = vadd.f32 0.0, %v3142
        %v3144 = vpop.f32.mrb[0].mxu0
        %3145 = vmatprep.mubr.bf16.mxu0 0
        %3146 = vmatmul.mubr.bf16.gmra.mrb[0].mxu0 %v3100
        %v3147 = vpop.f32.mrb[0].mxu0
        %v3148 = vadd.f32 0.0, %v3147
        %v3149 = vpop.f32.mrb[0].mxu0
        %v3150 = vpop.f32.mrb[0].mxu0
        %v3151 = vpop.f32.mrb[0].mxu0
        %3152 = vdwg.mxu0
        %v3154 = vsel %vm765, %v3030, 0
        %v3157 = vsel %vm765, %v3031, 0
        %v3160 = vsel %vm1447, %v3037, 0
        %3162 = vmatprep.subr.bf16.mxu0 0
        %3163 = vmatpush1.bf16.msra.mxu0 %v3160
        %3164 = vmatprep.subr.bf16.mxu0 0
        %3165 = vmatpush1.bf16.msra.mxu0 0
        %3166 = vmatprep.subr.bf16.mxu0 0
        %3167 = vmatpush1.bf16.msra.mxu0 0
        %3168 = vmatprep.subr.bf16.mxu0 0
        %3169 = vmatpush1.bf16.msra.mxu0 0
        %3170 = vmatprep.subr.bf16.mxu0 0
        %3171 = vmatpush1.bf16.msra.mxu0 0
        %3172 = vmatprep.subr.bf16.mxu0 0
        %3173 = vmatpush1.bf16.msra.mxu0 0
        %3174 = vmatprep.subr.bf16.mxu0 0
        %3175 = vmatpush1.bf16.msra.mxu0 0
        %3176 = vmatprep.subr.bf16.mxu0 0
        %3177 = vmatpush1.bf16.msra.mxu0 0
        %3178 = vmatprep.subr.bf16.mxu0 0
        %3179 = vmatpush1.bf16.msra.mxu0 0
        %3180 = vmatprep.subr.bf16.mxu0 0
        %3181 = vmatpush1.bf16.msra.mxu0 0
        %3182 = vmatprep.subr.bf16.mxu0 0
        %3183 = vmatpush1.bf16.msra.mxu0 0
        %3184 = vmatprep.subr.bf16.mxu0 0
        %3185 = vmatpush1.bf16.msra.mxu0 0
        %3186 = vmatprep.subr.bf16.mxu0 0
        %3187 = vmatpush1.bf16.msra.mxu0 0
        %3188 = vmatprep.subr.bf16.mxu0 0
        %3189 = vmatpush1.bf16.msra.mxu0 0
        %3190 = vmatprep.subr.bf16.mxu0 0
        %3191 = vmatpush1.bf16.msra.mxu0 0
        %3192 = vmatprep.subr.bf16.mxu0 0
        %3193 = vmatpush1.bf16.msra.mxu0 0
        %3194 = vmatprep.mubr.bf16.mxu0 0
        %3195 = vmatmul.mubr.bf16.gmra.mrb[0].mxu0 %v3154
        %v3196 = vpop.f32.mrb[0].mxu0
        %v3197 = vadd.f32 0.0, %v3196
        %v3198 = vpop.f32.mrb[0].mxu0
        %v3199 = vpop.f32.mrb[0].mxu0
        %v3200 = vadd.f32 0.0, %v3199
        %v3201 = vpop.f32.mrb[0].mxu0
        %3202 = vmatprep.mubr.bf16.mxu0 0
        %3203 = vmatmul.mubr.bf16.gmra.mrb[0].mxu0 %v3157
        %v3204 = vpop.f32.mrb[0].mxu0
        %v3205 = vadd.f32 0.0, %v3204
        %v3206 = vpop.f32.mrb[0].mxu0
        %v3207 = vpop.f32.mrb[0].mxu0
        %v3208 = vpop.f32.mrb[0].mxu0
        %3209 = vdwg.mxu0
        %v3211 = vsel %vm765, %v3032, 0
        %v3214 = vsel %vm765, %v3033, 0
        %v3217 = vsel %vm1447, %v3038, 0
        %3219 = vmatprep.subr.bf16.mxu0 0
        %3220 = vmatpush1.bf16.msra.mxu0 %v3217
        %3221 = vmatprep.subr.bf16.mxu0 0
        %3222 = vmatpush1.bf16.msra.mxu0 0
        %3223 = vmatprep.subr.bf16.mxu0 0
        %3224 = vmatpush1.bf16.msra.mxu0 0
        %3225 = vmatprep.subr.bf16.mxu0 0
        %3226 = vmatpush1.bf16.msra.mxu0 0
        %3227 = vmatprep.subr.bf16.mxu0 0
        %3228 = vmatpush1.bf16.msra.mxu0 0
        %3229 = vmatprep.subr.bf16.mxu0 0
        %3230 = vmatpush1.bf16.msra.mxu0 0
        %3231 = vmatprep.subr.bf16.mxu0 0
        %3232 = vmatpush1.bf16.msra.mxu0 0
        %3233 = vmatprep.subr.bf16.mxu0 0
        %3234 = vmatpush1.bf16.msra.mxu0 0
        %3235 = vmatprep.subr.bf16.mxu0 0
        %3236 = vmatpush1.bf16.msra.mxu0 0
        %3237 = vmatprep.subr.bf16.mxu0 0
        %3238 = vmatpush1.bf16.msra.mxu0 0
        %3239 = vmatprep.subr.bf16.mxu0 0
        %3240 = vmatpush1.bf16.msra.mxu0 0
        %3241 = vmatprep.subr.bf16.mxu0 0
        %3242 = vmatpush1.bf16.msra.mxu0 0
        %3243 = vmatprep.subr.bf16.mxu0 0
        %3244 = vmatpush1.bf16.msra.mxu0 0
        %3245 = vmatprep.subr.bf16.mxu0 0
        %3246 = vmatpush1.bf16.msra.mxu0 0
        %3247 = vmatprep.subr.bf16.mxu0 0
        %3248 = vmatpush1.bf16.msra.mxu0 0
        %3249 = vmatprep.subr.bf16.mxu0 0
        %3250 = vmatpush1.bf16.msra.mxu0 0
        %3251 = vmatprep.mubr.bf16.mxu0 0
        %3252 = vmatmul.mubr.bf16.gmra.mrb[0].mxu0 %v3211
        %v3253 = vpop.f32.mrb[0].mxu0
        %v3254 = vadd.f32 0.0, %v3253
        %v3255 = vpop.f32.mrb[0].mxu0
        %v3256 = vpop.f32.mrb[0].mxu0
        %v3257 = vadd.f32 0.0, %v3256
        %v3258 = vpop.f32.mrb[0].mxu0
        %3259 = vmatprep.mubr.bf16.mxu0 0
        %3260 = vmatmul.mubr.bf16.gmra.mrb[0].mxu0 %v3214
        %v3261 = vpop.f32.mrb[0].mxu0
        %v3262 = vadd.f32 0.0, %v3261
        %v3263 = vpop.f32.mrb[0].mxu0
        %v3264 = vpop.f32.mrb[0].mxu0
        %v3265 = vpop.f32.mrb[0].mxu0
        %3266 = vdwg.mxu0
        %v3267 = vsel %vm431, %v3083, 0.0
        %v3268 = vsel %vm431, %v3140, 0.0
        %v3269 = vadd.f32 %v3267, %v3268
        %v3270 = vsel %vm431, %v3197, 0.0
        %v3271 = vadd.f32 %v3269, %v3270
        %v3272 = vsel %vm431, %v3254, 0.0
        %v3273 = vadd.f32 %v3271, %v3272
        %v3274 = vsel %vm431, %v3086, 0.0
        %v3275 = vsel %vm431, %v3143, 0.0
        %v3276 = vadd.f32 %v3274, %v3275
        %v3277 = vsel %vm431, %v3200, 0.0
        %v3278 = vadd.f32 %v3276, %v3277
        %v3279 = vsel %vm431, %v3257, 0.0
        %v3280 = vadd.f32 %v3278, %v3279
        %v3281 = vsel %vm438, %v3091, 0.0
        %v3282 = vsel %vm438, %v3148, 0.0
        %v3283 = vadd.f32 %v3281, %v3282
        %v3284 = vsel %vm438, %v3205, 0.0
        %v3285 = vadd.f32 %v3283, %v3284
        %v3286 = vsel %vm438, %v3262, 0.0
        %v3287 = vadd.f32 %v3285, %v3286
        %v3288 = vadd.f32 %v2026, %v3273
        %v3289 = vadd.f32 %v2027, %v3280
        %v3290 = vadd.f32 %v2028, %v3287
        %v3291 = vlaneseq
        %v3292 = vshrl.u32 %v3291, 7
        %v3293 = vsub.s32 0, %v3292
        %v3294 = vrot.slane %v2031, %v3293
        %v3295 = vadd.f32 %v3288, %v3294
        %v3296 = vadd.f32 %v3289, %v3294
        %v3297 = vadd.f32 %v3290, %v3294
        %v3298 = vsel %vm431, %v3295, 0.0
        %3299 = vadd.xlane.f32.xlu0 %v3298
        %v3300 = vpop.xlane.xlu0 %3299
        %v3301 = vsel %vm431, %v3296, 0.0
        %3302 = vadd.xlane.f32.xlu0 %v3301
        %v3303 = vpop.xlane.xlu0 %3302
        %v3304 = vsel %vm438, %v3297, 0.0
        %3305 = vadd.xlane.f32.xlu0 %v3304
        %v3306 = vpop.xlane.xlu0 %3305
        %v3307 = vmul.f32 %v3300, %v442
        %v3308 = vmul.f32 %v3303, %v442
        %v3309 = vmul.f32 %v3306, %v442
        %v3310 = vsub.f32 %v3295, %v3307
        %v3311 = vsub.f32 %v3296, %v3308
        %v3312 = vsub.f32 %v3297, %v3309
        %v3313 = vmul.f32 %v3310, %v3310
        %v3314 = vmul.f32 %v3311, %v3311
        %v3315 = vmul.f32 %v3312, %v3312
        %v3316 = vsel %vm431, %v3313, 0.0
        %3317 = vadd.xlane.f32.xlu0 %v3316
        %v3318 = vpop.xlane.xlu0 %3317
        %v3319 = vsel %vm431, %v3314, 0.0
        %3320 = vadd.xlane.f32.xlu0 %v3319
        %v3321 = vpop.xlane.xlu0 %3320
        %v3322 = vsel %vm438, %v3315, 0.0
        %3323 = vadd.xlane.f32.xlu0 %v3322
        %v3324 = vpop.xlane.xlu0 %3323
        %v3325 = vmul.f32 %v3318, %v442
        %v3326 = vmul.f32 %v3321, %v442
        %v3327 = vmul.f32 %v3324, %v442
        %v3328 = vadd.f32 %v3325, 1e-05
        %v3329 = vadd.f32 %v3326, 1e-05
        %v3330 = vadd.f32 %v3327, 1e-05
        %v3331 = vrsqrt.pop %v3328
        %v3332 = vrsqrt.pop %v3329
        %v3333 = vrsqrt.pop %v3330
        %v3334 = vmul.f32 %v3310, %v3331
        %v3335 = vmul.f32 %v3311, %v3332
        %v3336 = vmul.f32 %v3312, %v3333
        %v3337 = vlaneseq
        %v3338 = vshrl.u32 %v3337, 7
        %v3339 = vsub.s32 0, %v3338
        %v3340 = vrot.slane %v2032, %v3339
        %v3341 = vmul.f32 %v3334, %v3340
        %v3342 = vmul.f32 %v3335, %v3340
        %v3343 = vmul.f32 %v3336, %v3340
        %v3344 = vlaneseq
        %v3345 = vshrl.u32 %v3344, 7
        %v3346 = vsub.s32 0, %v3345
        %v3347 = vrot.slane %v2033, %v3346
        %v3348 = vadd.f32 %v3341, %v3347
        %v3349 = vadd.f32 %v3342, %v3347
        %v3350 = vadd.f32 %v3343, %v3347
        %v3351 = vpack.c.bf16 %v3349, %v3348
        %v3352 = vpack.c.bf16 %v3350, %v3350
        %s3353 = scalar_lea.vmem %s5, 16
        %v3354 = vld [vmem:[%s3353] sm:$0xf]
        %v3355 = vld [vmem:[%s3353 + $0x4] sm:$0xf]
        %v3356 = vld [vmem:[%s3353 + $0x8] sm:$0xf]
        %v3357 = vld [vmem:[%s3353 + $0xc] sm:$0xf]
        %v3358 = vlaneseq
        %v3359 = vshrl.u32 %v3358, 7
        %v3360 = vsub.s32 0, %v3359
        %v3361 = vrot.slane %v2034, %v3360
        %v3366 = vunpack.c.l.b16 %v3354
        %v3367 = vunpack.c.l.b16 %v3355
        %v3368 = vunpack.c.l.b16 %v3356
        %v3369 = vunpack.c.l.b16 %v3357
        %v3370 = vpack.c.b16 %v3367, %v3366
        %v3371 = vpack.c.b16 %v3369, %v3368
        %v3375 = vsel %vm431, %v3351, 0
        %v3378 = vsel %vm431, %v3352, 0
        %3380 = vmatprep.subr.bf16.mxu0 0
        %3381 = vmatpush1.bf16.msra.mxu0 %v3370
        %3382 = vmatprep.subr.bf16.mxu0 0
        %3383 = vmatpush1.bf16.msra.mxu0 %v3371
        %3384 = vmatprep.subr.bf16.mxu0 0
        %3385 = vmatpush1.bf16.msra.mxu0 0
        %3386 = vmatprep.subr.bf16.mxu0 0
        %3387 = vmatpush1.bf16.msra.mxu0 0
        %3388 = vmatprep.subr.bf16.mxu0 0
        %3389 = vmatpush1.bf16.msra.mxu0 0
        %3390 = vmatprep.subr.bf16.mxu0 0
        %3391 = vmatpush1.bf16.msra.mxu0 0
        %3392 = vmatprep.subr.bf16.mxu0 0
        %3393 = vmatpush1.bf16.msra.mxu0 0
        %3394 = vmatprep.subr.bf16.mxu0 0
        %3395 = vmatpush1.bf16.msra.mxu0 0
        %3396 = vmatprep.subr.bf16.mxu0 0
        %3397 = vmatpush1.bf16.msra.mxu0 0
        %3398 = vmatprep.subr.bf16.mxu0 0
        %3399 = vmatpush1.bf16.msra.mxu0 0
        %3400 = vmatprep.subr.bf16.mxu0 0
        %3401 = vmatpush1.bf16.msra.mxu0 0
        %3402 = vmatprep.subr.bf16.mxu0 0
        %3403 = vmatpush1.bf16.msra.mxu0 0
        %3404 = vmatprep.subr.bf16.mxu0 0
        %3405 = vmatpush1.bf16.msra.mxu0 0
        %3406 = vmatprep.subr.bf16.mxu0 0
        %3407 = vmatpush1.bf16.msra.mxu0 0
        %3408 = vmatprep.subr.bf16.mxu0 0
        %3409 = vmatpush1.bf16.msra.mxu0 0
        %3410 = vmatprep.subr.bf16.mxu0 0
        %3411 = vmatpush1.bf16.msra.mxu0 0
        %3412 = vmatprep.mubr.bf16.mxu0 0
        %3413 = vmatmul.mubr.bf16.gmra.mrb[0].mxu0 %v3375
        %v3414 = vpop.f32.mrb[0].mxu0
        %v3415 = vadd.f32 %v3361, %v3414
        %v3416 = vpop.f32.mrb[0].mxu0
        %v3417 = vpop.f32.mrb[0].mxu0
        %v3418 = vadd.f32 %v3361, %v3417
        %v3419 = vpop.f32.mrb[0].mxu0
        %3420 = vmatprep.mubr.bf16.mxu0 0
        %3421 = vmatmul.mubr.bf16.gmra.mrb[0].mxu0 %v3378
        %v3422 = vpop.f32.mrb[0].mxu0
        %v3423 = vadd.f32 %v3361, %v3422
        %v3424 = vpop.f32.mrb[0].mxu0
        %v3425 = vpop.f32.mrb[0].mxu0
        %v3426 = vpop.f32.mrb[0].mxu0
        %3427 = vdwg.mxu0
        %v3428 = vmul.f32 %v3415, 0.5
        %v3429 = vmul.f32 %v3418, 0.5
        %v3430 = vmul.f32 %v3423, 0.5
        %v3431 = vmul.f32 %v3415, 0.70710677
        %v3432 = vmul.f32 %v3418, 0.70710677
        %v3433 = vmul.f32 %v3423, 0.70710677
        %v3434 = vand.u32 2147483647, %v3431
        %v3435 = vand.u32 2147483647, %v3432
        %v3436 = vand.u32 2147483647, %v3433
        %v3437 = vmul.f32 %v3434, 0.3275911
        %v3438 = vmul.f32 %v3435, 0.3275911
        %v3439 = vmul.f32 %v3436, 0.3275911
        %v3440 = vadd.f32 %v3437, 1.0
        %v3441 = vadd.f32 %v3438, 1.0
        %v3442 = vadd.f32 %v3439, 1.0
        %v3443 = vrcp.pop %v3440
        %v3444 = vrcp.pop %v3441
        %v3445 = vrcp.pop %v3442
        %v3446 = vmul.f32 %v3443, 1.0614054
        %v3447 = vmul.f32 %v3444, 1.0614054
        %v3448 = vmul.f32 %v3445, 1.0614054
        %v3449 = vadd.f32 %v3446, -1.4531521
        %v3450 = vadd.f32 %v3447, -1.4531521
        %v3451 = vadd.f32 %v3448, -1.4531521
        %v3452 = vmul.f32 %v3449, %v3443
        %v3453 = vmul.f32 %v3450, %v3444
        %v3454 = vmul.f32 %v3451, %v3445
        %v3455 = vadd.f32 %v3452, 1.4214138
        %v3456 = vadd.f32 %v3453, 1.4214138
        %v3457 = vadd.f32 %v3454, 1.4214138
        %v3458 = vmul.f32 %v3455, %v3443
        %v3459 = vmul.f32 %v3456, %v3444
        %v3460 = vmul.f32 %v3457, %v3445
        %v3461 = vadd.f32 %v3458, -0.28449672
        %v3462 = vadd.f32 %v3459, -0.28449672
        %v3463 = vadd.f32 %v3460, -0.28449672
        %v3464 = vmul.f32 %v3461, %v3443
        %v3465 = vmul.f32 %v3462, %v3444
        %v3466 = vmul.f32 %v3463, %v3445
        %v3467 = vadd.f32 %v3464, 0.2548296
        %v3468 = vadd.f32 %v3465, 0.2548296
        %v3469 = vadd.f32 %v3466, 0.2548296
        %v3470 = vmul.f32 %v3467, %v3443
        %v3471 = vmul.f32 %v3468, %v3444
        %v3472 = vmul.f32 %v3469, %v3445
        %v3473 = vsub.f32 0.0, %v3434
        %v3474 = vsub.f32 0.0, %v3435
        %v3475 = vsub.f32 0.0, %v3436
        %v3476 = vmul.f32 %v3473, %v3434
        %v3477 = vmul.f32 %v3474, %v3435
        %v3478 = vmul.f32 %v3475, %v3436
        %v3479 = vmul.f32 %v3476, 1.442695
        %v3480 = vpow.pop %v3479
        %v3481 = vmul.f32 %v3477, 1.442695
        %v3482 = vpow.pop %v3481
        %v3483 = vmul.f32 %v3478, 1.442695
        %v3484 = vpow.pop %v3483
        %v3485 = vmul.f32 %v3470, %v3480
        %v3486 = vmul.f32 %v3471, %v3482
        %v3487 = vmul.f32 %v3472, %v3484
        %v3488 = vsub.f32 1.0, %v3485
        %v3489 = vsub.f32 1.0, %v3486
        %v3490 = vsub.f32 1.0, %v3487
        %vm3491 = vcmp.ge.f32.partialorder %v3431, 0.0
        %vm3492 = vcmp.ge.f32.partialorder %v3432, 0.0
        %vm3493 = vcmp.ge.f32.partialorder %v3433, 0.0
        %v3494 = vsub.f32 0.0, %v3488
        %v3495 = vsub.f32 0.0, %v3489
        %v3496 = vsub.f32 0.0, %v3490
        %v3497 = vsel %vm3491, %v3488, %v3494
        %v3498 = vsel %vm3492, %v3489, %v3495
        %v3499 = vsel %vm3493, %v3490, %v3496
        %v3500 = vadd.f32 %v3497, 1.0
        %v3501 = vadd.f32 %v3498, 1.0
        %v3502 = vadd.f32 %v3499, 1.0
        %v3503 = vmul.f32 %v3428, %v3500
        %v3504 = vmul.f32 %v3429, %v3501
        %v3505 = vmul.f32 %v3430, %v3502
        %v3506 = vpack.c.bf16 %v3504, %v3503
        %v3507 = vpack.c.bf16 %v3505, %v3505
        %s3508 = scalar_lea.vmem %s6, 64
        %v3509 = vld [vmem:[%s3508] sm:$0xf]
        %v3510 = vld [vmem:[%s3508 + $0x4] sm:$0xf]
        %v3511 = vld [vmem:[%s3508 + $0x8] sm:$0xf]
        %v3512 = vld [vmem:[%s3508 + $0xc] sm:$0xf]
        %v3513 = vld [vmem:[%s3508 + $0x10] sm:$0xf]
        %v3514 = vld [vmem:[%s3508 + $0x14] sm:$0xf]
        %v3515 = vld [vmem:[%s3508 + $0x18] sm:$0xf]
        %v3516 = vld [vmem:[%s3508 + $0x1c] sm:$0xf]
        %v3517 = vld [vmem:[%s3508 + $0x20] sm:$0xf]
        %v3518 = vld [vmem:[%s3508 + $0x24] sm:$0xf]
        %v3519 = vld [vmem:[%s3508 + $0x28] sm:$0xf]
        %v3520 = vld [vmem:[%s3508 + $0x2c] sm:$0xf]
        %v3521 = vld [vmem:[%s3508 + $0x30] sm:$0xf]
        %v3522 = vld [vmem:[%s3508 + $0x34] sm:$0xf]
        %v3523 = vld [vmem:[%s3508 + $0x38] sm:$0xf]
        %v3524 = vld [vmem:[%s3508 + $0x3c] sm:$0xf]
        %v3525 = vlaneseq
        %v3526 = vshrl.u32 %v3525, 7
        %v3527 = vsub.s32 0, %v3526
        %v3528 = vrot.slane %v2035, %v3527
        %v3545 = vunpack.c.l.b16 %v3509
        %v3546 = vunpack.c.l.b16 %v3510
        %v3547 = vunpack.c.l.b16 %v3511
        %v3548 = vunpack.c.l.b16 %v3512
        %v3549 = vunpack.c.l.b16 %v3513
        %v3550 = vunpack.c.l.b16 %v3514
        %v3551 = vunpack.c.l.b16 %v3515
        %v3552 = vunpack.c.l.b16 %v3516
        %v3553 = vunpack.c.l.b16 %v3517
        %v3554 = vunpack.c.l.b16 %v3518
        %v3555 = vunpack.c.l.b16 %v3519
        %v3556 = vunpack.c.l.b16 %v3520
        %v3557 = vunpack.c.l.b16 %v3521
        %v3558 = vunpack.c.l.b16 %v3522
        %v3559 = vunpack.c.l.b16 %v3523
        %v3560 = vunpack.c.l.b16 %v3524
        %v3561 = vpack.c.b16 %v3546, %v3545
        %v3562 = vpack.c.b16 %v3548, %v3547
        %v3563 = vpack.c.b16 %v3550, %v3549
        %v3564 = vpack.c.b16 %v3552, %v3551
        %v3565 = vpack.c.b16 %v3554, %v3553
        %v3566 = vpack.c.b16 %v3556, %v3555
        %v3567 = vpack.c.b16 %v3558, %v3557
        %v3568 = vpack.c.b16 %v3560, %v3559
        %3577 = vmatprep.subr.bf16.mxu0 0
        %3578 = vmatpush1.bf16.msra.mxu0 %v3561
        %3579 = vmatprep.subr.bf16.mxu0 0
        %3580 = vmatpush1.bf16.msra.mxu0 %v3562
        %3581 = vmatprep.subr.bf16.mxu0 0
        %3582 = vmatpush1.bf16.msra.mxu0 %v3563
        %3583 = vmatprep.subr.bf16.mxu0 0
        %3584 = vmatpush1.bf16.msra.mxu0 %v3564
        %3585 = vmatprep.subr.bf16.mxu0 0
        %3586 = vmatpush1.bf16.msra.mxu0 %v3565
        %3587 = vmatprep.subr.bf16.mxu0 0
        %3588 = vmatpush1.bf16.msra.mxu0 %v3566
        %3589 = vmatprep.subr.bf16.mxu0 0
        %3590 = vmatpush1.bf16.msra.mxu0 %v3567
        %3591 = vmatprep.subr.bf16.mxu0 0
        %3592 = vmatpush1.bf16.msra.mxu0 %v3568
        %3593 = vmatprep.subr.bf16.mxu0 0
        %3594 = vmatpush1.bf16.msra.mxu0 0
        %3595 = vmatprep.subr.bf16.mxu0 0
        %3596 = vmatpush1.bf16.msra.mxu0 0
        %3597 = vmatprep.subr.bf16.mxu0 0
        %3598 = vmatpush1.bf16.msra.mxu0 0
        %3599 = vmatprep.subr.bf16.mxu0 0
        %3600 = vmatpush1.bf16.msra.mxu0 0
        %3601 = vmatprep.subr.bf16.mxu0 0
        %3602 = vmatpush1.bf16.msra.mxu0 0
        %3603 = vmatprep.subr.bf16.mxu0 0
        %3604 = vmatpush1.bf16.msra.mxu0 0
        %3605 = vmatprep.subr.bf16.mxu0 0
        %3606 = vmatpush1.bf16.msra.mxu0 0
        %3607 = vmatprep.subr.bf16.mxu0 0
        %3608 = vmatpush1.bf16.msra.mxu0 0
        %3609 = vmatprep.mubr.bf16.mxu0 0
        %3610 = vmatmul.mubr.bf16.gmra.mrb[0].mxu0 %v3506
        %v3611 = vpop.f32.mrb[0].mxu0
        %v3612 = vadd.f32 %v3528, %v3611
        %v3613 = vpop.f32.mrb[0].mxu0
        %v3614 = vpop.f32.mrb[0].mxu0
        %v3615 = vpop.f32.mrb[0].mxu0
        %3616 = vmatprep.mubr.bf16.mxu0 0
        %3617 = vmatmul.mubr.bf16.gmra.mrb[0].mxu0 %v3507
        %v3618 = vpop.f32.mrb[0].mxu0
        %v3619 = vpop.f32.mrb[0].mxu0
        %v3620 = vpop.f32.mrb[0].mxu0
        %v3621 = vpop.f32.mrb[0].mxu0
        %3622 = vdwg.mxu0
        %v3623 = vadd.f32 %v3295, %v3612
        %v3624 = vld [vmem:[%s7 + $0xe] sm:$0x1]
        %v3625 = vld [vmem:[%s7 + $0xf] sm:$0x1]
        %v3626 = vsel %vm438, %v3623, 0.0
        %3627 = vadd.xlane.f32.xlu0 %v3626
        %v3628 = vpop.xlane.xlu0 %3627
        %v3629 = vmul.f32 %v3628, %v442
        %v3630 = vsub.f32 %v3623, %v3629
        %v3631 = vmul.f32 %v3630, %v3630
        %v3632 = vsel %vm438, %v3631, 0.0
        %3633 = vadd.xlane.f32.xlu0 %v3632
        %v3634 = vpop.xlane.xlu0 %3633
        %v3635 = vmul.f32 %v3634, %v442
        %v3636 = vadd.f32 %v3635, 1e-05
        %v3637 = vrsqrt.pop %v3636
        %v3638 = vmul.f32 %v3630, %v3637
        %v3639 = vmul.f32 %v3638, %v3624
        %v3640 = vadd.f32 %v3639, %v3625
        %v3641 = vpack.c.bf16 %v3640, %v3640
        %v3642 = vld [vmem:[%s8] sm:$0xf]
        %v3643 = vld [vmem:[%s8 + $0x4] sm:$0xf]
        %v3644 = vld [vmem:[%s8 + $0x8] sm:$0xf]
        %v3645 = vld [vmem:[%s8 + $0xc] sm:$0xf]
        %v3646 = vld [vmem:[%s7 + $0x10] sm:$0x1]
        %v3651 = vunpack.c.l.b16 %v3642
        %v3652 = vunpack.c.l.b16 %v3643
        %v3653 = vunpack.c.l.b16 %v3644
        %v3654 = vunpack.c.l.b16 %v3645
        %v3655 = vpack.c.b16 %v3652, %v3651
        %v3656 = vpack.c.b16 %v3654, %v3653
        %v3660 = vsel %vm431, %v3641, 0
        %3662 = vmatprep.subr.bf16.mxu0 0
        %3663 = vmatpush1.bf16.msra.mxu0 %v3655
        %3664 = vmatprep.subr.bf16.mxu0 0
        %3665 = vmatpush1.bf16.msra.mxu0 %v3656
        %3666 = vmatprep.subr.bf16.mxu0 0
        %3667 = vmatpush1.bf16.msra.mxu0 0
        %3668 = vmatprep.subr.bf16.mxu0 0
        %3669 = vmatpush1.bf16.msra.mxu0 0
        %3670 = vmatprep.subr.bf16.mxu0 0
        %3671 = vmatpush1.bf16.msra.mxu0 0
        %3672 = vmatprep.subr.bf16.mxu0 0
        %3673 = vmatpush1.bf16.msra.mxu0 0
        %3674 = vmatprep.subr.bf16.mxu0 0
        %3675 = vmatpush1.bf16.msra.mxu0 0
        %3676 = vmatprep.subr.bf16.mxu0 0
        %3677 = vmatpush1.bf16.msra.mxu0 0
        %3678 = vmatprep.subr.bf16.mxu0 0
        %3679 = vmatpush1.bf16.msra.mxu0 0
        %3680 = vmatprep.subr.bf16.mxu0 0
        %3681 = vmatpush1.bf16.msra.mxu0 0
        %3682 = vmatprep.subr.bf16.mxu0 0
        %3683 = vmatpush1.bf16.msra.mxu0 0
        %3684 = vmatprep.subr.bf16.mxu0 0
        %3685 = vmatpush1.bf16.msra.mxu0 0
        %3686 = vmatprep.subr.bf16.mxu0 0
        %3687 = vmatpush1.bf16.msra.mxu0 0
        %3688 = vmatprep.subr.bf16.mxu0 0
        %3689 = vmatpush1.bf16.msra.mxu0 0
        %3690 = vmatprep.subr.bf16.mxu0 0
        %3691 = vmatpush1.bf16.msra.mxu0 0
        %3692 = vmatprep.subr.bf16.mxu0 0
        %3693 = vmatpush1.bf16.msra.mxu0 0
        %3694 = vmatprep.mubr.bf16.mxu0 0
        %3695 = vmatmul.mubr.bf16.gmra.mrb[0].mxu0 %v3660
        %v3696 = vpop.f32.mrb[0].mxu0
        %v3697 = vadd.f32 %v3646, %v3696
        %v3698 = vpop.f32.mrb[0].mxu0
        %v3699 = vpop.f32.mrb[0].mxu0
        %v3700 = vpop.f32.mrb[0].mxu0
        %3701 = vdwg.mxu0
        %vm3702 = vcmask 73728
        %3703 = vst.msk [vmem:[%s324] sm:$0x1] %vm3702, %v3697
        %s3704 = sand.u32 %s225, 1
        %s3705 = scalar_lea.sflag [#allocation3], %s3704
        %s3706 = sand.u32 %s225, 1
        %s3707 = scalar_lea.vmem [#allocation2], %s3706
        // Predicated region
        $region57: #{vit_forward.1} parent=55 // pred_check
          %p3708 = pneg %p235
        $region58: #{vit_forward.1} parent=55 // pred_check_branch
          %3710 = sbr.rel (%p3708) target = $region60
        $region59: #{vit_forward.1} parent=55 // pred_region
          %s3712 = ssub.s32 16, 16
          %3713 = vsyncadd %s3705, %s3712
          %s3714 = smul.addr %s23, 16
          %s3715 = scalar_lea.hbm %s9, %s3714
          %s3717 = sshll.u32 %s3707, 4
          %s3718 = int_to_ptr.vmem [resolvable:$true] %s3717
          %3720 = dma.vmem_to_hbm [thread:$0]  %s3718, 16, %s3715, %s3705
        $region60: #{vit_forward.1} parent=55 // pred_fallthru
          _
      $region56: #{vit_forward.1} parent=5 // pred_fallthru
        _
      %p3721 = scmp.le.s32.totalorder 2, %s18
      // Predicated region
      $region61: #{vit_forward.1} parent=5 // pred_check
        %p3722 = pneg %p3721
      $region62: #{vit_forward.1} parent=5 // pred_check_branch
        %3724 = sbr.rel (%p3722) target = $region64
      $region63: #{vit_forward.1} parent=5 // pred_region
        %s3725 = ssub.s32 %s18, 2
        // Predicated region
        $region65: #{vit_forward.1} parent=63 // pred_check
          %p3726 = pneg %p241
        $region66: #{vit_forward.1} parent=63 // pred_check_branch
          %3728 = sbr.rel (%p3726) target = $region68
        $region67: #{vit_forward.1} parent=63 // pred_region
          %s3729 = sand.u32 %s226, 1
          %s3730 = scalar_lea.sflag [#allocation3], %s3729
          %s3731 = sand.u32 %s226, 1
          %s3732 = scalar_lea.vmem [#allocation2], %s3731
          %3733 = dma.done %s3730, 16
        $region68: #{vit_forward.1} parent=63 // pred_fallthru
          _
      $region64: #{vit_forward.1} parent=5 // pred_fallthru
        _
    $region6: #{vit_forward.1} parent=1 // loop_footer
      %s22 = sadd.s32 1, %s18
    $region7: #{vit_forward.1} parent=1 // loop_footer_branch
      %17 = sbr.rel target = $region3
    $region8: #{vit_forward.1} parent=1 // loop_exit
      _
    %3734 = vsyncpa [#allocation3], 1
    %s3735 = scalar_lea.sflag [#allocation3], 1
    %3736 = vsyncpa %s3735, 1

</llo_original>
